<compile_context>
chip_gen: v7x
topology: tpu7x:2x2x1
jax: 0.10.0
libtpu: 0.0.40
codegen_flags: <defaults>
</compile_context>

<pallas_src>
import functools

import jax
import jax.numpy as jnp
from jax import lax
from jax.experimental import pallas as pl
from jax.experimental.pallas import tpu as pltpu


# ------------------------------ fused kernel --------------------------------


def _uib_fused_kernel(*refs, k0, s0, k1, s1):
    """Fused UIB block for ONE image (grid iterates over the batch).

    Stages (all intermediates stay in VMEM):
      1. start depthwise k0xk0 conv + folded-BN bias (no act)   [if k0 > 0]
      2. 1x1 expand conv (single MXU matmul) + bias + ReLU6
      3. middle depthwise k1xk1 conv + bias + ReLU6              [if k1 > 0]
      4. 1x1 projection conv (single MXU matmul) + bias, bulk store
    """
    refs = list(refs)
    idx = 0
    x_ref = refs[idx]; idx += 1
    if k0:
        sdw_w_ref, sdw_b_ref = refs[idx], refs[idx + 1]; idx += 2
    exp_w_ref, exp_b_ref = refs[idx], refs[idx + 1]; idx += 2
    if k1:
        mdw_w_ref, mdw_b_ref = refs[idx], refs[idx + 1]; idx += 2
    prj_w_ref, prj_b_ref = refs[idx], refs[idx + 1]; idx += 2
    o_ref = refs[idx]; idx += 1
    if k0:
        xpad_ref = refs[idx]; idx += 1
    if k1:
        t2_ref = refs[idx]; idx += 1

    f32 = jnp.float32
    H, W, Cin = x_ref.shape
    E = exp_w_ref.shape[1]
    Ho, Wo, Cout = o_ref.shape

    # ---- stage 1: start depthwise conv + folded-BN bias (no activation) ----
    if k0:
        p0 = (k0 - 1) // 2
        H1 = (H + 2 * p0 - k0) // s0 + 1
        W1 = (W + 2 * p0 - k0) // s0 + 1
        Hp0, Wp0 = H + 2 * p0, W + 2 * p0
        if p0 > 0:
            # Zero ONLY the halo frame (interior fully overwritten below).
            xpad_ref[0:p0, :, :] = jnp.zeros((p0, Wp0, Cin), f32)
            xpad_ref[p0 + H:Hp0, :, :] = jnp.zeros((p0, Wp0, Cin), f32)
            xpad_ref[:, 0:p0, :] = jnp.zeros((Hp0, p0, Cin), f32)
            xpad_ref[:, p0 + W:Wp0, :] = jnp.zeros((Hp0, p0, Cin), f32)
        xpad_ref[p0:p0 + H, p0:p0 + W, :] = x_ref[...].astype(f32)

        y1 = jnp.zeros((H1, W1, Cin), f32)
        for ky in range(k0):
            for kx in range(k0):
                tap = sdw_w_ref[ky * k0 + kx].astype(f32)        # (1, 1, Cin)
                if s0 > 1:
                    # strided tap read: only the output positions are computed
                    win = xpad_ref[pl.ds(ky, H1, s0), pl.ds(kx, W1, s0), :]
                else:
                    win = xpad_ref[ky:ky + H1, kx:kx + W1, :]
                y1 = y1 + win * tap
        y1 = y1 + sdw_b_ref[...].reshape(1, 1, Cin)              # no activation
    else:
        H1, W1 = H, W
        y1 = x_ref[...].astype(f32)

    # ---- stage 2: 1x1 expand — ONE batched MXU matmul + bias + ReLU6 -------
    y2 = jnp.dot(y1.reshape(H1 * W1, Cin), exp_w_ref[...].astype(f32),
                 preferred_element_type=f32)
    y2 = jnp.clip(y2 + exp_b_ref[...], 0.0, 6.0)

    # ---- stage 3: middle depthwise conv + bias + ReLU6 ---------------------
    if k1:
        p1 = (k1 - 1) // 2
        Hp1, Wp1 = H1 + 2 * p1, W1 + 2 * p1
        if p1 > 0:
            t2_ref[0:p1, :, :] = jnp.zeros((p1, Wp1, E), f32)
            t2_ref[p1 + H1:Hp1, :, :] = jnp.zeros((p1, Wp1, E), f32)
            t2_ref[:, 0:p1, :] = jnp.zeros((Hp1, p1, E), f32)
            t2_ref[:, p1 + W1:Wp1, :] = jnp.zeros((Hp1, p1, E), f32)
        t2_ref[p1:p1 + H1, p1:p1 + W1, :] = y2.reshape(H1, W1, E)  # one store

        y3 = jnp.zeros((Ho, Wo, E), f32)
        for ky in range(k1):
            for kx in range(k1):
                tap = mdw_w_ref[ky * k1 + kx].astype(f32)        # (1, 1, E)
                if s1 > 1:
                    win = t2_ref[pl.ds(ky, Ho, s1), pl.ds(kx, Wo, s1), :]
                else:
                    win = t2_ref[ky:ky + Ho, kx:kx + Wo, :]
                y3 = y3 + win * tap
        y3 = jnp.clip(y3 + mdw_b_ref[...].reshape(1, 1, E), 0.0, 6.0)
        feat = y3.reshape(Ho * Wo, E)
    else:
        feat = y2                                                # (Ho*Wo, E)

    # ---- stage 4: 1x1 projection — ONE matmul + bias, single bulk store ----
    out = jnp.dot(feat, prj_w_ref[...].astype(f32),
                  preferred_element_type=f32) + prj_b_ref[...]
    o_ref[...] = out.reshape(Ho, Wo, Cout).astype(o_ref.dtype)


# ------------------------- BN folding (eval mode) ----------------------------


def _fold_block_params(params, *, start_k, middle_k):
    """Fold BN scale into conv weights (exact in eval mode); keep biases."""
    folded = {}
    if start_k:
        sc, bi = params["start_dw_sb"]
        folded["start_dw_w"] = (params["start_dw_w"] * sc[None, :]).astype(jnp.float32)
        folded["start_dw_b"] = bi.astype(jnp.float32)
    sc, bi = params["expand_sb"]
    folded["expand_w"] = (params["expand_w"] * sc[None, :]).astype(jnp.float32)
    folded["expand_b"] = bi.astype(jnp.float32)
    if middle_k:
        sc, bi = params["mid_dw_sb"]
        folded["mid_dw_w"] = (params["mid_dw_w"] * sc[None, :]).astype(jnp.float32)
        folded["mid_dw_b"] = bi.astype(jnp.float32)
    sc, bi = params["proj_sb"]
    folded["proj_w"] = (params["proj_w"] * sc[None, :]).astype(jnp.float32)
    folded["proj_b"] = bi.astype(jnp.float32)
    return folded


# ------------------------------ block wrapper --------------------------------


def universal_inverted_bottleneck_block(x_nchw, params, *, start_k, middle_k,
                                        middle_dw_downsample, stride):
    x = jnp.transpose(x_nchw, (0, 2, 3, 1)).astype(jnp.float32)   # NCHW -> NHWC
    N, H, W, Cin = x.shape
    E = params["expand_w"].shape[1]
    Cout = params["proj_w"].shape[1]
    k0, k1 = start_k, middle_k
    # Strides live inside the dw convs (matches the PyTorch module: no dw conv
    # on the strided branch means no downsampling is applied there).
    s0 = (stride if not middle_dw_downsample else 1) if k0 else 1
    s1 = (stride if middle_dw_downsample else 1) if k1 else 1

    p0 = (k0 - 1) // 2 if k0 else 0
    H1 = (H + 2 * p0 - k0) // s0 + 1 if k0 else H
    W1 = (W + 2 * p0 - k0) // s0 + 1 if k0 else W
    p1 = (k1 - 1) // 2 if k1 else 0
    Ho = (H1 + 2 * p1 - k1) // s1 + 1 if k1 else H1
    Wo = (W1 + 2 * p1 - k1) // s1 + 1 if k1 else W1

    folded = _fold_block_params(params, start_k=k0, middle_k=k1)

    def full_spec(arr):
        zeros = (0,) * arr.ndim
        return pl.BlockSpec(tuple(arr.shape), lambda n: zeros)

    inputs = [x]
    in_specs = [pl.BlockSpec((None, H, W, Cin), lambda n: (n, 0, 0, 0))]

    def add_weight(arr):
        inputs.append(arr)
        in_specs.append(full_spec(arr))

    if k0:
        add_weight(folded["start_dw_w"].reshape(k0 * k0, 1, 1, Cin))
        add_weight(folded["start_dw_b"].reshape(1, Cin))
    add_weight(folded["expand_w"])
    add_weight(folded["expand_b"].reshape(1, E))
    if k1:
        add_weight(folded["mid_dw_w"].reshape(k1 * k1, 1, 1, E))
        add_weight(folded["mid_dw_b"].reshape(1, E))
    add_weight(folded["proj_w"])
    add_weight(folded["proj_b"].reshape(1, Cout))

    scratch = []
    if k0:
        scratch.append(pltpu.VMEM((H + 2 * p0, W + 2 * p0, Cin), jnp.float32))
    if k1:
        scratch.append(pltpu.VMEM((H1 + 2 * p1, W1 + 2 * p1, E), jnp.float32))

    flops = 2 * N * ((k0 * k0 * H1 * W1 * Cin if k0 else 0)
                     + H1 * W1 * Cin * E
                     + (k1 * k1 * Ho * Wo * E if k1 else 0)
                     + Ho * Wo * E * Cout)
    bytes_acc = 4 * (int(x.size) + N * Ho * Wo * Cout
                     + sum(int(a.size) for a in inputs[1:]))
    cost = pl.CostEstimate(flops=int(flops), transcendentals=0,
                           bytes_accessed=int(bytes_acc))

    kern = functools.partial(_uib_fused_kernel, k0=k0, s0=s0, k1=k1, s1=s1)
    out = pl.pallas_call(
        kern,
        out_shape=jax.ShapeDtypeStruct((N, Ho, Wo, Cout), jnp.float32),
        grid=(N,),
        in_specs=in_specs,
        out_specs=pl.BlockSpec((None, Ho, Wo, Cout), lambda n: (n, 0, 0, 0)),
        scratch_shapes=scratch,
        compiler_params=pltpu.CompilerParams(
            dimension_semantics=("parallel",)),
        cost_estimate=cost,
    )(*inputs)
    # add_LCA=False -> identity tail
    return jnp.transpose(out, (0, 3, 1, 2))                      # NHWC -> NCHW


# -------------------------- parameter construction --------------------------


def make_divisible(value, divisor, min_value=None, round_down_protect=True):
    if min_value is None:
        min_value = divisor
    new_value = max(min_value, int(value + divisor / 2) // divisor * divisor)
    if round_down_protect and new_value < 0.9 * value:
        new_value += divisor
    return int(new_value)


def _bn_fold(key, c, eps=1e-5):
    k1, k2, k3, k4 = jax.random.split(key, 4)
    gamma = 1.0 + 0.1 * jax.random.normal(k1, (c,), jnp.float32)
    beta = 0.1 * jax.random.normal(k2, (c,), jnp.float32)
    mean = 0.1 * jax.random.normal(k3, (c,), jnp.float32)
    var = jnp.abs(jax.random.normal(k4, (c,), jnp.float32)) + 0.5
    scale = gamma / jnp.sqrt(var + eps)
    bias = beta - mean * scale
    return scale, bias


def init_params(key, inp, oup, start_k, middle_k, expand_ratio):
    exp = make_divisible(inp * expand_ratio, 8)
    keys = jax.random.split(key, 8)
    params = {"expand_filters": exp}
    if start_k:
        params["start_dw_w"] = 0.2 * jax.random.normal(
            keys[0], (start_k * start_k, inp), jnp.float32)
        params["start_dw_sb"] = _bn_fold(keys[1], inp)
    params["expand_w"] = 0.2 * jax.random.normal(keys[2], (inp, exp), jnp.float32)
    params["expand_sb"] = _bn_fold(keys[3], exp)
    if middle_k:
        params["mid_dw_w"] = 0.2 * jax.random.normal(
            keys[4], (middle_k * middle_k, exp), jnp.float32)
        params["mid_dw_sb"] = _bn_fold(keys[5], exp)
    params["proj_w"] = 0.2 * jax.random.normal(keys[6], (exp, oup), jnp.float32)
    params["proj_sb"] = _bn_fold(keys[7], oup)
    return params


# -------------------------- pure-JAX reference check -------------------------


def _ref_forward(x_nchw, params, *, start_k, middle_k, middle_dw_downsample, stride):
    # Same eval-mode BN folding as the kernel wrapper (exact in real arithmetic)
    # so both sides see bit-identical weights; structure mirrors the PyTorch
    # module: [start dw] -> expand 1x1+ReLU6 -> [mid dw+ReLU6] -> project 1x1.
    f = _fold_block_params(params, start_k=start_k, middle_k=middle_k)
    x = jnp.transpose(x_nchw, (0, 2, 3, 1))

    def dw(x, w, b, k, s, relu6):
        C = x.shape[-1]
        rhs = w.reshape(k, k, 1, C)
        p = (k - 1) // 2
        y = lax.conv_general_dilated(
            x, rhs, (s, s), ((p, p), (p, p)),
            dimension_numbers=("NHWC", "HWIO", "NHWC"), feature_group_count=C)
        y = y + b
        return jnp.clip(y, 0.0, 6.0) if relu6 else y

    def pw(x, w, b, relu6):
        y = jnp.einsum("nhwc,cd->nhwd", x, w) + b
        return jnp.clip(y, 0.0, 6.0) if relu6 else y

    if start_k:
        s0 = stride if not middle_dw_downsample else 1
        x = dw(x, f["start_dw_w"], f["start_dw_b"], start_k, s0, False)
    x = pw(x, f["expand_w"], f["expand_b"], True)
    if middle_k:
        s1 = stride if middle_dw_downsample else 1
        x = dw(x, f["mid_dw_w"], f["mid_dw_b"], middle_k, s1, True)
    x = pw(x, f["proj_w"], f["proj_b"], False)
    return jnp.transpose(x, (0, 3, 1, 2))


# ----------------------------------- main ------------------------------------


if __name__ == "__main__":
    # UIB config: inp=8, oup=16, start_dw=3, middle_dw=3 (downsample, stride 2),
    # expand_ratio=4.0 -> expand_filters = make_divisible(32, 8) = 32.
    INP, OUP = 8, 16
    START_K, MIDDLE_K = 3, 3
    MIDDLE_DW_DOWNSAMPLE = True
    STRIDE = 2
    EXPAND_RATIO = 4.0

    key = jax.random.PRNGKey(0)
    k_in, k_par = jax.random.split(key)
    x = jax.random.normal(k_in, (2, INP, 16, 16), jnp.float32)   # NCHW like PyTorch
    params = init_params(k_par, INP, OUP, START_K, MIDDLE_K, EXPAND_RATIO)

    out = universal_inverted_bottleneck_block(
        x, params, start_k=START_K, middle_k=MIDDLE_K,
        middle_dw_downsample=MIDDLE_DW_DOWNSAMPLE, stride=STRIDE)
    out = jax.block_until_ready(out)

    ref = _ref_forward(
        x, params, start_k=START_K, middle_k=MIDDLE_K,
        middle_dw_downsample=MIDDLE_DW_DOWNSAMPLE, stride=STRIDE)

    assert out.shape == (2, OUP, 8, 8), out.shape
    assert jnp.allclose(out, ref, atol=2e-4, rtol=2e-4), \
        float(jnp.max(jnp.abs(out - ref)))
    print("KERNEL_OK")
</pallas_src>

<mosaic_0001>
module attributes {stable_mosaic.version = 11 : i64} {
  func.func @_uib_fused_kernel(%arg0: i32, %arg1: memref<1x16x16x8xf32, #tpu.memory_space<vmem>>, %arg2: memref<9x1x1x8xf32, #tpu.memory_space<vmem>>, %arg3: memref<1x8xf32, #tpu.memory_space<vmem>>, %arg4: memref<8x32xf32, #tpu.memory_space<vmem>>, %arg5: memref<1x32xf32, #tpu.memory_space<vmem>>, %arg6: memref<9x1x1x32xf32, #tpu.memory_space<vmem>>, %arg7: memref<1x32xf32, #tpu.memory_space<vmem>>, %arg8: memref<32x16xf32, #tpu.memory_space<vmem>>, %arg9: memref<1x16xf32, #tpu.memory_space<vmem>>, %arg10: memref<1x8x8x16xf32, #tpu.memory_space<vmem>>, %arg11: memref<18x18x8xf32, #tpu.memory_space<vmem>>, %arg12: memref<18x18x32xf32, #tpu.memory_space<vmem>>) attributes {dimension_semantics = [#tpu.dimension_semantics<parallel>], iteration_bounds = array<i64: 2>, scalar_prefetch = 0 : i64, scratch_operands = 2 : i64, tpu.core_type = #tpu.core_type<tc>, window_params = [{transform_indices = @transform_0, window_bounds = array<i64: 1, 16, 16, 8>}, {pipeline_mode = #tpu.pipeline_mode<synchronous>, transform_indices = @transform_1, window_bounds = array<i64: 9, 1, 1, 8>}, {pipeline_mode = #tpu.pipeline_mode<synchronous>, transform_indices = @transform_2, window_bounds = array<i64: 1, 8>}, {pipeline_mode = #tpu.pipeline_mode<synchronous>, transform_indices = @transform_3, window_bounds = array<i64: 8, 32>}, {pipeline_mode = #tpu.pipeline_mode<synchronous>, transform_indices = @transform_4, window_bounds = array<i64: 1, 32>}, {pipeline_mode = #tpu.pipeline_mode<synchronous>, transform_indices = @transform_5, window_bounds = array<i64: 9, 1, 1, 32>}, {pipeline_mode = #tpu.pipeline_mode<synchronous>, transform_indices = @transform_6, window_bounds = array<i64: 1, 32>}, {pipeline_mode = #tpu.pipeline_mode<synchronous>, transform_indices = @transform_7, window_bounds = array<i64: 32, 16>}, {pipeline_mode = #tpu.pipeline_mode<synchronous>, transform_indices = @transform_8, window_bounds = array<i64: 1, 16>}, {transform_indices = @transform_9, window_bounds = array<i64: 1, 8, 8, 16>}]} {
    %cst = arith.constant 0.000000e+00 : f32
    %0 = vector.broadcast %cst : f32 to vector<1x18x8xf32>
    %c0 = arith.constant 0 : index
    %c0_0 = arith.constant 0 : index
    %c0_1 = arith.constant 0 : index
    %1 = vector.load %arg11[%c0, %c0_0, %c0_1] : memref<18x18x8xf32, #tpu.memory_space<vmem>>, vector<1x18x8xf32>
    tpu.vector_store %arg11[%c0, %c0_0, %c0_1], %0 {strides = array<i32>} : memref<18x18x8xf32, #tpu.memory_space<vmem>>, vector<1x18x8xf32>,
    %cst_2 = arith.constant 0.000000e+00 : f32
    %2 = vector.broadcast %cst_2 : f32 to vector<1x18x8xf32>
    %c17 = arith.constant 17 : index
    %c0_3 = arith.constant 0 : index
    %c0_4 = arith.constant 0 : index
    %3 = vector.load %arg11[%c17, %c0_3, %c0_4] : memref<18x18x8xf32, #tpu.memory_space<vmem>>, vector<1x18x8xf32>
    tpu.vector_store %arg11[%c17, %c0_3, %c0_4], %2 {strides = array<i32>} : memref<18x18x8xf32, #tpu.memory_space<vmem>>, vector<1x18x8xf32>,
    %cst_5 = arith.constant 0.000000e+00 : f32
    %4 = vector.broadcast %cst_5 : f32 to vector<18x1x8xf32>
    %c0_6 = arith.constant 0 : index
    %c0_7 = arith.constant 0 : index
    %c0_8 = arith.constant 0 : index
    %5 = vector.load %arg11[%c0_6, %c0_7, %c0_8] : memref<18x18x8xf32, #tpu.memory_space<vmem>>, vector<18x1x8xf32>
    tpu.vector_store %arg11[%c0_6, %c0_7, %c0_8], %4 {strides = array<i32>} : memref<18x18x8xf32, #tpu.memory_space<vmem>>, vector<18x1x8xf32>,
    %cst_9 = arith.constant 0.000000e+00 : f32
    %6 = vector.broadcast %cst_9 : f32 to vector<18x1x8xf32>
    %c0_10 = arith.constant 0 : index
    %c17_11 = arith.constant 17 : index
    %c0_12 = arith.constant 0 : index
    %7 = vector.load %arg11[%c0_10, %c17_11, %c0_12] : memref<18x18x8xf32, #tpu.memory_space<vmem>>, vector<18x1x8xf32>
    tpu.vector_store %arg11[%c0_10, %c17_11, %c0_12], %6 {strides = array<i32>} : memref<18x18x8xf32, #tpu.memory_space<vmem>>, vector<18x1x8xf32>,
    %c0_13 = arith.constant 0 : index
    %c0_14 = arith.constant 0 : index
    %c0_15 = arith.constant 0 : index
    %c0_16 = arith.constant 0 : index
    %8 = vector.load %arg1[%c0_13, %c0_14, %c0_15, %c0_16] : memref<1x16x16x8xf32, #tpu.memory_space<vmem>>, vector<1x16x16x8xf32>
    %9 = vector.shape_cast %8 : vector<1x16x16x8xf32> to vector<16x16x8xf32>
    %c1 = arith.constant 1 : index
    %c1_17 = arith.constant 1 : index
    %c0_18 = arith.constant 0 : index
    %10 = vector.load %arg11[%c1, %c1_17, %c0_18] : memref<18x18x8xf32, #tpu.memory_space<vmem>>, vector<16x16x8xf32>
    tpu.vector_store %arg11[%c1, %c1_17, %c0_18], %9 {strides = array<i32>} : memref<18x18x8xf32, #tpu.memory_space<vmem>>, vector<16x16x8xf32>,
    %cst_19 = arith.constant 0.000000e+00 : f32
    %11 = vector.broadcast %cst_19 : f32 to vector<16x16x8xf32>
    %c0_20 = arith.constant 0 : index
    %c0_21 = arith.constant 0 : index
    %c0_22 = arith.constant 0 : index
    %c0_23 = arith.constant 0 : index
    %12 = vector.load %arg2[%c0_20, %c0_21, %c0_22, %c0_23] : memref<9x1x1x8xf32, #tpu.memory_space<vmem>>, vector<1x1x1x8xf32>
    %13 = vector.shape_cast %12 : vector<1x1x1x8xf32> to vector<1x1x8xf32>
    %c0_24 = arith.constant 0 : index
    %c0_25 = arith.constant 0 : index
    %c0_26 = arith.constant 0 : index
    %14 = vector.load %arg11[%c0_24, %c0_25, %c0_26] : memref<18x18x8xf32, #tpu.memory_space<vmem>>, vector<16x16x8xf32>
    %15 = vector.broadcast %13 : vector<1x1x8xf32> to vector<16x16x8xf32>
    %16 = arith.mulf %14, %15 : vector<16x16x8xf32>
    %17 = arith.addf %11, %16 : vector<16x16x8xf32>
    %c1_27 = arith.constant 1 : index
    %c0_28 = arith.constant 0 : index
    %c0_29 = arith.constant 0 : index
    %c0_30 = arith.constant 0 : index
    %18 = vector.load %arg2[%c1_27, %c0_28, %c0_29, %c0_30] : memref<9x1x1x8xf32, #tpu.memory_space<vmem>>, vector<1x1x1x8xf32>
    %19 = vector.shape_cast %18 : vector<1x1x1x8xf32> to vector<1x1x8xf32>
    %c0_31 = arith.constant 0 : index
    %c1_32 = arith.constant 1 : index
    %c0_33 = arith.constant 0 : index
    %20 = vector.load %arg11[%c0_31, %c1_32, %c0_33] : memref<18x18x8xf32, #tpu.memory_space<vmem>>, vector<16x16x8xf32>
    %21 = vector.broadcast %19 : vector<1x1x8xf32> to vector<16x16x8xf32>
    %22 = arith.mulf %20, %21 : vector<16x16x8xf32>
    %23 = arith.addf %17, %22 : vector<16x16x8xf32>
    %c2 = arith.constant 2 : index
    %c0_34 = arith.constant 0 : index
    %c0_35 = arith.constant 0 : index
    %c0_36 = arith.constant 0 : index
    %24 = vector.load %arg2[%c2, %c0_34, %c0_35, %c0_36] : memref<9x1x1x8xf32, #tpu.memory_space<vmem>>, vector<1x1x1x8xf32>
    %25 = vector.shape_cast %24 : vector<1x1x1x8xf32> to vector<1x1x8xf32>
    %c0_37 = arith.constant 0 : index
    %c2_38 = arith.constant 2 : index
    %c0_39 = arith.constant 0 : index
    %26 = vector.load %arg11[%c0_37, %c2_38, %c0_39] : memref<18x18x8xf32, #tpu.memory_space<vmem>>, vector<16x16x8xf32>
    %27 = vector.broadcast %25 : vector<1x1x8xf32> to vector<16x16x8xf32>
    %28 = arith.mulf %26, %27 : vector<16x16x8xf32>
    %29 = arith.addf %23, %28 : vector<16x16x8xf32>
    %c3 = arith.constant 3 : index
    %c0_40 = arith.constant 0 : index
    %c0_41 = arith.constant 0 : index
    %c0_42 = arith.constant 0 : index
    %30 = vector.load %arg2[%c3, %c0_40, %c0_41, %c0_42] : memref<9x1x1x8xf32, #tpu.memory_space<vmem>>, vector<1x1x1x8xf32>
    %31 = vector.shape_cast %30 : vector<1x1x1x8xf32> to vector<1x1x8xf32>
    %c1_43 = arith.constant 1 : index
    %c0_44 = arith.constant 0 : index
    %c0_45 = arith.constant 0 : index
    %32 = vector.load %arg11[%c1_43, %c0_44, %c0_45] : memref<18x18x8xf32, #tpu.memory_space<vmem>>, vector<16x16x8xf32>
    %33 = vector.broadcast %31 : vector<1x1x8xf32> to vector<16x16x8xf32>
    %34 = arith.mulf %32, %33 : vector<16x16x8xf32>
    %35 = arith.addf %29, %34 : vector<16x16x8xf32>
    %c4 = arith.constant 4 : index
    %c0_46 = arith.constant 0 : index
    %c0_47 = arith.constant 0 : index
    %c0_48 = arith.constant 0 : index
    %36 = vector.load %arg2[%c4, %c0_46, %c0_47, %c0_48] : memref<9x1x1x8xf32, #tpu.memory_space<vmem>>, vector<1x1x1x8xf32>
    %37 = vector.shape_cast %36 : vector<1x1x1x8xf32> to vector<1x1x8xf32>
    %c1_49 = arith.constant 1 : index
    %c1_50 = arith.constant 1 : index
    %c0_51 = arith.constant 0 : index
    %38 = vector.load %arg11[%c1_49, %c1_50, %c0_51] : memref<18x18x8xf32, #tpu.memory_space<vmem>>, vector<16x16x8xf32>
    %39 = vector.broadcast %37 : vector<1x1x8xf32> to vector<16x16x8xf32>
    %40 = arith.mulf %38, %39 : vector<16x16x8xf32>
    %41 = arith.addf %35, %40 : vector<16x16x8xf32>
    %c5 = arith.constant 5 : index
    %c0_52 = arith.constant 0 : index
    %c0_53 = arith.constant 0 : index
    %c0_54 = arith.constant 0 : index
    %42 = vector.load %arg2[%c5, %c0_52, %c0_53, %c0_54] : memref<9x1x1x8xf32, #tpu.memory_space<vmem>>, vector<1x1x1x8xf32>
    %43 = vector.shape_cast %42 : vector<1x1x1x8xf32> to vector<1x1x8xf32>
    %c1_55 = arith.constant 1 : index
    %c2_56 = arith.constant 2 : index
    %c0_57 = arith.constant 0 : index
    %44 = vector.load %arg11[%c1_55, %c2_56, %c0_57] : memref<18x18x8xf32, #tpu.memory_space<vmem>>, vector<16x16x8xf32>
    %45 = vector.broadcast %43 : vector<1x1x8xf32> to vector<16x16x8xf32>
    %46 = arith.mulf %44, %45 : vector<16x16x8xf32>
    %47 = arith.addf %41, %46 : vector<16x16x8xf32>
    %c6 = arith.constant 6 : index
    %c0_58 = arith.constant 0 : index
    %c0_59 = arith.constant 0 : index
    %c0_60 = arith.constant 0 : index
    %48 = vector.load %arg2[%c6, %c0_58, %c0_59, %c0_60] : memref<9x1x1x8xf32, #tpu.memory_space<vmem>>, vector<1x1x1x8xf32>
    %49 = vector.shape_cast %48 : vector<1x1x1x8xf32> to vector<1x1x8xf32>
    %c2_61 = arith.constant 2 : index
    %c0_62 = arith.constant 0 : index
    %c0_63 = arith.constant 0 : index
    %50 = vector.load %arg11[%c2_61, %c0_62, %c0_63] : memref<18x18x8xf32, #tpu.memory_space<vmem>>, vector<16x16x8xf32>
    %51 = vector.broadcast %49 : vector<1x1x8xf32> to vector<16x16x8xf32>
    %52 = arith.mulf %50, %51 : vector<16x16x8xf32>
    %53 = arith.addf %47, %52 : vector<16x16x8xf32>
    %c7 = arith.constant 7 : index
    %c0_64 = arith.constant 0 : index
    %c0_65 = arith.constant 0 : index
    %c0_66 = arith.constant 0 : index
    %54 = vector.load %arg2[%c7, %c0_64, %c0_65, %c0_66] : memref<9x1x1x8xf32, #tpu.memory_space<vmem>>, vector<1x1x1x8xf32>
    %55 = vector.shape_cast %54 : vector<1x1x1x8xf32> to vector<1x1x8xf32>
    %c2_67 = arith.constant 2 : index
    %c1_68 = arith.constant 1 : index
    %c0_69 = arith.constant 0 : index
    %56 = vector.load %arg11[%c2_67, %c1_68, %c0_69] : memref<18x18x8xf32, #tpu.memory_space<vmem>>, vector<16x16x8xf32>
    %57 = vector.broadcast %55 : vector<1x1x8xf32> to vector<16x16x8xf32>
    %58 = arith.mulf %56, %57 : vector<16x16x8xf32>
    %59 = arith.addf %53, %58 : vector<16x16x8xf32>
    %c8 = arith.constant 8 : index
    %c0_70 = arith.constant 0 : index
    %c0_71 = arith.constant 0 : index
    %c0_72 = arith.constant 0 : index
    %60 = vector.load %arg2[%c8, %c0_70, %c0_71, %c0_72] : memref<9x1x1x8xf32, #tpu.memory_space<vmem>>, vector<1x1x1x8xf32>
    %61 = vector.shape_cast %60 : vector<1x1x1x8xf32> to vector<1x1x8xf32>
    %c2_73 = arith.constant 2 : index
    %c2_74 = arith.constant 2 : index
    %c0_75 = arith.constant 0 : index
    %62 = vector.load %arg11[%c2_73, %c2_74, %c0_75] : memref<18x18x8xf32, #tpu.memory_space<vmem>>, vector<16x16x8xf32>
    %63 = vector.broadcast %61 : vector<1x1x8xf32> to vector<16x16x8xf32>
    %64 = arith.mulf %62, %63 : vector<16x16x8xf32>
    %65 = arith.addf %59, %64 : vector<16x16x8xf32>
    %c0_76 = arith.constant 0 : index
    %c0_77 = arith.constant 0 : index
    %66 = vector.load %arg3[%c0_76, %c0_77] : memref<1x8xf32, #tpu.memory_space<vmem>>, vector<1x8xf32>
    %67 = vector.shape_cast %66 : vector<1x8xf32> to vector<1x1x8xf32>
    %68 = vector.broadcast %67 : vector<1x1x8xf32> to vector<16x16x8xf32>
    %69 = arith.addf %65, %68 : vector<16x16x8xf32>
    %70 = vector.shape_cast %69 : vector<16x16x8xf32> to vector<256x8xf32>
    %c0_78 = arith.constant 0 : index
    %c0_79 = arith.constant 0 : index
    %71 = vector.load %arg4[%c0_78, %c0_79] : memref<8x32xf32, #tpu.memory_space<vmem>>, vector<8x32xf32>
    %cst_80 = arith.constant dense<0.000000e+00> : vector<256x32xf32>
    %72 = tpu.matmul %70, %71, %cst_80 {dimension_numbers = #tpu.dot_dimension_numbers<[1], [0], [0], [1], [0, 0, 1, 1], [], []>} : vector<256x8xf32>, vector<8x32xf32>, vector<256x32xf32> -> vector<256x32xf32>
    %c0_81 = arith.constant 0 : index
    %c0_82 = arith.constant 0 : index
    %73 = vector.load %arg5[%c0_81, %c0_82] : memref<1x32xf32, #tpu.memory_space<vmem>>, vector<1x32xf32>
    %74 = vector.broadcast %73 : vector<1x32xf32> to vector<256x32xf32>
    %75 = arith.addf %72, %74 : vector<256x32xf32>
    %cst_83 = arith.constant 0.000000e+00 : f32
    %cst_84 = arith.constant 6.000000e+00 : f32
    %76 = vector.broadcast %cst_83 : f32 to vector<256x32xf32>
    %77 = arith.maximumf %76, %75 : vector<256x32xf32>
    %78 = vector.broadcast %cst_84 : f32 to vector<256x32xf32>
    %79 = arith.minimumf %78, %77 : vector<256x32xf32>
    %cst_85 = arith.constant 0.000000e+00 : f32
    %80 = vector.broadcast %cst_85 : f32 to vector<1x18x32xf32>
    %c0_86 = arith.constant 0 : index
    %c0_87 = arith.constant 0 : index
    %c0_88 = arith.constant 0 : index
    %81 = vector.load %arg12[%c0_86, %c0_87, %c0_88] : memref<18x18x32xf32, #tpu.memory_space<vmem>>, vector<1x18x32xf32>
    tpu.vector_store %arg12[%c0_86, %c0_87, %c0_88], %80 {strides = array<i32>} : memref<18x18x32xf32, #tpu.memory_space<vmem>>, vector<1x18x32xf32>,
    %cst_89 = arith.constant 0.000000e+00 : f32
    %82 = vector.broadcast %cst_89 : f32 to vector<1x18x32xf32>
    %c17_90 = arith.constant 17 : index
    %c0_91 = arith.constant 0 : index
    %c0_92 = arith.constant 0 : index
    %83 = vector.load %arg12[%c17_90, %c0_91, %c0_92] : memref<18x18x32xf32, #tpu.memory_space<vmem>>, vector<1x18x32xf32>
    tpu.vector_store %arg12[%c17_90, %c0_91, %c0_92], %82 {strides = array<i32>} : memref<18x18x32xf32, #tpu.memory_space<vmem>>, vector<1x18x32xf32>,
    %cst_93 = arith.constant 0.000000e+00 : f32
    %84 = vector.broadcast %cst_93 : f32 to vector<18x1x32xf32>
    %c0_94 = arith.constant 0 : index
    %c0_95 = arith.constant 0 : index
    %c0_96 = arith.constant 0 : index
    %85 = vector.load %arg12[%c0_94, %c0_95, %c0_96] : memref<18x18x32xf32, #tpu.memory_space<vmem>>, vector<18x1x32xf32>
    tpu.vector_store %arg12[%c0_94, %c0_95, %c0_96], %84 {strides = array<i32>} : memref<18x18x32xf32, #tpu.memory_space<vmem>>, vector<18x1x32xf32>,
    %cst_97 = arith.constant 0.000000e+00 : f32
    %86 = vector.broadcast %cst_97 : f32 to vector<18x1x32xf32>
    %c0_98 = arith.constant 0 : index
    %c17_99 = arith.constant 17 : index
    %c0_100 = arith.constant 0 : index
    %87 = vector.load %arg12[%c0_98, %c17_99, %c0_100] : memref<18x18x32xf32, #tpu.memory_space<vmem>>, vector<18x1x32xf32>
    tpu.vector_store %arg12[%c0_98, %c17_99, %c0_100], %86 {strides = array<i32>} : memref<18x18x32xf32, #tpu.memory_space<vmem>>, vector<18x1x32xf32>,
    %88 = vector.shape_cast %79 : vector<256x32xf32> to vector<16x16x32xf32>
    %c1_101 = arith.constant 1 : index
    %c1_102 = arith.constant 1 : index
    %c0_103 = arith.constant 0 : index
    %89 = vector.load %arg12[%c1_101, %c1_102, %c0_103] : memref<18x18x32xf32, #tpu.memory_space<vmem>>, vector<16x16x32xf32>
    tpu.vector_store %arg12[%c1_101, %c1_102, %c0_103], %88 {strides = array<i32>} : memref<18x18x32xf32, #tpu.memory_space<vmem>>, vector<16x16x32xf32>,
    %cst_104 = arith.constant 0.000000e+00 : f32
    %90 = vector.broadcast %cst_104 : f32 to vector<8x8x32xf32>
    %c0_105 = arith.constant 0 : index
    %c0_106 = arith.constant 0 : index
    %c0_107 = arith.constant 0 : index
    %c0_108 = arith.constant 0 : index
    %91 = vector.load %arg6[%c0_105, %c0_106, %c0_107, %c0_108] : memref<9x1x1x32xf32, #tpu.memory_space<vmem>>, vector<1x1x1x32xf32>
    %92 = vector.shape_cast %91 : vector<1x1x1x32xf32> to vector<1x1x32xf32>
    %c0_109 = arith.constant 0 : index
    %c0_110 = arith.constant 0 : index
    %c0_111 = arith.constant 0 : index
    %93 = tpu.strided_load %arg12[%c0_109, %c0_110, %c0_111] {strides = array<i32: 2, 2, 1>} : memref<18x18x32xf32, #tpu.memory_space<vmem>>, vector<8x8x32xf32>
    %94 = vector.broadcast %92 : vector<1x1x32xf32> to vector<8x8x32xf32>
    %95 = arith.mulf %93, %94 : vector<8x8x32xf32>
    %96 = arith.addf %90, %95 : vector<8x8x32xf32>
    %c1_112 = arith.constant 1 : index
    %c0_113 = arith.constant 0 : index
    %c0_114 = arith.constant 0 : index
    %c0_115 = arith.constant 0 : index
    %97 = vector.load %arg6[%c1_112, %c0_113, %c0_114, %c0_115] : memref<9x1x1x32xf32, #tpu.memory_space<vmem>>, vector<1x1x1x32xf32>
    %98 = vector.shape_cast %97 : vector<1x1x1x32xf32> to vector<1x1x32xf32>
    %c0_116 = arith.constant 0 : index
    %c1_117 = arith.constant 1 : index
    %c0_118 = arith.constant 0 : index
    %99 = tpu.strided_load %arg12[%c0_116, %c1_117, %c0_118] {strides = array<i32: 2, 2, 1>} : memref<18x18x32xf32, #tpu.memory_space<vmem>>, vector<8x8x32xf32>
    %100 = vector.broadcast %98 : vector<1x1x32xf32> to vector<8x8x32xf32>
    %101 = arith.mulf %99, %100 : vector<8x8x32xf32>
    %102 = arith.addf %96, %101 : vector<8x8x32xf32>
    %c2_119 = arith.constant 2 : index
    %c0_120 = arith.constant 0 : index
    %c0_121 = arith.constant 0 : index
    %c0_122 = arith.constant 0 : index
    %103 = vector.load %arg6[%c2_119, %c0_120, %c0_121, %c0_122] : memref<9x1x1x32xf32, #tpu.memory_space<vmem>>, vector<1x1x1x32xf32>
    %104 = vector.shape_cast %103 : vector<1x1x1x32xf32> to vector<1x1x32xf32>
    %c0_123 = arith.constant 0 : index
    %c2_124 = arith.constant 2 : index
    %c0_125 = arith.constant 0 : index
    %105 = tpu.strided_load %arg12[%c0_123, %c2_124, %c0_125] {strides = array<i32: 2, 2, 1>} : memref<18x18x32xf32, #tpu.memory_space<vmem>>, vector<8x8x32xf32>
    %106 = vector.broadcast %104 : vector<1x1x32xf32> to vector<8x8x32xf32>
    %107 = arith.mulf %105, %106 : vector<8x8x32xf32>
    %108 = arith.addf %102, %107 : vector<8x8x32xf32>
    %c3_126 = arith.constant 3 : index
    %c0_127 = arith.constant 0 : index
    %c0_128 = arith.constant 0 : index
    %c0_129 = arith.constant 0 : index
    %109 = vector.load %arg6[%c3_126, %c0_127, %c0_128, %c0_129] : memref<9x1x1x32xf32, #tpu.memory_space<vmem>>, vector<1x1x1x32xf32>
    %110 = vector.shape_cast %109 : vector<1x1x1x32xf32> to vector<1x1x32xf32>
    %c1_130 = arith.constant 1 : index
    %c0_131 = arith.constant 0 : index
    %c0_132 = arith.constant 0 : index
    %111 = tpu.strided_load %arg12[%c1_130, %c0_131, %c0_132] {strides = array<i32: 2, 2, 1>} : memref<18x18x32xf32, #tpu.memory_space<vmem>>, vector<8x8x32xf32>
    %112 = vector.broadcast %110 : vector<1x1x32xf32> to vector<8x8x32xf32>
    %113 = arith.mulf %111, %112 : vector<8x8x32xf32>
    %114 = arith.addf %108, %113 : vector<8x8x32xf32>
    %c4_133 = arith.constant 4 : index
    %c0_134 = arith.constant 0 : index
    %c0_135 = arith.constant 0 : index
    %c0_136 = arith.constant 0 : index
    %115 = vector.load %arg6[%c4_133, %c0_134, %c0_135, %c0_136] : memref<9x1x1x32xf32, #tpu.memory_space<vmem>>, vector<1x1x1x32xf32>
    %116 = vector.shape_cast %115 : vector<1x1x1x32xf32> to vector<1x1x32xf32>
    %c1_137 = arith.constant 1 : index
    %c1_138 = arith.constant 1 : index
    %c0_139 = arith.constant 0 : index
    %117 = tpu.strided_load %arg12[%c1_137, %c1_138, %c0_139] {strides = array<i32: 2, 2, 1>} : memref<18x18x32xf32, #tpu.memory_space<vmem>>, vector<8x8x32xf32>
    %118 = vector.broadcast %116 : vector<1x1x32xf32> to vector<8x8x32xf32>
    %119 = arith.mulf %117, %118 : vector<8x8x32xf32>
    %120 = arith.addf %114, %119 : vector<8x8x32xf32>
    %c5_140 = arith.constant 5 : index
    %c0_141 = arith.constant 0 : index
    %c0_142 = arith.constant 0 : index
    %c0_143 = arith.constant 0 : index
    %121 = vector.load %arg6[%c5_140, %c0_141, %c0_142, %c0_143] : memref<9x1x1x32xf32, #tpu.memory_space<vmem>>, vector<1x1x1x32xf32>
    %122 = vector.shape_cast %121 : vector<1x1x1x32xf32> to vector<1x1x32xf32>
    %c1_144 = arith.constant 1 : index
    %c2_145 = arith.constant 2 : index
    %c0_146 = arith.constant 0 : index
    %123 = tpu.strided_load %arg12[%c1_144, %c2_145, %c0_146] {strides = array<i32: 2, 2, 1>} : memref<18x18x32xf32, #tpu.memory_space<vmem>>, vector<8x8x32xf32>
    %124 = vector.broadcast %122 : vector<1x1x32xf32> to vector<8x8x32xf32>
    %125 = arith.mulf %123, %124 : vector<8x8x32xf32>
    %126 = arith.addf %120, %125 : vector<8x8x32xf32>
    %c6_147 = arith.constant 6 : index
    %c0_148 = arith.constant 0 : index
    %c0_149 = arith.constant 0 : index
    %c0_150 = arith.constant 0 : index
    %127 = vector.load %arg6[%c6_147, %c0_148, %c0_149, %c0_150] : memref<9x1x1x32xf32, #tpu.memory_space<vmem>>, vector<1x1x1x32xf32>
    %128 = vector.shape_cast %127 : vector<1x1x1x32xf32> to vector<1x1x32xf32>
    %c2_151 = arith.constant 2 : index
    %c0_152 = arith.constant 0 : index
    %c0_153 = arith.constant 0 : index
    %129 = tpu.strided_load %arg12[%c2_151, %c0_152, %c0_153] {strides = array<i32: 2, 2, 1>} : memref<18x18x32xf32, #tpu.memory_space<vmem>>, vector<8x8x32xf32>
    %130 = vector.broadcast %128 : vector<1x1x32xf32> to vector<8x8x32xf32>
    %131 = arith.mulf %129, %130 : vector<8x8x32xf32>
    %132 = arith.addf %126, %131 : vector<8x8x32xf32>
    %c7_154 = arith.constant 7 : index
    %c0_155 = arith.constant 0 : index
    %c0_156 = arith.constant 0 : index
    %c0_157 = arith.constant 0 : index
    %133 = vector.load %arg6[%c7_154, %c0_155, %c0_156, %c0_157] : memref<9x1x1x32xf32, #tpu.memory_space<vmem>>, vector<1x1x1x32xf32>
    %134 = vector.shape_cast %133 : vector<1x1x1x32xf32> to vector<1x1x32xf32>
    %c2_158 = arith.constant 2 : index
    %c1_159 = arith.constant 1 : index
    %c0_160 = arith.constant 0 : index
    %135 = tpu.strided_load %arg12[%c2_158, %c1_159, %c0_160] {strides = array<i32: 2, 2, 1>} : memref<18x18x32xf32, #tpu.memory_space<vmem>>, vector<8x8x32xf32>
    %136 = vector.broadcast %134 : vector<1x1x32xf32> to vector<8x8x32xf32>
    %137 = arith.mulf %135, %136 : vector<8x8x32xf32>
    %138 = arith.addf %132, %137 : vector<8x8x32xf32>
    %c8_161 = arith.constant 8 : index
    %c0_162 = arith.constant 0 : index
    %c0_163 = arith.constant 0 : index
    %c0_164 = arith.constant 0 : index
    %139 = vector.load %arg6[%c8_161, %c0_162, %c0_163, %c0_164] : memref<9x1x1x32xf32, #tpu.memory_space<vmem>>, vector<1x1x1x32xf32>
    %140 = vector.shape_cast %139 : vector<1x1x1x32xf32> to vector<1x1x32xf32>
    %c2_165 = arith.constant 2 : index
    %c2_166 = arith.constant 2 : index
    %c0_167 = arith.constant 0 : index
    %141 = tpu.strided_load %arg12[%c2_165, %c2_166, %c0_167] {strides = array<i32: 2, 2, 1>} : memref<18x18x32xf32, #tpu.memory_space<vmem>>, vector<8x8x32xf32>
    %142 = vector.broadcast %140 : vector<1x1x32xf32> to vector<8x8x32xf32>
    %143 = arith.mulf %141, %142 : vector<8x8x32xf32>
    %144 = arith.addf %138, %143 : vector<8x8x32xf32>
    %c0_168 = arith.constant 0 : index
    %c0_169 = arith.constant 0 : index
    %145 = vector.load %arg7[%c0_168, %c0_169] : memref<1x32xf32, #tpu.memory_space<vmem>>, vector<1x32xf32>
    %146 = vector.shape_cast %145 : vector<1x32xf32> to vector<1x1x32xf32>
    %147 = vector.broadcast %146 : vector<1x1x32xf32> to vector<8x8x32xf32>
    %148 = arith.addf %144, %147 : vector<8x8x32xf32>
    %cst_170 = arith.constant 0.000000e+00 : f32
    %cst_171 = arith.constant 6.000000e+00 : f32
    %149 = vector.broadcast %cst_170 : f32 to vector<8x8x32xf32>
    %150 = arith.maximumf %149, %148 : vector<8x8x32xf32>
    %151 = vector.broadcast %cst_171 : f32 to vector<8x8x32xf32>
    %152 = arith.minimumf %151, %150 : vector<8x8x32xf32>
    %153 = vector.shape_cast %152 : vector<8x8x32xf32> to vector<64x32xf32>
    %c0_172 = arith.constant 0 : index
    %c0_173 = arith.constant 0 : index
    %154 = vector.load %arg8[%c0_172, %c0_173] : memref<32x16xf32, #tpu.memory_space<vmem>>, vector<32x16xf32>
    %cst_174 = arith.constant dense<0.000000e+00> : vector<64x16xf32>
    %155 = tpu.matmul %153, %154, %cst_174 {dimension_numbers = #tpu.dot_dimension_numbers<[1], [0], [0], [1], [0, 0, 1, 1], [], []>} : vector<64x32xf32>, vector<32x16xf32>, vector<64x16xf32> -> vector<64x16xf32>
    %c0_175 = arith.constant 0 : index
    %c0_176 = arith.constant 0 : index
    %156 = vector.load %arg9[%c0_175, %c0_176] : memref<1x16xf32, #tpu.memory_space<vmem>>, vector<1x16xf32>
    %157 = vector.broadcast %156 : vector<1x16xf32> to vector<64x16xf32>
    %158 = arith.addf %155, %157 : vector<64x16xf32>
    %159 = vector.shape_cast %158 : vector<64x16xf32> to vector<8x8x16xf32>
    %c0_177 = arith.constant 0 : index
    %c0_178 = arith.constant 0 : index
    %c0_179 = arith.constant 0 : index
    %c0_180 = arith.constant 0 : index
    %160 = vector.load %arg10[%c0_177, %c0_178, %c0_179, %c0_180] : memref<1x8x8x16xf32, #tpu.memory_space<vmem>>, vector<1x8x8x16xf32>
    %161 = vector.shape_cast %160 : vector<1x8x8x16xf32> to vector<8x8x16xf32>
    %162 = vector.shape_cast %159 : vector<8x8x16xf32> to vector<1x8x8x16xf32>
    tpu.vector_store %arg10[%c0_177, %c0_178, %c0_179, %c0_180], %162 {strides = array<i32>} : memref<1x8x8x16xf32, #tpu.memory_space<vmem>>, vector<1x8x8x16xf32>,
    return
  }
  func.func @transform_0(%arg0: i32) -> (i32, i32, i32, i32) {
    %c0_i32 = arith.constant 0 : i32
    %c0_i32_0 = arith.constant 0 : i32
    %c0_i32_1 = arith.constant 0 : i32
    %c0_i32_2 = arith.constant 0 : i32
    return %arg0, %c0_i32, %c0_i32_0, %c0_i32_1 : i32, i32, i32, i32
  }
  func.func @transform_1(%arg0: i32) -> (i32, i32, i32, i32) {
    %c0_i32 = arith.constant 0 : i32
    %c0_i32_0 = arith.constant 0 : i32
    %c0_i32_1 = arith.constant 0 : i32
    %c0_i32_2 = arith.constant 0 : i32
    %c0_i32_3 = arith.constant 0 : i32
    return %c0_i32, %c0_i32_0, %c0_i32_1, %c0_i32_2 : i32, i32, i32, i32
  }
  func.func @transform_2(%arg0: i32) -> (i32, i32) {
    %c0_i32 = arith.constant 0 : i32
    %c0_i32_0 = arith.constant 0 : i32
    %c0_i32_1 = arith.constant 0 : i32
    return %c0_i32, %c0_i32_0 : i32, i32
  }
  func.func @transform_3(%arg0: i32) -> (i32, i32) {
    %c0_i32 = arith.constant 0 : i32
    %c0_i32_0 = arith.constant 0 : i32
    %c0_i32_1 = arith.constant 0 : i32
    return %c0_i32, %c0_i32_0 : i32, i32
  }
  func.func @transform_4(%arg0: i32) -> (i32, i32) {
    %c0_i32 = arith.constant 0 : i32
    %c0_i32_0 = arith.constant 0 : i32
    %c0_i32_1 = arith.constant 0 : i32
    return %c0_i32, %c0_i32_0 : i32, i32
  }
  func.func @transform_5(%arg0: i32) -> (i32, i32, i32, i32) {
    %c0_i32 = arith.constant 0 : i32
    %c0_i32_0 = arith.constant 0 : i32
    %c0_i32_1 = arith.constant 0 : i32
    %c0_i32_2 = arith.constant 0 : i32
    %c0_i32_3 = arith.constant 0 : i32
    return %c0_i32, %c0_i32_0, %c0_i32_1, %c0_i32_2 : i32, i32, i32, i32
  }
  func.func @transform_6(%arg0: i32) -> (i32, i32) {
    %c0_i32 = arith.constant 0 : i32
    %c0_i32_0 = arith.constant 0 : i32
    %c0_i32_1 = arith.constant 0 : i32
    return %c0_i32, %c0_i32_0 : i32, i32
  }
  func.func @transform_7(%arg0: i32) -> (i32, i32) {
    %c0_i32 = arith.constant 0 : i32
    %c0_i32_0 = arith.constant 0 : i32
    %c0_i32_1 = arith.constant 0 : i32
    return %c0_i32, %c0_i32_0 : i32, i32
  }
  func.func @transform_8(%arg0: i32) -> (i32, i32) {
    %c0_i32 = arith.constant 0 : i32
    %c0_i32_0 = arith.constant 0 : i32
    %c0_i32_1 = arith.constant 0 : i32
    return %c0_i32, %c0_i32_0 : i32, i32
  }
  func.func @transform_9(%arg0: i32) -> (i32, i32, i32, i32) {
    %c0_i32 = arith.constant 0 : i32
    %c0_i32_0 = arith.constant 0 : i32
    %c0_i32_1 = arith.constant 0 : i32
    %c0_i32_2 = arith.constant 0 : i32
    return %arg0, %c0_i32, %c0_i32_0, %c0_i32_1 : i32, i32, i32, i32
  }
}

</mosaic_0001>

<llo_original>
// kernel: tpu_custom_call.1
$region0: #{tpu_custom_call.1}
  #allocation0 [shape = 'u32[]', space=smem, size = 0x4, offset = 0x4, fixed_abs, tag = 'smem constant byte address 0x4 - core index']
  #allocation1 [shape = 'u32[144,128]{1,0:T(1,128)}', space=vmem, size = 0x12000, scoped, tag = 'internal scratch']
  #allocation2 [shape = 'f32[18,18,8]{2,1,0:T(8,128)}', space=vmem, size = 0x36000, scoped, tag = 'scratch operand']
  #allocation3 [shape = 'f32[18,18,32]{2,1,0:T(8,128)}', space=vmem, size = 0x36000, scoped, tag = 'scratch operand']
  %s0 = inlined_call_operand.vmem [shape: f32[2,16,16,8], index: 0, kind: input, shape index: {}]
  %s1 = inlined_call_operand.vmem [shape: f32[9,1,1,8], index: 1, kind: input, shape index: {}]
  %s2 = inlined_call_operand.vmem [shape: f32[1,8], index: 2, kind: input, shape index: {}]
  %s3 = inlined_call_operand.vmem [shape: f32[8,32], index: 3, kind: input, shape index: {}]
  %s4 = inlined_call_operand.vmem [shape: f32[1,32], index: 4, kind: input, shape index: {}]
  %s5 = inlined_call_operand.vmem [shape: f32[9,1,1,32], index: 5, kind: input, shape index: {}]
  %s6 = inlined_call_operand.vmem [shape: f32[1,32], index: 6, kind: input, shape index: {}]
  %s7 = inlined_call_operand.vmem [shape: f32[32,16], index: 7, kind: input, shape index: {}]
  %s8 = inlined_call_operand.vmem [shape: f32[1,16], index: 8, kind: input, shape index: {}]
  %s9 = inlined_call_operand.hbm [shape: f32[2,8,8,16], index: 9, kind: output, shape index: {}]
  %s10 = sld [smem:[#allocation0]]
  $region69: #{tpu_custom_call.1} parent=0
    _
  %s12 = ssub.s32 1, %s10
  %s13 = scalar_select 0, %s12, %s10
  $region1: #{tpu_custom_call.1} parent=0
    #allocation4 [shape = 'u8[65536]{0}', space=vmem, size = 0x10000, scoped, tag = 'output window, operand 0']
    #allocation5 [shape = 's32[2]{0}', space=sflag, size = 0x8, scoped, tag = 'scoped memory for tpu_custom_call.1']
    %14 = vsyncpa [#allocation5], 0
    %s15 = scalar_lea.sflag [#allocation5], 1
    %16 = vsyncpa %s15, 0
    loop: start=0, step=1, limit=4
    $region2: #{tpu_custom_call.1} parent=1 // loop_pre_header
      _
    $region3: #{tpu_custom_call.1} parent=1 // loop_header
      %s18 = sphi 0, %s22
      %p19 = scmp.ge.s32.totalorder %s18, 4
      %s28 = sphi 0, %s30
      %s31 = sphi 0, %s28
      %s32 = sphi 0, %s31
      %s48 = sphi 0, %s32
      %s52 = sphi 0, %s52
      %s54 = sphi 0, %s52
      %s55 = sphi 0, %s54
      %s69 = sphi 0, %s55
      %s73 = sphi 0, %s73
      %s75 = sphi 0, %s73
      %s76 = sphi 0, %s75
      %s90 = sphi 0, %s76
      %s94 = sphi 0, %s94
      %s96 = sphi 0, %s94
      %s97 = sphi 0, %s96
      %s111 = sphi 0, %s97
      %s115 = sphi 0, %s115
      %s117 = sphi 0, %s115
      %s118 = sphi 0, %s117
      %s132 = sphi 0, %s118
      %s136 = sphi 0, %s136
      %s138 = sphi 0, %s136
      %s139 = sphi 0, %s138
      %s153 = sphi 0, %s139
      %s157 = sphi 0, %s157
      %s159 = sphi 0, %s157
      %s160 = sphi 0, %s159
      %s174 = sphi 0, %s160
      %s178 = sphi 0, %s178
      %s180 = sphi 0, %s178
      %s181 = sphi 0, %s180
      %s195 = sphi 0, %s181
      %s199 = sphi 0, %s199
      %s201 = sphi 0, %s199
      %s202 = sphi 0, %s201
      %s216 = sphi 0, %s202
      %s222 = sphi 0, %s224
      %s225 = sphi 0, %s222
      %s226 = sphi 0, %s225
      %s242 = sphi 0, %s226
    $region4: #{tpu_custom_call.1} parent=1 // loop_header_branch
      %21 = sbr.rel (%p19) target = $region8
    $region5: #{tpu_custom_call.1} parent=1 // loop_body
      %s23 = ssub.s32 %s18, 1
      %s24 = ssub.s32 %s18, 2
      %s25 = sadd.s32 %s18, 1
      %s26 = ssub.s32 %s18, %s25
      %p27 = scmp.eq.s32.totalorder %s26, 0
      %s29 = sadd.s32 %s28, 1
      %s30 = scalar_select %p27, %s28, %s29
      %p33 = pneg %p27
      %p34 = scmp.eq.s32.totalorder %s18, 1
      %p35 = por %p33, %p34
      %p36 = scmp.ne.s32.totalorder %s28, %s31
      %p37 = scmp.eq.s32.totalorder %s18, 0
      %p38 = por %p36, %p37
      %p39 = scmp.ne.s32.totalorder %s28, %s31
      %p40 = scmp.eq.s32.totalorder %s23, 1
      %p41 = por %p39, %p40
      %p42 = scmp.ne.s32.totalorder %s31, %s32
      %p43 = scmp.eq.s32.totalorder %s23, 0
      %p44 = por %p42, %p43
      %p45 = scmp.ne.s32.totalorder %s31, %s32
      %p46 = scmp.eq.s32.totalorder %s24, 1
      %p47 = por %p45, %p46
      %p49 = scmp.ne.s32.totalorder %s32, %s48
      %p50 = scmp.eq.s32.totalorder %s24, 0
      %p51 = por %p49, %p50
      %s53 = sadd.s32 %s52, 1
      %p56 = scmp.eq.s32.totalorder %s18, 1
      %p57 = scmp.ne.s32.totalorder %s52, %s54
      %p58 = scmp.eq.s32.totalorder %s18, 0
      %p59 = por %p57, %p58
      %p60 = scmp.ne.s32.totalorder %s52, %s54
      %p61 = scmp.eq.s32.totalorder %s23, 1
      %p62 = por %p60, %p61
      %p63 = scmp.ne.s32.totalorder %s54, %s55
      %p64 = scmp.eq.s32.totalorder %s23, 0
      %p65 = por %p63, %p64
      %p66 = scmp.ne.s32.totalorder %s54, %s55
      %p67 = scmp.eq.s32.totalorder %s24, 1
      %p68 = por %p66, %p67
      %p70 = scmp.ne.s32.totalorder %s55, %s69
      %p71 = scmp.eq.s32.totalorder %s24, 0
      %p72 = por %p70, %p71
      %s74 = sadd.s32 %s73, 1
      %p77 = scmp.eq.s32.totalorder %s18, 1
      %p78 = scmp.ne.s32.totalorder %s73, %s75
      %p79 = scmp.eq.s32.totalorder %s18, 0
      %p80 = por %p78, %p79
      %p81 = scmp.ne.s32.totalorder %s73, %s75
      %p82 = scmp.eq.s32.totalorder %s23, 1
      %p83 = por %p81, %p82
      %p84 = scmp.ne.s32.totalorder %s75, %s76
      %p85 = scmp.eq.s32.totalorder %s23, 0
      %p86 = por %p84, %p85
      %p87 = scmp.ne.s32.totalorder %s75, %s76
      %p88 = scmp.eq.s32.totalorder %s24, 1
      %p89 = por %p87, %p88
      %p91 = scmp.ne.s32.totalorder %s76, %s90
      %p92 = scmp.eq.s32.totalorder %s24, 0
      %p93 = por %p91, %p92
      %s95 = sadd.s32 %s94, 1
      %p98 = scmp.eq.s32.totalorder %s18, 1
      %p99 = scmp.ne.s32.totalorder %s94, %s96
      %p100 = scmp.eq.s32.totalorder %s18, 0
      %p101 = por %p99, %p100
      %p102 = scmp.ne.s32.totalorder %s94, %s96
      %p103 = scmp.eq.s32.totalorder %s23, 1
      %p104 = por %p102, %p103
      %p105 = scmp.ne.s32.totalorder %s96, %s97
      %p106 = scmp.eq.s32.totalorder %s23, 0
      %p107 = por %p105, %p106
      %p108 = scmp.ne.s32.totalorder %s96, %s97
      %p109 = scmp.eq.s32.totalorder %s24, 1
      %p110 = por %p108, %p109
      %p112 = scmp.ne.s32.totalorder %s97, %s111
      %p113 = scmp.eq.s32.totalorder %s24, 0
      %p114 = por %p112, %p113
      %s116 = sadd.s32 %s115, 1
      %p119 = scmp.eq.s32.totalorder %s18, 1
      %p120 = scmp.ne.s32.totalorder %s115, %s117
      %p121 = scmp.eq.s32.totalorder %s18, 0
      %p122 = por %p120, %p121
      %p123 = scmp.ne.s32.totalorder %s115, %s117
      %p124 = scmp.eq.s32.totalorder %s23, 1
      %p125 = por %p123, %p124
      %p126 = scmp.ne.s32.totalorder %s117, %s118
      %p127 = scmp.eq.s32.totalorder %s23, 0
      %p128 = por %p126, %p127
      %p129 = scmp.ne.s32.totalorder %s117, %s118
      %p130 = scmp.eq.s32.totalorder %s24, 1
      %p131 = por %p129, %p130
      %p133 = scmp.ne.s32.totalorder %s118, %s132
      %p134 = scmp.eq.s32.totalorder %s24, 0
      %p135 = por %p133, %p134
      %s137 = sadd.s32 %s136, 1
      %p140 = scmp.eq.s32.totalorder %s18, 1
      %p141 = scmp.ne.s32.totalorder %s136, %s138
      %p142 = scmp.eq.s32.totalorder %s18, 0
      %p143 = por %p141, %p142
      %p144 = scmp.ne.s32.totalorder %s136, %s138
      %p145 = scmp.eq.s32.totalorder %s23, 1
      %p146 = por %p144, %p145
      %p147 = scmp.ne.s32.totalorder %s138, %s139
      %p148 = scmp.eq.s32.totalorder %s23, 0
      %p149 = por %p147, %p148
      %p150 = scmp.ne.s32.totalorder %s138, %s139
      %p151 = scmp.eq.s32.totalorder %s24, 1
      %p152 = por %p150, %p151
      %p154 = scmp.ne.s32.totalorder %s139, %s153
      %p155 = scmp.eq.s32.totalorder %s24, 0
      %p156 = por %p154, %p155
      %s158 = sadd.s32 %s157, 1
      %p161 = scmp.eq.s32.totalorder %s18, 1
      %p162 = scmp.ne.s32.totalorder %s157, %s159
      %p163 = scmp.eq.s32.totalorder %s18, 0
      %p164 = por %p162, %p163
      %p165 = scmp.ne.s32.totalorder %s157, %s159
      %p166 = scmp.eq.s32.totalorder %s23, 1
      %p167 = por %p165, %p166
      %p168 = scmp.ne.s32.totalorder %s159, %s160
      %p169 = scmp.eq.s32.totalorder %s23, 0
      %p170 = por %p168, %p169
      %p171 = scmp.ne.s32.totalorder %s159, %s160
      %p172 = scmp.eq.s32.totalorder %s24, 1
      %p173 = por %p171, %p172
      %p175 = scmp.ne.s32.totalorder %s160, %s174
      %p176 = scmp.eq.s32.totalorder %s24, 0
      %p177 = por %p175, %p176
      %s179 = sadd.s32 %s178, 1
      %p182 = scmp.eq.s32.totalorder %s18, 1
      %p183 = scmp.ne.s32.totalorder %s178, %s180
      %p184 = scmp.eq.s32.totalorder %s18, 0
      %p185 = por %p183, %p184
      %p186 = scmp.ne.s32.totalorder %s178, %s180
      %p187 = scmp.eq.s32.totalorder %s23, 1
      %p188 = por %p186, %p187
      %p189 = scmp.ne.s32.totalorder %s180, %s181
      %p190 = scmp.eq.s32.totalorder %s23, 0
      %p191 = por %p189, %p190
      %p192 = scmp.ne.s32.totalorder %s180, %s181
      %p193 = scmp.eq.s32.totalorder %s24, 1
      %p194 = por %p192, %p193
      %p196 = scmp.ne.s32.totalorder %s181, %s195
      %p197 = scmp.eq.s32.totalorder %s24, 0
      %p198 = por %p196, %p197
      %s200 = sadd.s32 %s199, 1
      %p203 = scmp.eq.s32.totalorder %s18, 1
      %p204 = scmp.ne.s32.totalorder %s199, %s201
      %p205 = scmp.eq.s32.totalorder %s18, 0
      %p206 = por %p204, %p205
      %p207 = scmp.ne.s32.totalorder %s199, %s201
      %p208 = scmp.eq.s32.totalorder %s23, 1
      %p209 = por %p207, %p208
      %p210 = scmp.ne.s32.totalorder %s201, %s202
      %p211 = scmp.eq.s32.totalorder %s23, 0
      %p212 = por %p210, %p211
      %p213 = scmp.ne.s32.totalorder %s201, %s202
      %p214 = scmp.eq.s32.totalorder %s24, 1
      %p215 = por %p213, %p214
      %p217 = scmp.ne.s32.totalorder %s202, %s216
      %p218 = scmp.eq.s32.totalorder %s24, 0
      %p219 = por %p217, %p218
      %s220 = ssub.s32 %s18, %s25
      %p221 = scmp.eq.s32.totalorder %s220, 0
      %s223 = sadd.s32 %s222, 1
      %s224 = scalar_select %p221, %s222, %s223
      %p227 = pneg %p221
      %p228 = scmp.eq.s32.totalorder %s18, 1
      %p229 = por %p227, %p228
      %p230 = scmp.ne.s32.totalorder %s222, %s225
      %p231 = scmp.eq.s32.totalorder %s18, 0
      %p232 = por %p230, %p231
      %p233 = scmp.ne.s32.totalorder %s222, %s225
      %p234 = scmp.eq.s32.totalorder %s23, 1
      %p235 = por %p233, %p234
      %p236 = scmp.ne.s32.totalorder %s225, %s226
      %p237 = scmp.eq.s32.totalorder %s23, 0
      %p238 = por %p236, %p237
      %p239 = scmp.ne.s32.totalorder %s225, %s226
      %p240 = scmp.eq.s32.totalorder %s24, 1
      %p241 = por %p239, %p240
      %p243 = scmp.ne.s32.totalorder %s226, %s242
      %p244 = scmp.eq.s32.totalorder %s24, 0
      %p245 = por %p243, %p244
      %p246 = scmp.le.s32.totalorder 1, %s18
      %p247 = scmp.lt.s32.totalorder %s18, 3
      %p248 = pnand %p246, %p247
      %p249 = pneg %p248
      // Predicated region
      $region9: #{tpu_custom_call.1} parent=5 // pred_check
        _
      $region10: #{tpu_custom_call.1} parent=5 // pred_check_branch
        %251 = sbr.rel (%p248) target = $region12
      $region11: #{tpu_custom_call.1} parent=5 // pred_region
        %s252 = ssub.s32 %s18, 1
        // Predicated region
        $region13: #{tpu_custom_call.1} parent=11 // pred_check
          %p253 = pneg %p65
        $region14: #{tpu_custom_call.1} parent=11 // pred_check_branch
          %255 = sbr.rel (%p253) target = $region16
        $region15: #{tpu_custom_call.1} parent=11 // pred_region
          _
        $region16: #{tpu_custom_call.1} parent=11 // pred_fallthru
          _
        // Predicated region
        $region17: #{tpu_custom_call.1} parent=11 // pred_check
          %p256 = pneg %p86
        $region18: #{tpu_custom_call.1} parent=11 // pred_check_branch
          %258 = sbr.rel (%p256) target = $region20
        $region19: #{tpu_custom_call.1} parent=11 // pred_region
          _
        $region20: #{tpu_custom_call.1} parent=11 // pred_fallthru
          _
        // Predicated region
        $region21: #{tpu_custom_call.1} parent=11 // pred_check
          %p259 = pneg %p107
        $region22: #{tpu_custom_call.1} parent=11 // pred_check_branch
          %261 = sbr.rel (%p259) target = $region24
        $region23: #{tpu_custom_call.1} parent=11 // pred_region
          _
        $region24: #{tpu_custom_call.1} parent=11 // pred_fallthru
          _
        // Predicated region
        $region25: #{tpu_custom_call.1} parent=11 // pred_check
          %p262 = pneg %p128
        $region26: #{tpu_custom_call.1} parent=11 // pred_check_branch
          %264 = sbr.rel (%p262) target = $region28
        $region27: #{tpu_custom_call.1} parent=11 // pred_region
          _
        $region28: #{tpu_custom_call.1} parent=11 // pred_fallthru
          _
        // Predicated region
        $region29: #{tpu_custom_call.1} parent=11 // pred_check
          %p265 = pneg %p149
        $region30: #{tpu_custom_call.1} parent=11 // pred_check_branch
          %267 = sbr.rel (%p265) target = $region32
        $region31: #{tpu_custom_call.1} parent=11 // pred_region
          _
        $region32: #{tpu_custom_call.1} parent=11 // pred_fallthru
          _
        // Predicated region
        $region33: #{tpu_custom_call.1} parent=11 // pred_check
          %p268 = pneg %p170
        $region34: #{tpu_custom_call.1} parent=11 // pred_check_branch
          %270 = sbr.rel (%p268) target = $region36
        $region35: #{tpu_custom_call.1} parent=11 // pred_region
          _
        $region36: #{tpu_custom_call.1} parent=11 // pred_fallthru
          _
        // Predicated region
        $region37: #{tpu_custom_call.1} parent=11 // pred_check
          %p271 = pneg %p191
        $region38: #{tpu_custom_call.1} parent=11 // pred_check_branch
          %273 = sbr.rel (%p271) target = $region40
        $region39: #{tpu_custom_call.1} parent=11 // pred_region
          _
        $region40: #{tpu_custom_call.1} parent=11 // pred_fallthru
          _
        // Predicated region
        $region41: #{tpu_custom_call.1} parent=11 // pred_check
          %p274 = pneg %p212
        $region42: #{tpu_custom_call.1} parent=11 // pred_check_branch
          %276 = sbr.rel (%p274) target = $region44
        $region43: #{tpu_custom_call.1} parent=11 // pred_region
          _
        $region44: #{tpu_custom_call.1} parent=11 // pred_fallthru
          _
      $region12: #{tpu_custom_call.1} parent=5 // pred_fallthru
        _
      %p277 = scmp.lt.s32.totalorder %s18, 2
      // Predicated region
      $region45: #{tpu_custom_call.1} parent=5 // pred_check
        %p278 = pneg %p277
      $region46: #{tpu_custom_call.1} parent=5 // pred_check_branch
        %280 = sbr.rel (%p278) target = $region48
      $region47: #{tpu_custom_call.1} parent=5 // pred_region
        // Predicated region
        $region49: #{tpu_custom_call.1} parent=47 // pred_check
          %p281 = pneg %p38
        $region50: #{tpu_custom_call.1} parent=47 // pred_check_branch
          %283 = sbr.rel (%p281) target = $region52
        $region51: #{tpu_custom_call.1} parent=47 // pred_region
          %p284 = scmp.lt.s32.totalorder %s18, 1
          %s285 = scalar_select %p284, %s18, 1
          %s286 = smul.addr %s285, 32
          %s287 = smul.addr %s286, 8
          %s288 = scalar_lea.vmem %s0, %s287
        $region52: #{tpu_custom_call.1} parent=47 // pred_fallthru
          _
      $region48: #{tpu_custom_call.1} parent=5 // pred_fallthru
        _
      %p289 = scmp.le.s32.totalorder 1, %s18
      %p290 = scmp.lt.s32.totalorder %s18, 3
      %p291 = pnand %p289, %p290
      %p292 = pneg %p291
      // Predicated region
      $region53: #{tpu_custom_call.1} parent=5 // pred_check
        _
      $region54: #{tpu_custom_call.1} parent=5 // pred_check_branch
        %294 = sbr.rel (%p291) target = $region56
      $region55: #{tpu_custom_call.1} parent=5 // pred_region
        %s295 = ssub.s32 %s18, 1
        %p296 = scmp.lt.s32.totalorder %s23, 1
        %s297 = scalar_select %p296, %s23, 1
        %s298 = smul.addr %s297, 32
        %s299 = smul.addr %s298, 8
        %s300 = scalar_lea.vmem %s0, %s299
        %p301 = pneg %p44
        %p302 = pneg %p41
        %p303 = pneg %p65
        %p304 = pneg %p62
        %p305 = pneg %p86
        %p306 = pneg %p83
        %p307 = pneg %p107
        %p308 = pneg %p104
        %p309 = pneg %p128
        %p310 = pneg %p125
        %p311 = pneg %p149
        %p312 = pneg %p146
        %p313 = pneg %p170
        %p314 = pneg %p167
        %p315 = pneg %p191
        %p316 = pneg %p188
        %p317 = pneg %p212
        %p318 = pneg %p209
        %p319 = pneg %p238
        %p320 = pneg %p235
        %s321 = sand.u32 %s225, 1
        %s322 = scalar_lea.sflag [#allocation5], %s321
        %s323 = sand.u32 %s225, 1
        %s324 = smul.addr %s323, 64
        %s325 = scalar_lea.vmem [#allocation4], %s324
        %p326 = scmp.lt.s32.totalorder %s23, 1
        %s327 = scalar_select %p326, %s23, 1
        %s328 = smul.addr %s327, 32
        %s329 = smul.addr %s328, 8
        %s330 = scalar_lea.vmem %s0, %s329
        %vm331 = vcmask 64512
        %332 = vst.msk [vmem:[#allocation2] sm:$0xff] %vm331, 0.0
        %333 = vst.msk [vmem:[#allocation2 + $0x8] sm:$0xff] %vm331, 0.0
        %vm334 = vcmask 58368
        %335 = vst.msk [vmem:[#allocation2 + $0x10] sm:$0x3] %vm334, 0.0
        %s336 = scalar_lea.vmem [#allocation2], 408
        %337 = vst.msk [vmem:[%s336] sm:$0xff] %vm331, 0.0
        %338 = vst.msk [vmem:[%s336 + $0x8] sm:$0xff] %vm331, 0.0
        %339 = vst.msk [vmem:[%s336 + $0x10] sm:$0x3] %vm334, 0.0
        %vm340 = vcmask 57344
        %341 = vst.msk [vmem:[#allocation2] sm:$0x1] %vm340, 0.0
        %342 = vst.msk [vmem:[#allocation2 + $0x18] sm:$0x1] %vm340, 0.0
        %343 = vst.msk [vmem:[#allocation2 + $0x30] sm:$0x1] %vm340, 0.0
        %344 = vst.msk [vmem:[#allocation2 + $0x48] sm:$0x1] %vm340, 0.0
        %345 = vst.msk [vmem:[#allocation2 + $0x60] sm:$0x1] %vm340, 0.0
        %346 = vst.msk [vmem:[#allocation2 + $0x78] sm:$0x1] %vm340, 0.0
        %347 = vst.msk [vmem:[#allocation2 + $0x90] sm:$0x1] %vm340, 0.0
        %348 = vst.msk [vmem:[#allocation2 + $0xa8] sm:$0x1] %vm340, 0.0
        %349 = vst.msk [vmem:[#allocation2 + $0xc0] sm:$0x1] %vm340, 0.0
        %350 = vst.msk [vmem:[#allocation2 + $0xd8] sm:$0x1] %vm340, 0.0
        %351 = vst.msk [vmem:[#allocation2 + $0xf0] sm:$0x1] %vm340, 0.0
        %352 = vst.msk [vmem:[#allocation2 + $0x108] sm:$0x1] %vm340, 0.0
        %353 = vst.msk [vmem:[#allocation2 + $0x120] sm:$0x1] %vm340, 0.0
        %354 = vst.msk [vmem:[#allocation2 + $0x138] sm:$0x1] %vm340, 0.0
        %355 = vst.msk [vmem:[#allocation2 + $0x150] sm:$0x1] %vm340, 0.0
        %356 = vst.msk [vmem:[#allocation2 + $0x168] sm:$0x1] %vm340, 0.0
        %357 = vst.msk [vmem:[#allocation2 + $0x180] sm:$0x1] %vm340, 0.0
        %358 = vst.msk [vmem:[#allocation2 + $0x198] sm:$0x1] %vm340, 0.0
        %359 = vst.msk [vmem:[#allocation2 + $0x11] sm:$0x1] %vm340, 0.0
        %360 = vst.msk [vmem:[#allocation2 + $0x29] sm:$0x1] %vm340, 0.0
        %361 = vst.msk [vmem:[#allocation2 + $0x41] sm:$0x1] %vm340, 0.0
        %362 = vst.msk [vmem:[#allocation2 + $0x59] sm:$0x1] %vm340, 0.0
        %363 = vst.msk [vmem:[#allocation2 + $0x71] sm:$0x1] %vm340, 0.0
        %364 = vst.msk [vmem:[#allocation2 + $0x89] sm:$0x1] %vm340, 0.0
        %365 = vst.msk [vmem:[#allocation2 + $0xa1] sm:$0x1] %vm340, 0.0
        %366 = vst.msk [vmem:[#allocation2 + $0xb9] sm:$0x1] %vm340, 0.0
        %367 = vst.msk [vmem:[#allocation2 + $0xd1] sm:$0x1] %vm340, 0.0
        %368 = vst.msk [vmem:[#allocation2 + $0xe9] sm:$0x1] %vm340, 0.0
        %369 = vst.msk [vmem:[#allocation2 + $0x101] sm:$0x1] %vm340, 0.0
        %370 = vst.msk [vmem:[#allocation2 + $0x119] sm:$0x1] %vm340, 0.0
        %371 = vst.msk [vmem:[#allocation2 + $0x131] sm:$0x1] %vm340, 0.0
        %372 = vst.msk [vmem:[#allocation2 + $0x149] sm:$0x1] %vm340, 0.0
        %373 = vst.msk [vmem:[#allocation2 + $0x161] sm:$0x1] %vm340, 0.0
        %374 = vst.msk [vmem:[#allocation2 + $0x179] sm:$0x1] %vm340, 0.0
        %375 = vst.msk [vmem:[#allocation2 + $0x191] sm:$0x1] %vm340, 0.0
        %376 = vst.msk [vmem:[#allocation2 + $0x1a9] sm:$0x1] %vm340, 0.0
        %v377 = vld [vmem:[%s330] sm:$0xff]
        %v378 = vld [vmem:[%s330 + $0x8] sm:$0xff]
        %v379 = vld [vmem:[%s330 + $0x10] sm:$0xff]
        %v380 = vld [vmem:[%s330 + $0x18] sm:$0xff]
        %v381 = vld [vmem:[%s330 + $0x20] sm:$0xff]
        %v382 = vld [vmem:[%s330 + $0x28] sm:$0xff]
        %v383 = vld [vmem:[%s330 + $0x30] sm:$0xff]
        %v384 = vld [vmem:[%s330 + $0x38] sm:$0xff]
        %v385 = vld [vmem:[%s330 + $0x40] sm:$0xff]
        %v386 = vld [vmem:[%s330 + $0x48] sm:$0xff]
        %v387 = vld [vmem:[%s330 + $0x50] sm:$0xff]
        %v388 = vld [vmem:[%s330 + $0x58] sm:$0xff]
        %v389 = vld [vmem:[%s330 + $0x60] sm:$0xff]
        %v390 = vld [vmem:[%s330 + $0x68] sm:$0xff]
        %v391 = vld [vmem:[%s330 + $0x70] sm:$0xff]
        %v392 = vld [vmem:[%s330 + $0x78] sm:$0xff]
        %v393 = vld [vmem:[%s330 + $0x80] sm:$0xff]
        %v394 = vld [vmem:[%s330 + $0x88] sm:$0xff]
        %v395 = vld [vmem:[%s330 + $0x90] sm:$0xff]
        %v396 = vld [vmem:[%s330 + $0x98] sm:$0xff]
        %v397 = vld [vmem:[%s330 + $0xa0] sm:$0xff]
        %v398 = vld [vmem:[%s330 + $0xa8] sm:$0xff]
        %v399 = vld [vmem:[%s330 + $0xb0] sm:$0xff]
        %v400 = vld [vmem:[%s330 + $0xb8] sm:$0xff]
        %v401 = vld [vmem:[%s330 + $0xc0] sm:$0xff]
        %v402 = vld [vmem:[%s330 + $0xc8] sm:$0xff]
        %v403 = vld [vmem:[%s330 + $0xd0] sm:$0xff]
        %v404 = vld [vmem:[%s330 + $0xd8] sm:$0xff]
        %v405 = vld [vmem:[%s330 + $0xe0] sm:$0xff]
        %v406 = vld [vmem:[%s330 + $0xe8] sm:$0xff]
        %v407 = vld [vmem:[%s330 + $0xf0] sm:$0xff]
        %v408 = vld [vmem:[%s330 + $0xf8] sm:$0xff]
        %s409 = scalar_lea.vmem [#allocation2], 24
        %410 = vst.msk [vmem:[%s409 + $0x1] sm:$0xff] %vm331, %v377
        %411 = vst.msk [vmem:[%s409 + $0x9] sm:$0xff] %vm331, %v378
        %412 = vst.msk [vmem:[%s409 + $0x19] sm:$0xff] %vm331, %v379
        %413 = vst.msk [vmem:[%s409 + $0x21] sm:$0xff] %vm331, %v380
        %414 = vst.msk [vmem:[%s409 + $0x31] sm:$0xff] %vm331, %v381
        %415 = vst.msk [vmem:[%s409 + $0x39] sm:$0xff] %vm331, %v382
        %416 = vst.msk [vmem:[%s409 + $0x49] sm:$0xff] %vm331, %v383
        %417 = vst.msk [vmem:[%s409 + $0x51] sm:$0xff] %vm331, %v384
        %418 = vst.msk [vmem:[%s409 + $0x61] sm:$0xff] %vm331, %v385
        %419 = vst.msk [vmem:[%s409 + $0x69] sm:$0xff] %vm331, %v386
        %420 = vst.msk [vmem:[%s409 + $0x79] sm:$0xff] %vm331, %v387
        %421 = vst.msk [vmem:[%s409 + $0x81] sm:$0xff] %vm331, %v388
        %422 = vst.msk [vmem:[%s409 + $0x91] sm:$0xff] %vm331, %v389
        %423 = vst.msk [vmem:[%s409 + $0x99] sm:$0xff] %vm331, %v390
        %424 = vst.msk [vmem:[%s409 + $0xa9] sm:$0xff] %vm331, %v391
        %425 = vst.msk [vmem:[%s409 + $0xb1] sm:$0xff] %vm331, %v392
        %426 = vst.msk [vmem:[%s409 + $0xc1] sm:$0xff] %vm331, %v393
        %427 = vst.msk [vmem:[%s409 + $0xc9] sm:$0xff] %vm331, %v394
        %428 = vst.msk [vmem:[%s409 + $0xd9] sm:$0xff] %vm331, %v395
        %429 = vst.msk [vmem:[%s409 + $0xe1] sm:$0xff] %vm331, %v396
        %430 = vst.msk [vmem:[%s409 + $0xf1] sm:$0xff] %vm331, %v397
        %431 = vst.msk [vmem:[%s409 + $0xf9] sm:$0xff] %vm331, %v398
        %432 = vst.msk [vmem:[%s409 + $0x109] sm:$0xff] %vm331, %v399
        %433 = vst.msk [vmem:[%s409 + $0x111] sm:$0xff] %vm331, %v400
        %434 = vst.msk [vmem:[%s409 + $0x121] sm:$0xff] %vm331, %v401
        %435 = vst.msk [vmem:[%s409 + $0x129] sm:$0xff] %vm331, %v402
        %436 = vst.msk [vmem:[%s409 + $0x139] sm:$0xff] %vm331, %v403
        %437 = vst.msk [vmem:[%s409 + $0x141] sm:$0xff] %vm331, %v404
        %438 = vst.msk [vmem:[%s409 + $0x151] sm:$0xff] %vm331, %v405
        %439 = vst.msk [vmem:[%s409 + $0x159] sm:$0xff] %vm331, %v406
        %440 = vst.msk [vmem:[%s409 + $0x169] sm:$0xff] %vm331, %v407
        %441 = vst.msk [vmem:[%s409 + $0x171] sm:$0xff] %vm331, %v408
        %v442 = vld [vmem:[%s1] sm:$0x1]
        %v443 = vld [vmem:[#allocation2] sm:$0xff]
        %v444 = vld [vmem:[#allocation2 + $0x8] sm:$0xff]
        %v445 = vld [vmem:[#allocation2 + $0x18] sm:$0xff]
        %v446 = vld [vmem:[#allocation2 + $0x20] sm:$0xff]
        %v447 = vld [vmem:[#allocation2 + $0x30] sm:$0xff]
        %v448 = vld [vmem:[#allocation2 + $0x38] sm:$0xff]
        %v449 = vld [vmem:[#allocation2 + $0x48] sm:$0xff]
        %v450 = vld [vmem:[#allocation2 + $0x50] sm:$0xff]
        %v451 = vld [vmem:[#allocation2 + $0x60] sm:$0xff]
        %v452 = vld [vmem:[#allocation2 + $0x68] sm:$0xff]
        %v453 = vld [vmem:[#allocation2 + $0x78] sm:$0xff]
        %v454 = vld [vmem:[#allocation2 + $0x80] sm:$0xff]
        %v455 = vld [vmem:[#allocation2 + $0x90] sm:$0xff]
        %v456 = vld [vmem:[#allocation2 + $0x98] sm:$0xff]
        %v457 = vld [vmem:[#allocation2 + $0xa8] sm:$0xff]
        %v458 = vld [vmem:[#allocation2 + $0xb0] sm:$0xff]
        %v459 = vld [vmem:[#allocation2 + $0xc0] sm:$0xff]
        %v460 = vld [vmem:[#allocation2 + $0xc8] sm:$0xff]
        %v461 = vld [vmem:[#allocation2 + $0xd8] sm:$0xff]
        %v462 = vld [vmem:[#allocation2 + $0xe0] sm:$0xff]
        %v463 = vld [vmem:[#allocation2 + $0xf0] sm:$0xff]
        %v464 = vld [vmem:[#allocation2 + $0xf8] sm:$0xff]
        %v465 = vld [vmem:[#allocation2 + $0x108] sm:$0xff]
        %v466 = vld [vmem:[#allocation2 + $0x110] sm:$0xff]
        %v467 = vld [vmem:[#allocation2 + $0x120] sm:$0xff]
        %v468 = vld [vmem:[#allocation2 + $0x128] sm:$0xff]
        %v469 = vld [vmem:[#allocation2 + $0x138] sm:$0xff]
        %v470 = vld [vmem:[#allocation2 + $0x140] sm:$0xff]
        %v471 = vld [vmem:[#allocation2 + $0x150] sm:$0xff]
        %v472 = vld [vmem:[#allocation2 + $0x158] sm:$0xff]
        %v473 = vld [vmem:[#allocation2 + $0x168] sm:$0xff]
        %v474 = vld [vmem:[#allocation2 + $0x170] sm:$0xff]
        %v476 = vlaneseq
        %v477 = vshrl.u32 %v476, 7
        %v478 = vsub.s32 0, %v477
        %v479 = vrot.slane %v442, %v478
        %v481 = vmul.f32 %v443, %v479
        %v482 = vmul.f32 %v444, %v479
        %v483 = vmul.f32 %v445, %v479
        %v484 = vmul.f32 %v446, %v479
        %v485 = vmul.f32 %v447, %v479
        %v486 = vmul.f32 %v448, %v479
        %v487 = vmul.f32 %v449, %v479
        %v488 = vmul.f32 %v450, %v479
        %v489 = vmul.f32 %v451, %v479
        %v490 = vmul.f32 %v452, %v479
        %v491 = vmul.f32 %v453, %v479
        %v492 = vmul.f32 %v454, %v479
        %v493 = vmul.f32 %v455, %v479
        %v494 = vmul.f32 %v456, %v479
        %v495 = vmul.f32 %v457, %v479
        %v496 = vmul.f32 %v458, %v479
        %v497 = vmul.f32 %v459, %v479
        %v498 = vmul.f32 %v460, %v479
        %v499 = vmul.f32 %v461, %v479
        %v500 = vmul.f32 %v462, %v479
        %v501 = vmul.f32 %v463, %v479
        %v502 = vmul.f32 %v464, %v479
        %v503 = vmul.f32 %v465, %v479
        %v504 = vmul.f32 %v466, %v479
        %v505 = vmul.f32 %v467, %v479
        %v506 = vmul.f32 %v468, %v479
        %v507 = vmul.f32 %v469, %v479
        %v508 = vmul.f32 %v470, %v479
        %v509 = vmul.f32 %v471, %v479
        %v510 = vmul.f32 %v472, %v479
        %v511 = vmul.f32 %v473, %v479
        %v512 = vmul.f32 %v474, %v479
        %v513 = vadd.f32 %v481, 0.0
        %v514 = vadd.f32 %v482, 0.0
        %v515 = vadd.f32 %v483, 0.0
        %v516 = vadd.f32 %v484, 0.0
        %v517 = vadd.f32 %v485, 0.0
        %v518 = vadd.f32 %v486, 0.0
        %v519 = vadd.f32 %v487, 0.0
        %v520 = vadd.f32 %v488, 0.0
        %v521 = vadd.f32 %v489, 0.0
        %v522 = vadd.f32 %v490, 0.0
        %v523 = vadd.f32 %v491, 0.0
        %v524 = vadd.f32 %v492, 0.0
        %v525 = vadd.f32 %v493, 0.0
        %v526 = vadd.f32 %v494, 0.0
        %v527 = vadd.f32 %v495, 0.0
        %v528 = vadd.f32 %v496, 0.0
        %v529 = vadd.f32 %v497, 0.0
        %v530 = vadd.f32 %v498, 0.0
        %v531 = vadd.f32 %v499, 0.0
        %v532 = vadd.f32 %v500, 0.0
        %v533 = vadd.f32 %v501, 0.0
        %v534 = vadd.f32 %v502, 0.0
        %v535 = vadd.f32 %v503, 0.0
        %v536 = vadd.f32 %v504, 0.0
        %v537 = vadd.f32 %v505, 0.0
        %v538 = vadd.f32 %v506, 0.0
        %v539 = vadd.f32 %v507, 0.0
        %v540 = vadd.f32 %v508, 0.0
        %v541 = vadd.f32 %v509, 0.0
        %v542 = vadd.f32 %v510, 0.0
        %v543 = vadd.f32 %v511, 0.0
        %v544 = vadd.f32 %v512, 0.0
        %s545 = scalar_lea.vmem %s1, 1
        %v546 = vld [vmem:[%s545] sm:$0x1]
        %v547 = vld [vmem:[#allocation2 + $0x1] sm:$0xff]
        %v548 = vld [vmem:[#allocation2 + $0x9] sm:$0xff]
        %v549 = vld [vmem:[#allocation2 + $0x19] sm:$0xff]
        %v550 = vld [vmem:[#allocation2 + $0x21] sm:$0xff]
        %v551 = vld [vmem:[#allocation2 + $0x31] sm:$0xff]
        %v552 = vld [vmem:[#allocation2 + $0x39] sm:$0xff]
        %v553 = vld [vmem:[#allocation2 + $0x49] sm:$0xff]
        %v554 = vld [vmem:[#allocation2 + $0x51] sm:$0xff]
        %v555 = vld [vmem:[#allocation2 + $0x61] sm:$0xff]
        %v556 = vld [vmem:[#allocation2 + $0x69] sm:$0xff]
        %v557 = vld [vmem:[#allocation2 + $0x79] sm:$0xff]
        %v558 = vld [vmem:[#allocation2 + $0x81] sm:$0xff]
        %v559 = vld [vmem:[#allocation2 + $0x91] sm:$0xff]
        %v560 = vld [vmem:[#allocation2 + $0x99] sm:$0xff]
        %v561 = vld [vmem:[#allocation2 + $0xa9] sm:$0xff]
        %v562 = vld [vmem:[#allocation2 + $0xb1] sm:$0xff]
        %v563 = vld [vmem:[#allocation2 + $0xc1] sm:$0xff]
        %v564 = vld [vmem:[#allocation2 + $0xc9] sm:$0xff]
        %v565 = vld [vmem:[#allocation2 + $0xd9] sm:$0xff]
        %v566 = vld [vmem:[#allocation2 + $0xe1] sm:$0xff]
        %v567 = vld [vmem:[#allocation2 + $0xf1] sm:$0xff]
        %v568 = vld [vmem:[#allocation2 + $0xf9] sm:$0xff]
        %v569 = vld [vmem:[#allocation2 + $0x109] sm:$0xff]
        %v570 = vld [vmem:[#allocation2 + $0x111] sm:$0xff]
        %v571 = vld [vmem:[#allocation2 + $0x121] sm:$0xff]
        %v572 = vld [vmem:[#allocation2 + $0x129] sm:$0xff]
        %v573 = vld [vmem:[#allocation2 + $0x139] sm:$0xff]
        %v574 = vld [vmem:[#allocation2 + $0x141] sm:$0xff]
        %v575 = vld [vmem:[#allocation2 + $0x151] sm:$0xff]
        %v576 = vld [vmem:[#allocation2 + $0x159] sm:$0xff]
        %v577 = vld [vmem:[#allocation2 + $0x169] sm:$0xff]
        %v578 = vld [vmem:[#allocation2 + $0x171] sm:$0xff]
        %v580 = vlaneseq
        %v581 = vshrl.u32 %v580, 7
        %v582 = vsub.s32 0, %v581
        %v583 = vrot.slane %v546, %v582
        %v585 = vmul.f32 %v547, %v583
        %v586 = vmul.f32 %v548, %v583
        %v587 = vmul.f32 %v549, %v583
        %v588 = vmul.f32 %v550, %v583
        %v589 = vmul.f32 %v551, %v583
        %v590 = vmul.f32 %v552, %v583
        %v591 = vmul.f32 %v553, %v583
        %v592 = vmul.f32 %v554, %v583
        %v593 = vmul.f32 %v555, %v583
        %v594 = vmul.f32 %v556, %v583
        %v595 = vmul.f32 %v557, %v583
        %v596 = vmul.f32 %v558, %v583
        %v597 = vmul.f32 %v559, %v583
        %v598 = vmul.f32 %v560, %v583
        %v599 = vmul.f32 %v561, %v583
        %v600 = vmul.f32 %v562, %v583
        %v601 = vmul.f32 %v563, %v583
        %v602 = vmul.f32 %v564, %v583
        %v603 = vmul.f32 %v565, %v583
        %v604 = vmul.f32 %v566, %v583
        %v605 = vmul.f32 %v567, %v583
        %v606 = vmul.f32 %v568, %v583
        %v607 = vmul.f32 %v569, %v583
        %v608 = vmul.f32 %v570, %v583
        %v609 = vmul.f32 %v571, %v583
        %v610 = vmul.f32 %v572, %v583
        %v611 = vmul.f32 %v573, %v583
        %v612 = vmul.f32 %v574, %v583
        %v613 = vmul.f32 %v575, %v583
        %v614 = vmul.f32 %v576, %v583
        %v615 = vmul.f32 %v577, %v583
        %v616 = vmul.f32 %v578, %v583
        %v617 = vadd.f32 %v513, %v585
        %v618 = vadd.f32 %v514, %v586
        %v619 = vadd.f32 %v515, %v587
        %v620 = vadd.f32 %v516, %v588
        %v621 = vadd.f32 %v517, %v589
        %v622 = vadd.f32 %v518, %v590
        %v623 = vadd.f32 %v519, %v591
        %v624 = vadd.f32 %v520, %v592
        %v625 = vadd.f32 %v521, %v593
        %v626 = vadd.f32 %v522, %v594
        %v627 = vadd.f32 %v523, %v595
        %v628 = vadd.f32 %v524, %v596
        %v629 = vadd.f32 %v525, %v597
        %v630 = vadd.f32 %v526, %v598
        %v631 = vadd.f32 %v527, %v599
        %v632 = vadd.f32 %v528, %v600
        %v633 = vadd.f32 %v529, %v601
        %v634 = vadd.f32 %v530, %v602
        %v635 = vadd.f32 %v531, %v603
        %v636 = vadd.f32 %v532, %v604
        %v637 = vadd.f32 %v533, %v605
        %v638 = vadd.f32 %v534, %v606
        %v639 = vadd.f32 %v535, %v607
        %v640 = vadd.f32 %v536, %v608
        %v641 = vadd.f32 %v537, %v609
        %v642 = vadd.f32 %v538, %v610
        %v643 = vadd.f32 %v539, %v611
        %v644 = vadd.f32 %v540, %v612
        %v645 = vadd.f32 %v541, %v613
        %v646 = vadd.f32 %v542, %v614
        %v647 = vadd.f32 %v543, %v615
        %v648 = vadd.f32 %v544, %v616
        %s649 = scalar_lea.vmem %s1, 2
        %v650 = vld [vmem:[%s649] sm:$0x1]
        %v651 = vld [vmem:[#allocation2 + $0x2] sm:$0xff]
        %v652 = vld [vmem:[#allocation2 + $0xa] sm:$0xff]
        %v653 = vld [vmem:[#allocation2 + $0x1a] sm:$0xff]
        %v654 = vld [vmem:[#allocation2 + $0x22] sm:$0xff]
        %v655 = vld [vmem:[#allocation2 + $0x32] sm:$0xff]
        %v656 = vld [vmem:[#allocation2 + $0x3a] sm:$0xff]
        %v657 = vld [vmem:[#allocation2 + $0x4a] sm:$0xff]
        %v658 = vld [vmem:[#allocation2 + $0x52] sm:$0xff]
        %v659 = vld [vmem:[#allocation2 + $0x62] sm:$0xff]
        %v660 = vld [vmem:[#allocation2 + $0x6a] sm:$0xff]
        %v661 = vld [vmem:[#allocation2 + $0x7a] sm:$0xff]
        %v662 = vld [vmem:[#allocation2 + $0x82] sm:$0xff]
        %v663 = vld [vmem:[#allocation2 + $0x92] sm:$0xff]
        %v664 = vld [vmem:[#allocation2 + $0x9a] sm:$0xff]
        %v665 = vld [vmem:[#allocation2 + $0xaa] sm:$0xff]
        %v666 = vld [vmem:[#allocation2 + $0xb2] sm:$0xff]
        %v667 = vld [vmem:[#allocation2 + $0xc2] sm:$0xff]
        %v668 = vld [vmem:[#allocation2 + $0xca] sm:$0xff]
        %v669 = vld [vmem:[#allocation2 + $0xda] sm:$0xff]
        %v670 = vld [vmem:[#allocation2 + $0xe2] sm:$0xff]
        %v671 = vld [vmem:[#allocation2 + $0xf2] sm:$0xff]
        %v672 = vld [vmem:[#allocation2 + $0xfa] sm:$0xff]
        %v673 = vld [vmem:[#allocation2 + $0x10a] sm:$0xff]
        %v674 = vld [vmem:[#allocation2 + $0x112] sm:$0xff]
        %v675 = vld [vmem:[#allocation2 + $0x122] sm:$0xff]
        %v676 = vld [vmem:[#allocation2 + $0x12a] sm:$0xff]
        %v677 = vld [vmem:[#allocation2 + $0x13a] sm:$0xff]
        %v678 = vld [vmem:[#allocation2 + $0x142] sm:$0xff]
        %v679 = vld [vmem:[#allocation2 + $0x152] sm:$0xff]
        %v680 = vld [vmem:[#allocation2 + $0x15a] sm:$0xff]
        %v681 = vld [vmem:[#allocation2 + $0x16a] sm:$0xff]
        %v682 = vld [vmem:[#allocation2 + $0x172] sm:$0xff]
        %v684 = vlaneseq
        %v685 = vshrl.u32 %v684, 7
        %v686 = vsub.s32 0, %v685
        %v687 = vrot.slane %v650, %v686
        %v689 = vmul.f32 %v651, %v687
        %v690 = vmul.f32 %v652, %v687
        %v691 = vmul.f32 %v653, %v687
        %v692 = vmul.f32 %v654, %v687
        %v693 = vmul.f32 %v655, %v687
        %v694 = vmul.f32 %v656, %v687
        %v695 = vmul.f32 %v657, %v687
        %v696 = vmul.f32 %v658, %v687
        %v697 = vmul.f32 %v659, %v687
        %v698 = vmul.f32 %v660, %v687
        %v699 = vmul.f32 %v661, %v687
        %v700 = vmul.f32 %v662, %v687
        %v701 = vmul.f32 %v663, %v687
        %v702 = vmul.f32 %v664, %v687
        %v703 = vmul.f32 %v665, %v687
        %v704 = vmul.f32 %v666, %v687
        %v705 = vmul.f32 %v667, %v687
        %v706 = vmul.f32 %v668, %v687
        %v707 = vmul.f32 %v669, %v687
        %v708 = vmul.f32 %v670, %v687
        %v709 = vmul.f32 %v671, %v687
        %v710 = vmul.f32 %v672, %v687
        %v711 = vmul.f32 %v673, %v687
        %v712 = vmul.f32 %v674, %v687
        %v713 = vmul.f32 %v675, %v687
        %v714 = vmul.f32 %v676, %v687
        %v715 = vmul.f32 %v677, %v687
        %v716 = vmul.f32 %v678, %v687
        %v717 = vmul.f32 %v679, %v687
        %v718 = vmul.f32 %v680, %v687
        %v719 = vmul.f32 %v681, %v687
        %v720 = vmul.f32 %v682, %v687
        %v721 = vadd.f32 %v617, %v689
        %v722 = vadd.f32 %v618, %v690
        %v723 = vadd.f32 %v619, %v691
        %v724 = vadd.f32 %v620, %v692
        %v725 = vadd.f32 %v621, %v693
        %v726 = vadd.f32 %v622, %v694
        %v727 = vadd.f32 %v623, %v695
        %v728 = vadd.f32 %v624, %v696
        %v729 = vadd.f32 %v625, %v697
        %v730 = vadd.f32 %v626, %v698
        %v731 = vadd.f32 %v627, %v699
        %v732 = vadd.f32 %v628, %v700
        %v733 = vadd.f32 %v629, %v701
        %v734 = vadd.f32 %v630, %v702
        %v735 = vadd.f32 %v631, %v703
        %v736 = vadd.f32 %v632, %v704
        %v737 = vadd.f32 %v633, %v705
        %v738 = vadd.f32 %v634, %v706
        %v739 = vadd.f32 %v635, %v707
        %v740 = vadd.f32 %v636, %v708
        %v741 = vadd.f32 %v637, %v709
        %v742 = vadd.f32 %v638, %v710
        %v743 = vadd.f32 %v639, %v711
        %v744 = vadd.f32 %v640, %v712
        %v745 = vadd.f32 %v641, %v713
        %v746 = vadd.f32 %v642, %v714
        %v747 = vadd.f32 %v643, %v715
        %v748 = vadd.f32 %v644, %v716
        %v749 = vadd.f32 %v645, %v717
        %v750 = vadd.f32 %v646, %v718
        %v751 = vadd.f32 %v647, %v719
        %v752 = vadd.f32 %v648, %v720
        %s753 = scalar_lea.vmem %s1, 3
        %v754 = vld [vmem:[%s753] sm:$0x1]
        %v755 = vld [vmem:[%s409] sm:$0xff]
        %v756 = vld [vmem:[%s409 + $0x8] sm:$0xff]
        %v757 = vld [vmem:[%s409 + $0x18] sm:$0xff]
        %v758 = vld [vmem:[%s409 + $0x20] sm:$0xff]
        %v759 = vld [vmem:[%s409 + $0x30] sm:$0xff]
        %v760 = vld [vmem:[%s409 + $0x38] sm:$0xff]
        %v761 = vld [vmem:[%s409 + $0x48] sm:$0xff]
        %v762 = vld [vmem:[%s409 + $0x50] sm:$0xff]
        %v763 = vld [vmem:[%s409 + $0x60] sm:$0xff]
        %v764 = vld [vmem:[%s409 + $0x68] sm:$0xff]
        %v765 = vld [vmem:[%s409 + $0x78] sm:$0xff]
        %v766 = vld [vmem:[%s409 + $0x80] sm:$0xff]
        %v767 = vld [vmem:[%s409 + $0x90] sm:$0xff]
        %v768 = vld [vmem:[%s409 + $0x98] sm:$0xff]
        %v769 = vld [vmem:[%s409 + $0xa8] sm:$0xff]
        %v770 = vld [vmem:[%s409 + $0xb0] sm:$0xff]
        %v771 = vld [vmem:[%s409 + $0xc0] sm:$0xff]
        %v772 = vld [vmem:[%s409 + $0xc8] sm:$0xff]
        %v773 = vld [vmem:[%s409 + $0xd8] sm:$0xff]
        %v774 = vld [vmem:[%s409 + $0xe0] sm:$0xff]
        %v775 = vld [vmem:[%s409 + $0xf0] sm:$0xff]
        %v776 = vld [vmem:[%s409 + $0xf8] sm:$0xff]
        %v777 = vld [vmem:[%s409 + $0x108] sm:$0xff]
        %v778 = vld [vmem:[%s409 + $0x110] sm:$0xff]
        %v779 = vld [vmem:[%s409 + $0x120] sm:$0xff]
        %v780 = vld [vmem:[%s409 + $0x128] sm:$0xff]
        %v781 = vld [vmem:[%s409 + $0x138] sm:$0xff]
        %v782 = vld [vmem:[%s409 + $0x140] sm:$0xff]
        %v783 = vld [vmem:[%s409 + $0x150] sm:$0xff]
        %v784 = vld [vmem:[%s409 + $0x158] sm:$0xff]
        %v785 = vld [vmem:[%s409 + $0x168] sm:$0xff]
        %v786 = vld [vmem:[%s409 + $0x170] sm:$0xff]
        %v788 = vlaneseq
        %v789 = vshrl.u32 %v788, 7
        %v790 = vsub.s32 0, %v789
        %v791 = vrot.slane %v754, %v790
        %v793 = vmul.f32 %v755, %v791
        %v794 = vmul.f32 %v756, %v791
        %v795 = vmul.f32 %v757, %v791
        %v796 = vmul.f32 %v758, %v791
        %v797 = vmul.f32 %v759, %v791
        %v798 = vmul.f32 %v760, %v791
        %v799 = vmul.f32 %v761, %v791
        %v800 = vmul.f32 %v762, %v791
        %v801 = vmul.f32 %v763, %v791
        %v802 = vmul.f32 %v764, %v791
        %v803 = vmul.f32 %v765, %v791
        %v804 = vmul.f32 %v766, %v791
        %v805 = vmul.f32 %v767, %v791
        %v806 = vmul.f32 %v768, %v791
        %v807 = vmul.f32 %v769, %v791
        %v808 = vmul.f32 %v770, %v791
        %v809 = vmul.f32 %v771, %v791
        %v810 = vmul.f32 %v772, %v791
        %v811 = vmul.f32 %v773, %v791
        %v812 = vmul.f32 %v774, %v791
        %v813 = vmul.f32 %v775, %v791
        %v814 = vmul.f32 %v776, %v791
        %v815 = vmul.f32 %v777, %v791
        %v816 = vmul.f32 %v778, %v791
        %v817 = vmul.f32 %v779, %v791
        %v818 = vmul.f32 %v780, %v791
        %v819 = vmul.f32 %v781, %v791
        %v820 = vmul.f32 %v782, %v791
        %v821 = vmul.f32 %v783, %v791
        %v822 = vmul.f32 %v784, %v791
        %v823 = vmul.f32 %v785, %v791
        %v824 = vmul.f32 %v786, %v791
        %v825 = vadd.f32 %v721, %v793
        %v826 = vadd.f32 %v722, %v794
        %v827 = vadd.f32 %v723, %v795
        %v828 = vadd.f32 %v724, %v796
        %v829 = vadd.f32 %v725, %v797
        %v830 = vadd.f32 %v726, %v798
        %v831 = vadd.f32 %v727, %v799
        %v832 = vadd.f32 %v728, %v800
        %v833 = vadd.f32 %v729, %v801
        %v834 = vadd.f32 %v730, %v802
        %v835 = vadd.f32 %v731, %v803
        %v836 = vadd.f32 %v732, %v804
        %v837 = vadd.f32 %v733, %v805
        %v838 = vadd.f32 %v734, %v806
        %v839 = vadd.f32 %v735, %v807
        %v840 = vadd.f32 %v736, %v808
        %v841 = vadd.f32 %v737, %v809
        %v842 = vadd.f32 %v738, %v810
        %v843 = vadd.f32 %v739, %v811
        %v844 = vadd.f32 %v740, %v812
        %v845 = vadd.f32 %v741, %v813
        %v846 = vadd.f32 %v742, %v814
        %v847 = vadd.f32 %v743, %v815
        %v848 = vadd.f32 %v744, %v816
        %v849 = vadd.f32 %v745, %v817
        %v850 = vadd.f32 %v746, %v818
        %v851 = vadd.f32 %v747, %v819
        %v852 = vadd.f32 %v748, %v820
        %v853 = vadd.f32 %v749, %v821
        %v854 = vadd.f32 %v750, %v822
        %v855 = vadd.f32 %v751, %v823
        %v856 = vadd.f32 %v752, %v824
        %s857 = scalar_lea.vmem %s1, 4
        %v858 = vld [vmem:[%s857] sm:$0x1]
        %v859 = vld [vmem:[%s409 + $0x1] sm:$0xff]
        %v860 = vld [vmem:[%s409 + $0x9] sm:$0xff]
        %v861 = vld [vmem:[%s409 + $0x19] sm:$0xff]
        %v862 = vld [vmem:[%s409 + $0x21] sm:$0xff]
        %v863 = vld [vmem:[%s409 + $0x31] sm:$0xff]
        %v864 = vld [vmem:[%s409 + $0x39] sm:$0xff]
        %v865 = vld [vmem:[%s409 + $0x49] sm:$0xff]
        %v866 = vld [vmem:[%s409 + $0x51] sm:$0xff]
        %v867 = vld [vmem:[%s409 + $0x61] sm:$0xff]
        %v868 = vld [vmem:[%s409 + $0x69] sm:$0xff]
        %v869 = vld [vmem:[%s409 + $0x79] sm:$0xff]
        %v870 = vld [vmem:[%s409 + $0x81] sm:$0xff]
        %v871 = vld [vmem:[%s409 + $0x91] sm:$0xff]
        %v872 = vld [vmem:[%s409 + $0x99] sm:$0xff]
        %v873 = vld [vmem:[%s409 + $0xa9] sm:$0xff]
        %v874 = vld [vmem:[%s409 + $0xb1] sm:$0xff]
        %v875 = vld [vmem:[%s409 + $0xc1] sm:$0xff]
        %v876 = vld [vmem:[%s409 + $0xc9] sm:$0xff]
        %v877 = vld [vmem:[%s409 + $0xd9] sm:$0xff]
        %v878 = vld [vmem:[%s409 + $0xe1] sm:$0xff]
        %v879 = vld [vmem:[%s409 + $0xf1] sm:$0xff]
        %v880 = vld [vmem:[%s409 + $0xf9] sm:$0xff]
        %v881 = vld [vmem:[%s409 + $0x109] sm:$0xff]
        %v882 = vld [vmem:[%s409 + $0x111] sm:$0xff]
        %v883 = vld [vmem:[%s409 + $0x121] sm:$0xff]
        %v884 = vld [vmem:[%s409 + $0x129] sm:$0xff]
        %v885 = vld [vmem:[%s409 + $0x139] sm:$0xff]
        %v886 = vld [vmem:[%s409 + $0x141] sm:$0xff]
        %v887 = vld [vmem:[%s409 + $0x151] sm:$0xff]
        %v888 = vld [vmem:[%s409 + $0x159] sm:$0xff]
        %v889 = vld [vmem:[%s409 + $0x169] sm:$0xff]
        %v890 = vld [vmem:[%s409 + $0x171] sm:$0xff]
        %v892 = vlaneseq
        %v893 = vshrl.u32 %v892, 7
        %v894 = vsub.s32 0, %v893
        %v895 = vrot.slane %v858, %v894
        %v897 = vmul.f32 %v859, %v895
        %v898 = vmul.f32 %v860, %v895
        %v899 = vmul.f32 %v861, %v895
        %v900 = vmul.f32 %v862, %v895
        %v901 = vmul.f32 %v863, %v895
        %v902 = vmul.f32 %v864, %v895
        %v903 = vmul.f32 %v865, %v895
        %v904 = vmul.f32 %v866, %v895
        %v905 = vmul.f32 %v867, %v895
        %v906 = vmul.f32 %v868, %v895
        %v907 = vmul.f32 %v869, %v895
        %v908 = vmul.f32 %v870, %v895
        %v909 = vmul.f32 %v871, %v895
        %v910 = vmul.f32 %v872, %v895
        %v911 = vmul.f32 %v873, %v895
        %v912 = vmul.f32 %v874, %v895
        %v913 = vmul.f32 %v875, %v895
        %v914 = vmul.f32 %v876, %v895
        %v915 = vmul.f32 %v877, %v895
        %v916 = vmul.f32 %v878, %v895
        %v917 = vmul.f32 %v879, %v895
        %v918 = vmul.f32 %v880, %v895
        %v919 = vmul.f32 %v881, %v895
        %v920 = vmul.f32 %v882, %v895
        %v921 = vmul.f32 %v883, %v895
        %v922 = vmul.f32 %v884, %v895
        %v923 = vmul.f32 %v885, %v895
        %v924 = vmul.f32 %v886, %v895
        %v925 = vmul.f32 %v887, %v895
        %v926 = vmul.f32 %v888, %v895
        %v927 = vmul.f32 %v889, %v895
        %v928 = vmul.f32 %v890, %v895
        %v929 = vadd.f32 %v825, %v897
        %v930 = vadd.f32 %v826, %v898
        %v931 = vadd.f32 %v827, %v899
        %v932 = vadd.f32 %v828, %v900
        %v933 = vadd.f32 %v829, %v901
        %v934 = vadd.f32 %v830, %v902
        %v935 = vadd.f32 %v831, %v903
        %v936 = vadd.f32 %v832, %v904
        %v937 = vadd.f32 %v833, %v905
        %v938 = vadd.f32 %v834, %v906
        %v939 = vadd.f32 %v835, %v907
        %v940 = vadd.f32 %v836, %v908
        %v941 = vadd.f32 %v837, %v909
        %v942 = vadd.f32 %v838, %v910
        %v943 = vadd.f32 %v839, %v911
        %v944 = vadd.f32 %v840, %v912
        %v945 = vadd.f32 %v841, %v913
        %v946 = vadd.f32 %v842, %v914
        %v947 = vadd.f32 %v843, %v915
        %v948 = vadd.f32 %v844, %v916
        %v949 = vadd.f32 %v845, %v917
        %v950 = vadd.f32 %v846, %v918
        %v951 = vadd.f32 %v847, %v919
        %v952 = vadd.f32 %v848, %v920
        %v953 = vadd.f32 %v849, %v921
        %v954 = vadd.f32 %v850, %v922
        %v955 = vadd.f32 %v851, %v923
        %v956 = vadd.f32 %v852, %v924
        %v957 = vadd.f32 %v853, %v925
        %v958 = vadd.f32 %v854, %v926
        %v959 = vadd.f32 %v855, %v927
        %v960 = vadd.f32 %v856, %v928
        %s961 = scalar_lea.vmem %s1, 5
        %v962 = vld [vmem:[%s961] sm:$0x1]
        %v963 = vld [vmem:[%s409 + $0x2] sm:$0xff]
        %v964 = vld [vmem:[%s409 + $0xa] sm:$0xff]
        %v965 = vld [vmem:[%s409 + $0x1a] sm:$0xff]
        %v966 = vld [vmem:[%s409 + $0x22] sm:$0xff]
        %v967 = vld [vmem:[%s409 + $0x32] sm:$0xff]
        %v968 = vld [vmem:[%s409 + $0x3a] sm:$0xff]
        %v969 = vld [vmem:[%s409 + $0x4a] sm:$0xff]
        %v970 = vld [vmem:[%s409 + $0x52] sm:$0xff]
        %v971 = vld [vmem:[%s409 + $0x62] sm:$0xff]
        %v972 = vld [vmem:[%s409 + $0x6a] sm:$0xff]
        %v973 = vld [vmem:[%s409 + $0x7a] sm:$0xff]
        %v974 = vld [vmem:[%s409 + $0x82] sm:$0xff]
        %v975 = vld [vmem:[%s409 + $0x92] sm:$0xff]
        %v976 = vld [vmem:[%s409 + $0x9a] sm:$0xff]
        %v977 = vld [vmem:[%s409 + $0xaa] sm:$0xff]
        %v978 = vld [vmem:[%s409 + $0xb2] sm:$0xff]
        %v979 = vld [vmem:[%s409 + $0xc2] sm:$0xff]
        %v980 = vld [vmem:[%s409 + $0xca] sm:$0xff]
        %v981 = vld [vmem:[%s409 + $0xda] sm:$0xff]
        %v982 = vld [vmem:[%s409 + $0xe2] sm:$0xff]
        %v983 = vld [vmem:[%s409 + $0xf2] sm:$0xff]
        %v984 = vld [vmem:[%s409 + $0xfa] sm:$0xff]
        %v985 = vld [vmem:[%s409 + $0x10a] sm:$0xff]
        %v986 = vld [vmem:[%s409 + $0x112] sm:$0xff]
        %v987 = vld [vmem:[%s409 + $0x122] sm:$0xff]
        %v988 = vld [vmem:[%s409 + $0x12a] sm:$0xff]
        %v989 = vld [vmem:[%s409 + $0x13a] sm:$0xff]
        %v990 = vld [vmem:[%s409 + $0x142] sm:$0xff]
        %v991 = vld [vmem:[%s409 + $0x152] sm:$0xff]
        %v992 = vld [vmem:[%s409 + $0x15a] sm:$0xff]
        %v993 = vld [vmem:[%s409 + $0x16a] sm:$0xff]
        %v994 = vld [vmem:[%s409 + $0x172] sm:$0xff]
        %v996 = vlaneseq
        %v997 = vshrl.u32 %v996, 7
        %v998 = vsub.s32 0, %v997
        %v999 = vrot.slane %v962, %v998
        %v1001 = vmul.f32 %v963, %v999
        %v1002 = vmul.f32 %v964, %v999
        %v1003 = vmul.f32 %v965, %v999
        %v1004 = vmul.f32 %v966, %v999
        %v1005 = vmul.f32 %v967, %v999
        %v1006 = vmul.f32 %v968, %v999
        %v1007 = vmul.f32 %v969, %v999
        %v1008 = vmul.f32 %v970, %v999
        %v1009 = vmul.f32 %v971, %v999
        %v1010 = vmul.f32 %v972, %v999
        %v1011 = vmul.f32 %v973, %v999
        %v1012 = vmul.f32 %v974, %v999
        %v1013 = vmul.f32 %v975, %v999
        %v1014 = vmul.f32 %v976, %v999
        %v1015 = vmul.f32 %v977, %v999
        %v1016 = vmul.f32 %v978, %v999
        %v1017 = vmul.f32 %v979, %v999
        %v1018 = vmul.f32 %v980, %v999
        %v1019 = vmul.f32 %v981, %v999
        %v1020 = vmul.f32 %v982, %v999
        %v1021 = vmul.f32 %v983, %v999
        %v1022 = vmul.f32 %v984, %v999
        %v1023 = vmul.f32 %v985, %v999
        %v1024 = vmul.f32 %v986, %v999
        %v1025 = vmul.f32 %v987, %v999
        %v1026 = vmul.f32 %v988, %v999
        %v1027 = vmul.f32 %v989, %v999
        %v1028 = vmul.f32 %v990, %v999
        %v1029 = vmul.f32 %v991, %v999
        %v1030 = vmul.f32 %v992, %v999
        %v1031 = vmul.f32 %v993, %v999
        %v1032 = vmul.f32 %v994, %v999
        %v1033 = vadd.f32 %v929, %v1001
        %v1034 = vadd.f32 %v930, %v1002
        %v1035 = vadd.f32 %v931, %v1003
        %v1036 = vadd.f32 %v932, %v1004
        %v1037 = vadd.f32 %v933, %v1005
        %v1038 = vadd.f32 %v934, %v1006
        %v1039 = vadd.f32 %v935, %v1007
        %v1040 = vadd.f32 %v936, %v1008
        %v1041 = vadd.f32 %v937, %v1009
        %v1042 = vadd.f32 %v938, %v1010
        %v1043 = vadd.f32 %v939, %v1011
        %v1044 = vadd.f32 %v940, %v1012
        %v1045 = vadd.f32 %v941, %v1013
        %v1046 = vadd.f32 %v942, %v1014
        %v1047 = vadd.f32 %v943, %v1015
        %v1048 = vadd.f32 %v944, %v1016
        %v1049 = vadd.f32 %v945, %v1017
        %v1050 = vadd.f32 %v946, %v1018
        %v1051 = vadd.f32 %v947, %v1019
        %v1052 = vadd.f32 %v948, %v1020
        %v1053 = vadd.f32 %v949, %v1021
        %v1054 = vadd.f32 %v950, %v1022
        %v1055 = vadd.f32 %v951, %v1023
        %v1056 = vadd.f32 %v952, %v1024
        %v1057 = vadd.f32 %v953, %v1025
        %v1058 = vadd.f32 %v954, %v1026
        %v1059 = vadd.f32 %v955, %v1027
        %v1060 = vadd.f32 %v956, %v1028
        %v1061 = vadd.f32 %v957, %v1029
        %v1062 = vadd.f32 %v958, %v1030
        %v1063 = vadd.f32 %v959, %v1031
        %v1064 = vadd.f32 %v960, %v1032
        %s1065 = scalar_lea.vmem %s1, 6
        %v1066 = vld [vmem:[%s1065] sm:$0x1]
        %s1067 = scalar_lea.vmem [#allocation2], 48
        %v1068 = vld [vmem:[%s1067] sm:$0xff]
        %v1069 = vld [vmem:[%s1067 + $0x8] sm:$0xff]
        %v1070 = vld [vmem:[%s1067 + $0x18] sm:$0xff]
        %v1071 = vld [vmem:[%s1067 + $0x20] sm:$0xff]
        %v1072 = vld [vmem:[%s1067 + $0x30] sm:$0xff]
        %v1073 = vld [vmem:[%s1067 + $0x38] sm:$0xff]
        %v1074 = vld [vmem:[%s1067 + $0x48] sm:$0xff]
        %v1075 = vld [vmem:[%s1067 + $0x50] sm:$0xff]
        %v1076 = vld [vmem:[%s1067 + $0x60] sm:$0xff]
        %v1077 = vld [vmem:[%s1067 + $0x68] sm:$0xff]
        %v1078 = vld [vmem:[%s1067 + $0x78] sm:$0xff]
        %v1079 = vld [vmem:[%s1067 + $0x80] sm:$0xff]
        %v1080 = vld [vmem:[%s1067 + $0x90] sm:$0xff]
        %v1081 = vld [vmem:[%s1067 + $0x98] sm:$0xff]
        %v1082 = vld [vmem:[%s1067 + $0xa8] sm:$0xff]
        %v1083 = vld [vmem:[%s1067 + $0xb0] sm:$0xff]
        %v1084 = vld [vmem:[%s1067 + $0xc0] sm:$0xff]
        %v1085 = vld [vmem:[%s1067 + $0xc8] sm:$0xff]
        %v1086 = vld [vmem:[%s1067 + $0xd8] sm:$0xff]
        %v1087 = vld [vmem:[%s1067 + $0xe0] sm:$0xff]
        %v1088 = vld [vmem:[%s1067 + $0xf0] sm:$0xff]
        %v1089 = vld [vmem:[%s1067 + $0xf8] sm:$0xff]
        %v1090 = vld [vmem:[%s1067 + $0x108] sm:$0xff]
        %v1091 = vld [vmem:[%s1067 + $0x110] sm:$0xff]
        %v1092 = vld [vmem:[%s1067 + $0x120] sm:$0xff]
        %v1093 = vld [vmem:[%s1067 + $0x128] sm:$0xff]
        %v1094 = vld [vmem:[%s1067 + $0x138] sm:$0xff]
        %v1095 = vld [vmem:[%s1067 + $0x140] sm:$0xff]
        %v1096 = vld [vmem:[%s1067 + $0x150] sm:$0xff]
        %v1097 = vld [vmem:[%s1067 + $0x158] sm:$0xff]
        %v1098 = vld [vmem:[%s1067 + $0x168] sm:$0xff]
        %v1099 = vld [vmem:[%s1067 + $0x170] sm:$0xff]
        %v1101 = vlaneseq
        %v1102 = vshrl.u32 %v1101, 7
        %v1103 = vsub.s32 0, %v1102
        %v1104 = vrot.slane %v1066, %v1103
        %v1106 = vmul.f32 %v1068, %v1104
        %v1107 = vmul.f32 %v1069, %v1104
        %v1108 = vmul.f32 %v1070, %v1104
        %v1109 = vmul.f32 %v1071, %v1104
        %v1110 = vmul.f32 %v1072, %v1104
        %v1111 = vmul.f32 %v1073, %v1104
        %v1112 = vmul.f32 %v1074, %v1104
        %v1113 = vmul.f32 %v1075, %v1104
        %v1114 = vmul.f32 %v1076, %v1104
        %v1115 = vmul.f32 %v1077, %v1104
        %v1116 = vmul.f32 %v1078, %v1104
        %v1117 = vmul.f32 %v1079, %v1104
        %v1118 = vmul.f32 %v1080, %v1104
        %v1119 = vmul.f32 %v1081, %v1104
        %v1120 = vmul.f32 %v1082, %v1104
        %v1121 = vmul.f32 %v1083, %v1104
        %v1122 = vmul.f32 %v1084, %v1104
        %v1123 = vmul.f32 %v1085, %v1104
        %v1124 = vmul.f32 %v1086, %v1104
        %v1125 = vmul.f32 %v1087, %v1104
        %v1126 = vmul.f32 %v1088, %v1104
        %v1127 = vmul.f32 %v1089, %v1104
        %v1128 = vmul.f32 %v1090, %v1104
        %v1129 = vmul.f32 %v1091, %v1104
        %v1130 = vmul.f32 %v1092, %v1104
        %v1131 = vmul.f32 %v1093, %v1104
        %v1132 = vmul.f32 %v1094, %v1104
        %v1133 = vmul.f32 %v1095, %v1104
        %v1134 = vmul.f32 %v1096, %v1104
        %v1135 = vmul.f32 %v1097, %v1104
        %v1136 = vmul.f32 %v1098, %v1104
        %v1137 = vmul.f32 %v1099, %v1104
        %v1138 = vadd.f32 %v1033, %v1106
        %v1139 = vadd.f32 %v1034, %v1107
        %v1140 = vadd.f32 %v1035, %v1108
        %v1141 = vadd.f32 %v1036, %v1109
        %v1142 = vadd.f32 %v1037, %v1110
        %v1143 = vadd.f32 %v1038, %v1111
        %v1144 = vadd.f32 %v1039, %v1112
        %v1145 = vadd.f32 %v1040, %v1113
        %v1146 = vadd.f32 %v1041, %v1114
        %v1147 = vadd.f32 %v1042, %v1115
        %v1148 = vadd.f32 %v1043, %v1116
        %v1149 = vadd.f32 %v1044, %v1117
        %v1150 = vadd.f32 %v1045, %v1118
        %v1151 = vadd.f32 %v1046, %v1119
        %v1152 = vadd.f32 %v1047, %v1120
        %v1153 = vadd.f32 %v1048, %v1121
        %v1154 = vadd.f32 %v1049, %v1122
        %v1155 = vadd.f32 %v1050, %v1123
        %v1156 = vadd.f32 %v1051, %v1124
        %v1157 = vadd.f32 %v1052, %v1125
        %v1158 = vadd.f32 %v1053, %v1126
        %v1159 = vadd.f32 %v1054, %v1127
        %v1160 = vadd.f32 %v1055, %v1128
        %v1161 = vadd.f32 %v1056, %v1129
        %v1162 = vadd.f32 %v1057, %v1130
        %v1163 = vadd.f32 %v1058, %v1131
        %v1164 = vadd.f32 %v1059, %v1132
        %v1165 = vadd.f32 %v1060, %v1133
        %v1166 = vadd.f32 %v1061, %v1134
        %v1167 = vadd.f32 %v1062, %v1135
        %v1168 = vadd.f32 %v1063, %v1136
        %v1169 = vadd.f32 %v1064, %v1137
        %s1170 = scalar_lea.vmem %s1, 7
        %v1171 = vld [vmem:[%s1170] sm:$0x1]
        %v1172 = vld [vmem:[%s1067 + $0x1] sm:$0xff]
        %v1173 = vld [vmem:[%s1067 + $0x9] sm:$0xff]
        %v1174 = vld [vmem:[%s1067 + $0x19] sm:$0xff]
        %v1175 = vld [vmem:[%s1067 + $0x21] sm:$0xff]
        %v1176 = vld [vmem:[%s1067 + $0x31] sm:$0xff]
        %v1177 = vld [vmem:[%s1067 + $0x39] sm:$0xff]
        %v1178 = vld [vmem:[%s1067 + $0x49] sm:$0xff]
        %v1179 = vld [vmem:[%s1067 + $0x51] sm:$0xff]
        %v1180 = vld [vmem:[%s1067 + $0x61] sm:$0xff]
        %v1181 = vld [vmem:[%s1067 + $0x69] sm:$0xff]
        %v1182 = vld [vmem:[%s1067 + $0x79] sm:$0xff]
        %v1183 = vld [vmem:[%s1067 + $0x81] sm:$0xff]
        %v1184 = vld [vmem:[%s1067 + $0x91] sm:$0xff]
        %v1185 = vld [vmem:[%s1067 + $0x99] sm:$0xff]
        %v1186 = vld [vmem:[%s1067 + $0xa9] sm:$0xff]
        %v1187 = vld [vmem:[%s1067 + $0xb1] sm:$0xff]
        %v1188 = vld [vmem:[%s1067 + $0xc1] sm:$0xff]
        %v1189 = vld [vmem:[%s1067 + $0xc9] sm:$0xff]
        %v1190 = vld [vmem:[%s1067 + $0xd9] sm:$0xff]
        %v1191 = vld [vmem:[%s1067 + $0xe1] sm:$0xff]
        %v1192 = vld [vmem:[%s1067 + $0xf1] sm:$0xff]
        %v1193 = vld [vmem:[%s1067 + $0xf9] sm:$0xff]
        %v1194 = vld [vmem:[%s1067 + $0x109] sm:$0xff]
        %v1195 = vld [vmem:[%s1067 + $0x111] sm:$0xff]
        %v1196 = vld [vmem:[%s1067 + $0x121] sm:$0xff]
        %v1197 = vld [vmem:[%s1067 + $0x129] sm:$0xff]
        %v1198 = vld [vmem:[%s1067 + $0x139] sm:$0xff]
        %v1199 = vld [vmem:[%s1067 + $0x141] sm:$0xff]
        %v1200 = vld [vmem:[%s1067 + $0x151] sm:$0xff]
        %v1201 = vld [vmem:[%s1067 + $0x159] sm:$0xff]
        %v1202 = vld [vmem:[%s1067 + $0x169] sm:$0xff]
        %v1203 = vld [vmem:[%s1067 + $0x171] sm:$0xff]
        %v1205 = vlaneseq
        %v1206 = vshrl.u32 %v1205, 7
        %v1207 = vsub.s32 0, %v1206
        %v1208 = vrot.slane %v1171, %v1207
        %v1210 = vmul.f32 %v1172, %v1208
        %v1211 = vmul.f32 %v1173, %v1208
        %v1212 = vmul.f32 %v1174, %v1208
        %v1213 = vmul.f32 %v1175, %v1208
        %v1214 = vmul.f32 %v1176, %v1208
        %v1215 = vmul.f32 %v1177, %v1208
        %v1216 = vmul.f32 %v1178, %v1208
        %v1217 = vmul.f32 %v1179, %v1208
        %v1218 = vmul.f32 %v1180, %v1208
        %v1219 = vmul.f32 %v1181, %v1208
        %v1220 = vmul.f32 %v1182, %v1208
        %v1221 = vmul.f32 %v1183, %v1208
        %v1222 = vmul.f32 %v1184, %v1208
        %v1223 = vmul.f32 %v1185, %v1208
        %v1224 = vmul.f32 %v1186, %v1208
        %v1225 = vmul.f32 %v1187, %v1208
        %v1226 = vmul.f32 %v1188, %v1208
        %v1227 = vmul.f32 %v1189, %v1208
        %v1228 = vmul.f32 %v1190, %v1208
        %v1229 = vmul.f32 %v1191, %v1208
        %v1230 = vmul.f32 %v1192, %v1208
        %v1231 = vmul.f32 %v1193, %v1208
        %v1232 = vmul.f32 %v1194, %v1208
        %v1233 = vmul.f32 %v1195, %v1208
        %v1234 = vmul.f32 %v1196, %v1208
        %v1235 = vmul.f32 %v1197, %v1208
        %v1236 = vmul.f32 %v1198, %v1208
        %v1237 = vmul.f32 %v1199, %v1208
        %v1238 = vmul.f32 %v1200, %v1208
        %v1239 = vmul.f32 %v1201, %v1208
        %v1240 = vmul.f32 %v1202, %v1208
        %v1241 = vmul.f32 %v1203, %v1208
        %v1242 = vadd.f32 %v1138, %v1210
        %v1243 = vadd.f32 %v1139, %v1211
        %v1244 = vadd.f32 %v1140, %v1212
        %v1245 = vadd.f32 %v1141, %v1213
        %v1246 = vadd.f32 %v1142, %v1214
        %v1247 = vadd.f32 %v1143, %v1215
        %v1248 = vadd.f32 %v1144, %v1216
        %v1249 = vadd.f32 %v1145, %v1217
        %v1250 = vadd.f32 %v1146, %v1218
        %v1251 = vadd.f32 %v1147, %v1219
        %v1252 = vadd.f32 %v1148, %v1220
        %v1253 = vadd.f32 %v1149, %v1221
        %v1254 = vadd.f32 %v1150, %v1222
        %v1255 = vadd.f32 %v1151, %v1223
        %v1256 = vadd.f32 %v1152, %v1224
        %v1257 = vadd.f32 %v1153, %v1225
        %v1258 = vadd.f32 %v1154, %v1226
        %v1259 = vadd.f32 %v1155, %v1227
        %v1260 = vadd.f32 %v1156, %v1228
        %v1261 = vadd.f32 %v1157, %v1229
        %v1262 = vadd.f32 %v1158, %v1230
        %v1263 = vadd.f32 %v1159, %v1231
        %v1264 = vadd.f32 %v1160, %v1232
        %v1265 = vadd.f32 %v1161, %v1233
        %v1266 = vadd.f32 %v1162, %v1234
        %v1267 = vadd.f32 %v1163, %v1235
        %v1268 = vadd.f32 %v1164, %v1236
        %v1269 = vadd.f32 %v1165, %v1237
        %v1270 = vadd.f32 %v1166, %v1238
        %v1271 = vadd.f32 %v1167, %v1239
        %v1272 = vadd.f32 %v1168, %v1240
        %v1273 = vadd.f32 %v1169, %v1241
        %s1274 = scalar_lea.vmem %s1, 8
        %v1275 = vld [vmem:[%s1274] sm:$0x1]
        %v1276 = vld [vmem:[%s1067 + $0x2] sm:$0xff]
        %v1277 = vld [vmem:[%s1067 + $0xa] sm:$0xff]
        %v1278 = vld [vmem:[%s1067 + $0x1a] sm:$0xff]
        %v1279 = vld [vmem:[%s1067 + $0x22] sm:$0xff]
        %v1280 = vld [vmem:[%s1067 + $0x32] sm:$0xff]
        %v1281 = vld [vmem:[%s1067 + $0x3a] sm:$0xff]
        %v1282 = vld [vmem:[%s1067 + $0x4a] sm:$0xff]
        %v1283 = vld [vmem:[%s1067 + $0x52] sm:$0xff]
        %v1284 = vld [vmem:[%s1067 + $0x62] sm:$0xff]
        %v1285 = vld [vmem:[%s1067 + $0x6a] sm:$0xff]
        %v1286 = vld [vmem:[%s1067 + $0x7a] sm:$0xff]
        %v1287 = vld [vmem:[%s1067 + $0x82] sm:$0xff]
        %v1288 = vld [vmem:[%s1067 + $0x92] sm:$0xff]
        %v1289 = vld [vmem:[%s1067 + $0x9a] sm:$0xff]
        %v1290 = vld [vmem:[%s1067 + $0xaa] sm:$0xff]
        %v1291 = vld [vmem:[%s1067 + $0xb2] sm:$0xff]
        %v1292 = vld [vmem:[%s1067 + $0xc2] sm:$0xff]
        %v1293 = vld [vmem:[%s1067 + $0xca] sm:$0xff]
        %v1294 = vld [vmem:[%s1067 + $0xda] sm:$0xff]
        %v1295 = vld [vmem:[%s1067 + $0xe2] sm:$0xff]
        %v1296 = vld [vmem:[%s1067 + $0xf2] sm:$0xff]
        %v1297 = vld [vmem:[%s1067 + $0xfa] sm:$0xff]
        %v1298 = vld [vmem:[%s1067 + $0x10a] sm:$0xff]
        %v1299 = vld [vmem:[%s1067 + $0x112] sm:$0xff]
        %v1300 = vld [vmem:[%s1067 + $0x122] sm:$0xff]
        %v1301 = vld [vmem:[%s1067 + $0x12a] sm:$0xff]
        %v1302 = vld [vmem:[%s1067 + $0x13a] sm:$0xff]
        %v1303 = vld [vmem:[%s1067 + $0x142] sm:$0xff]
        %v1304 = vld [vmem:[%s1067 + $0x152] sm:$0xff]
        %v1305 = vld [vmem:[%s1067 + $0x15a] sm:$0xff]
        %v1306 = vld [vmem:[%s1067 + $0x16a] sm:$0xff]
        %v1307 = vld [vmem:[%s1067 + $0x172] sm:$0xff]
        %v1309 = vlaneseq
        %v1310 = vshrl.u32 %v1309, 7
        %v1311 = vsub.s32 0, %v1310
        %v1312 = vrot.slane %v1275, %v1311
        %v1314 = vmul.f32 %v1276, %v1312
        %v1315 = vmul.f32 %v1277, %v1312
        %v1316 = vmul.f32 %v1278, %v1312
        %v1317 = vmul.f32 %v1279, %v1312
        %v1318 = vmul.f32 %v1280, %v1312
        %v1319 = vmul.f32 %v1281, %v1312
        %v1320 = vmul.f32 %v1282, %v1312
        %v1321 = vmul.f32 %v1283, %v1312
        %v1322 = vmul.f32 %v1284, %v1312
        %v1323 = vmul.f32 %v1285, %v1312
        %v1324 = vmul.f32 %v1286, %v1312
        %v1325 = vmul.f32 %v1287, %v1312
        %v1326 = vmul.f32 %v1288, %v1312
        %v1327 = vmul.f32 %v1289, %v1312
        %v1328 = vmul.f32 %v1290, %v1312
        %v1329 = vmul.f32 %v1291, %v1312
        %v1330 = vmul.f32 %v1292, %v1312
        %v1331 = vmul.f32 %v1293, %v1312
        %v1332 = vmul.f32 %v1294, %v1312
        %v1333 = vmul.f32 %v1295, %v1312
        %v1334 = vmul.f32 %v1296, %v1312
        %v1335 = vmul.f32 %v1297, %v1312
        %v1336 = vmul.f32 %v1298, %v1312
        %v1337 = vmul.f32 %v1299, %v1312
        %v1338 = vmul.f32 %v1300, %v1312
        %v1339 = vmul.f32 %v1301, %v1312
        %v1340 = vmul.f32 %v1302, %v1312
        %v1341 = vmul.f32 %v1303, %v1312
        %v1342 = vmul.f32 %v1304, %v1312
        %v1343 = vmul.f32 %v1305, %v1312
        %v1344 = vmul.f32 %v1306, %v1312
        %v1345 = vmul.f32 %v1307, %v1312
        %v1346 = vadd.f32 %v1242, %v1314
        %v1347 = vadd.f32 %v1243, %v1315
        %v1348 = vadd.f32 %v1244, %v1316
        %v1349 = vadd.f32 %v1245, %v1317
        %v1350 = vadd.f32 %v1246, %v1318
        %v1351 = vadd.f32 %v1247, %v1319
        %v1352 = vadd.f32 %v1248, %v1320
        %v1353 = vadd.f32 %v1249, %v1321
        %v1354 = vadd.f32 %v1250, %v1322
        %v1355 = vadd.f32 %v1251, %v1323
        %v1356 = vadd.f32 %v1252, %v1324
        %v1357 = vadd.f32 %v1253, %v1325
        %v1358 = vadd.f32 %v1254, %v1326
        %v1359 = vadd.f32 %v1255, %v1327
        %v1360 = vadd.f32 %v1256, %v1328
        %v1361 = vadd.f32 %v1257, %v1329
        %v1362 = vadd.f32 %v1258, %v1330
        %v1363 = vadd.f32 %v1259, %v1331
        %v1364 = vadd.f32 %v1260, %v1332
        %v1365 = vadd.f32 %v1261, %v1333
        %v1366 = vadd.f32 %v1262, %v1334
        %v1367 = vadd.f32 %v1263, %v1335
        %v1368 = vadd.f32 %v1264, %v1336
        %v1369 = vadd.f32 %v1265, %v1337
        %v1370 = vadd.f32 %v1266, %v1338
        %v1371 = vadd.f32 %v1267, %v1339
        %v1372 = vadd.f32 %v1268, %v1340
        %v1373 = vadd.f32 %v1269, %v1341
        %v1374 = vadd.f32 %v1270, %v1342
        %v1375 = vadd.f32 %v1271, %v1343
        %v1376 = vadd.f32 %v1272, %v1344
        %v1377 = vadd.f32 %v1273, %v1345
        %v1378 = vld [vmem:[%s2] sm:$0x1]
        %v1380 = vlaneseq
        %v1381 = vshrl.u32 %v1380, 7
        %v1382 = vsub.s32 0, %v1381
        %v1383 = vrot.slane %v1378, %v1382
        %v1385 = vadd.f32 %v1346, %v1383
        %v1386 = vadd.f32 %v1347, %v1383
        %v1387 = vadd.f32 %v1348, %v1383
        %v1388 = vadd.f32 %v1349, %v1383
        %v1389 = vadd.f32 %v1350, %v1383
        %v1390 = vadd.f32 %v1351, %v1383
        %v1391 = vadd.f32 %v1352, %v1383
        %v1392 = vadd.f32 %v1353, %v1383
        %v1393 = vadd.f32 %v1354, %v1383
        %v1394 = vadd.f32 %v1355, %v1383
        %v1395 = vadd.f32 %v1356, %v1383
        %v1396 = vadd.f32 %v1357, %v1383
        %v1397 = vadd.f32 %v1358, %v1383
        %v1398 = vadd.f32 %v1359, %v1383
        %v1399 = vadd.f32 %v1360, %v1383
        %v1400 = vadd.f32 %v1361, %v1383
        %v1401 = vadd.f32 %v1362, %v1383
        %v1402 = vadd.f32 %v1363, %v1383
        %v1403 = vadd.f32 %v1364, %v1383
        %v1404 = vadd.f32 %v1365, %v1383
        %v1405 = vadd.f32 %v1366, %v1383
        %v1406 = vadd.f32 %v1367, %v1383
        %v1407 = vadd.f32 %v1368, %v1383
        %v1408 = vadd.f32 %v1369, %v1383
        %v1409 = vadd.f32 %v1370, %v1383
        %v1410 = vadd.f32 %v1371, %v1383
        %v1411 = vadd.f32 %v1372, %v1383
        %v1412 = vadd.f32 %v1373, %v1383
        %v1413 = vadd.f32 %v1374, %v1383
        %v1414 = vadd.f32 %v1375, %v1383
        %v1415 = vadd.f32 %v1376, %v1383
        %v1416 = vadd.f32 %v1377, %v1383
        %v1417 = vld [vmem:[%s3] sm:$0xff]
        %v1418 = vld [vmem:[%s4] sm:$0x1]
        %v1420 = vlaneseq
        %v1421 = vshrl.u32 %v1420, 7
        %v1422 = vsub.s32 0, %v1421
        %v1423 = vrot.slane %v1418, %v1422
        %v1426 = vsel %vm331, %v1385, 0
        %v1429 = vsel %vm331, %v1386, 0
        %v1432 = vsel %vm331, %v1387, 0
        %v1435 = vsel %vm331, %v1388, 0
        %v1438 = vsel %vm331, %v1389, 0
        %v1441 = vsel %vm331, %v1390, 0
        %v1444 = vsel %vm331, %v1391, 0
        %v1447 = vsel %vm331, %v1392, 0
        %v1450 = vsel %vm331, %v1393, 0
        %v1453 = vsel %vm331, %v1394, 0
        %v1456 = vsel %vm331, %v1395, 0
        %v1459 = vsel %vm331, %v1396, 0
        %v1462 = vsel %vm331, %v1397, 0
        %v1465 = vsel %vm331, %v1398, 0
        %v1468 = vsel %vm331, %v1399, 0
        %v1471 = vsel %vm331, %v1400, 0
        %v1474 = vsel %vm331, %v1401, 0
        %v1477 = vsel %vm331, %v1402, 0
        %v1480 = vsel %vm331, %v1403, 0
        %v1483 = vsel %vm331, %v1404, 0
        %v1486 = vsel %vm331, %v1405, 0
        %v1489 = vsel %vm331, %v1406, 0
        %v1492 = vsel %vm331, %v1407, 0
        %v1495 = vsel %vm331, %v1408, 0
        %v1498 = vsel %vm331, %v1409, 0
        %v1501 = vsel %vm331, %v1410, 0
        %v1504 = vsel %vm331, %v1411, 0
        %v1507 = vsel %vm331, %v1412, 0
        %v1510 = vsel %vm331, %v1413, 0
        %v1513 = vsel %vm331, %v1414, 0
        %v1516 = vsel %vm331, %v1415, 0
        %v1519 = vsel %vm331, %v1416, 0
        %1521 = vmatprep.subr.mxu0 0.0
        %1522 = vmatpush1.msra.mxu0 %v1417
        %1523 = vmatprep.subr.mxu0 0.0
        %1524 = vmatpush1.msra.mxu0 0.0
        %1525 = vmatprep.subr.mxu0 0.0
        %1526 = vmatpush1.msra.mxu0 0.0
        %1527 = vmatprep.subr.mxu0 0.0
        %1528 = vmatpush1.msra.mxu0 0.0
        %1529 = vmatprep.subr.mxu0 0.0
        %1530 = vmatpush1.msra.mxu0 0.0
        %1531 = vmatprep.subr.mxu0 0.0
        %1532 = vmatpush1.msra.mxu0 0.0
        %1533 = vmatprep.subr.mxu0 0.0
        %1534 = vmatpush1.msra.mxu0 0.0
        %1535 = vmatprep.subr.mxu0 0.0
        %1536 = vmatpush1.msra.mxu0 0.0
        %1537 = vmatprep.subr.mxu0 0.0
        %1538 = vmatpush1.msra.mxu0 0.0
        %1539 = vmatprep.subr.mxu0 0.0
        %1540 = vmatpush1.msra.mxu0 0.0
        %1541 = vmatprep.subr.mxu0 0.0
        %1542 = vmatpush1.msra.mxu0 0.0
        %1543 = vmatprep.subr.mxu0 0.0
        %1544 = vmatpush1.msra.mxu0 0.0
        %1545 = vmatprep.subr.mxu0 0.0
        %1546 = vmatpush1.msra.mxu0 0.0
        %1547 = vmatprep.subr.mxu0 0.0
        %1548 = vmatpush1.msra.mxu0 0.0
        %1549 = vmatprep.subr.mxu0 0.0
        %1550 = vmatpush1.msra.mxu0 0.0
        %1551 = vmatprep.subr.mxu0 0.0
        %1552 = vmatpush1.msra.mxu0 0.0
        %1553 = vmatprep.subr.mxu0 0.0
        %1554 = vmatpush1.msra.mxu0 0.0
        %1555 = vmatprep.subr.mxu0 0.0
        %1556 = vmatpush1.msra.mxu0 0.0
        %1557 = vmatprep.subr.mxu0 0.0
        %1558 = vmatpush1.msra.mxu0 0.0
        %1559 = vmatprep.subr.mxu0 0.0
        %1560 = vmatpush1.msra.mxu0 0.0
        %1561 = vmatprep.subr.mxu0 0.0
        %1562 = vmatpush1.msra.mxu0 0.0
        %1563 = vmatprep.subr.mxu0 0.0
        %1564 = vmatpush1.msra.mxu0 0.0
        %1565 = vmatprep.subr.mxu0 0.0
        %1566 = vmatpush1.msra.mxu0 0.0
        %1567 = vmatprep.subr.mxu0 0.0
        %1568 = vmatpush1.msra.mxu0 0.0
        %1569 = vmatprep.subr.mxu0 0.0
        %1570 = vmatpush1.msra.mxu0 0.0
        %1571 = vmatprep.subr.mxu0 0.0
        %1572 = vmatpush1.msra.mxu0 0.0
        %1573 = vmatprep.subr.mxu0 0.0
        %1574 = vmatpush1.msra.mxu0 0.0
        %1575 = vmatprep.subr.mxu0 0.0
        %1576 = vmatpush1.msra.mxu0 0.0
        %1577 = vmatprep.subr.mxu0 0.0
        %1578 = vmatpush1.msra.mxu0 0.0
        %1579 = vmatprep.subr.mxu0 0.0
        %1580 = vmatpush1.msra.mxu0 0.0
        %1581 = vmatprep.subr.mxu0 0.0
        %1582 = vmatpush1.msra.mxu0 0.0
        %1583 = vmatprep.subr.mxu0 0.0
        %1584 = vmatpush1.msra.mxu0 0.0
        %1585 = vmatprep.mubr.f32.mxu0 0.0
        %1586 = vmatmul.mubr.f32.gmra.mrb[0].mxu0 %v1426
        %v1587 = vpop.f32.mrb[0].mxu0
        %v1588 = vadd.f32 %v1423, %v1587
        %v1589 = vpop.f32.mrb[0].mxu0
        %1590 = vmatprep.mubr.f32.mxu0 0.0
        %1591 = vmatmul.mubr.f32.gmra.mrb[0].mxu0 %v1429
        %v1592 = vpop.f32.mrb[0].mxu0
        %v1593 = vadd.f32 %v1423, %v1592
        %v1594 = vpop.f32.mrb[0].mxu0
        %1595 = vmatprep.mubr.f32.mxu0 0.0
        %1596 = vmatmul.mubr.f32.gmra.mrb[0].mxu0 %v1432
        %v1597 = vpop.f32.mrb[0].mxu0
        %v1598 = vadd.f32 %v1423, %v1597
        %v1599 = vpop.f32.mrb[0].mxu0
        %1600 = vmatprep.mubr.f32.mxu0 0.0
        %1601 = vmatmul.mubr.f32.gmra.mrb[0].mxu0 %v1435
        %v1602 = vpop.f32.mrb[0].mxu0
        %v1603 = vadd.f32 %v1423, %v1602
        %v1604 = vpop.f32.mrb[0].mxu0
        %1605 = vmatprep.mubr.f32.mxu0 0.0
        %1606 = vmatmul.mubr.f32.gmra.mrb[0].mxu0 %v1438
        %v1607 = vpop.f32.mrb[0].mxu0
        %v1608 = vadd.f32 %v1423, %v1607
        %v1609 = vpop.f32.mrb[0].mxu0
        %1610 = vmatprep.mubr.f32.mxu0 0.0
        %1611 = vmatmul.mubr.f32.gmra.mrb[0].mxu0 %v1441
        %v1612 = vpop.f32.mrb[0].mxu0
        %v1613 = vadd.f32 %v1423, %v1612
        %v1614 = vpop.f32.mrb[0].mxu0
        %1615 = vmatprep.mubr.f32.mxu0 0.0
        %1616 = vmatmul.mubr.f32.gmra.mrb[0].mxu0 %v1444
        %v1617 = vpop.f32.mrb[0].mxu0
        %v1618 = vadd.f32 %v1423, %v1617
        %v1619 = vpop.f32.mrb[0].mxu0
        %1620 = vmatprep.mubr.f32.mxu0 0.0
        %1621 = vmatmul.mubr.f32.gmra.mrb[0].mxu0 %v1447
        %v1622 = vpop.f32.mrb[0].mxu0
        %v1623 = vadd.f32 %v1423, %v1622
        %v1624 = vpop.f32.mrb[0].mxu0
        %1625 = vmatprep.mubr.f32.mxu0 0.0
        %1626 = vmatmul.mubr.f32.gmra.mrb[0].mxu0 %v1450
        %v1627 = vpop.f32.mrb[0].mxu0
        %v1628 = vadd.f32 %v1423, %v1627
        %v1629 = vpop.f32.mrb[0].mxu0
        %1630 = vmatprep.mubr.f32.mxu0 0.0
        %1631 = vmatmul.mubr.f32.gmra.mrb[0].mxu0 %v1453
        %v1632 = vpop.f32.mrb[0].mxu0
        %v1633 = vadd.f32 %v1423, %v1632
        %v1634 = vpop.f32.mrb[0].mxu0
        %1635 = vmatprep.mubr.f32.mxu0 0.0
        %1636 = vmatmul.mubr.f32.gmra.mrb[0].mxu0 %v1456
        %v1637 = vpop.f32.mrb[0].mxu0
        %v1638 = vadd.f32 %v1423, %v1637
        %v1639 = vpop.f32.mrb[0].mxu0
        %1640 = vmatprep.mubr.f32.mxu0 0.0
        %1641 = vmatmul.mubr.f32.gmra.mrb[0].mxu0 %v1459
        %v1642 = vpop.f32.mrb[0].mxu0
        %v1643 = vadd.f32 %v1423, %v1642
        %v1644 = vpop.f32.mrb[0].mxu0
        %1645 = vmatprep.mubr.f32.mxu0 0.0
        %1646 = vmatmul.mubr.f32.gmra.mrb[0].mxu0 %v1462
        %v1647 = vpop.f32.mrb[0].mxu0
        %v1648 = vadd.f32 %v1423, %v1647
        %v1649 = vpop.f32.mrb[0].mxu0
        %1650 = vmatprep.mubr.f32.mxu0 0.0
        %1651 = vmatmul.mubr.f32.gmra.mrb[0].mxu0 %v1465
        %v1652 = vpop.f32.mrb[0].mxu0
        %v1653 = vadd.f32 %v1423, %v1652
        %v1654 = vpop.f32.mrb[0].mxu0
        %1655 = vmatprep.mubr.f32.mxu0 0.0
        %1656 = vmatmul.mubr.f32.gmra.mrb[0].mxu0 %v1468
        %v1657 = vpop.f32.mrb[0].mxu0
        %v1658 = vadd.f32 %v1423, %v1657
        %v1659 = vpop.f32.mrb[0].mxu0
        %1660 = vmatprep.mubr.f32.mxu0 0.0
        %1661 = vmatmul.mubr.f32.gmra.mrb[0].mxu0 %v1471
        %v1662 = vpop.f32.mrb[0].mxu0
        %v1663 = vadd.f32 %v1423, %v1662
        %v1664 = vpop.f32.mrb[0].mxu0
        %1665 = vmatprep.mubr.f32.mxu0 0.0
        %1666 = vmatmul.mubr.f32.gmra.mrb[0].mxu0 %v1474
        %v1667 = vpop.f32.mrb[0].mxu0
        %v1668 = vadd.f32 %v1423, %v1667
        %v1669 = vpop.f32.mrb[0].mxu0
        %1670 = vmatprep.mubr.f32.mxu0 0.0
        %1671 = vmatmul.mubr.f32.gmra.mrb[0].mxu0 %v1477
        %v1672 = vpop.f32.mrb[0].mxu0
        %v1673 = vadd.f32 %v1423, %v1672
        %v1674 = vpop.f32.mrb[0].mxu0
        %1675 = vmatprep.mubr.f32.mxu0 0.0
        %1676 = vmatmul.mubr.f32.gmra.mrb[0].mxu0 %v1480
        %v1677 = vpop.f32.mrb[0].mxu0
        %v1678 = vadd.f32 %v1423, %v1677
        %v1679 = vpop.f32.mrb[0].mxu0
        %1680 = vmatprep.mubr.f32.mxu0 0.0
        %1681 = vmatmul.mubr.f32.gmra.mrb[0].mxu0 %v1483
        %v1682 = vpop.f32.mrb[0].mxu0
        %v1683 = vadd.f32 %v1423, %v1682
        %v1684 = vpop.f32.mrb[0].mxu0
        %1685 = vmatprep.mubr.f32.mxu0 0.0
        %1686 = vmatmul.mubr.f32.gmra.mrb[0].mxu0 %v1486
        %v1687 = vpop.f32.mrb[0].mxu0
        %v1688 = vadd.f32 %v1423, %v1687
        %v1689 = vpop.f32.mrb[0].mxu0
        %1690 = vmatprep.mubr.f32.mxu0 0.0
        %1691 = vmatmul.mubr.f32.gmra.mrb[0].mxu0 %v1489
        %v1692 = vpop.f32.mrb[0].mxu0
        %v1693 = vadd.f32 %v1423, %v1692
        %v1694 = vpop.f32.mrb[0].mxu0
        %1695 = vmatprep.mubr.f32.mxu0 0.0
        %1696 = vmatmul.mubr.f32.gmra.mrb[0].mxu0 %v1492
        %v1697 = vpop.f32.mrb[0].mxu0
        %v1698 = vadd.f32 %v1423, %v1697
        %v1699 = vpop.f32.mrb[0].mxu0
        %1700 = vmatprep.mubr.f32.mxu0 0.0
        %1701 = vmatmul.mubr.f32.gmra.mrb[0].mxu0 %v1495
        %v1702 = vpop.f32.mrb[0].mxu0
        %v1703 = vadd.f32 %v1423, %v1702
        %v1704 = vpop.f32.mrb[0].mxu0
        %1705 = vmatprep.mubr.f32.mxu0 0.0
        %1706 = vmatmul.mubr.f32.gmra.mrb[0].mxu0 %v1498
        %v1707 = vpop.f32.mrb[0].mxu0
        %v1708 = vadd.f32 %v1423, %v1707
        %v1709 = vpop.f32.mrb[0].mxu0
        %1710 = vmatprep.mubr.f32.mxu0 0.0
        %1711 = vmatmul.mubr.f32.gmra.mrb[0].mxu0 %v1501
        %v1712 = vpop.f32.mrb[0].mxu0
        %v1713 = vadd.f32 %v1423, %v1712
        %v1714 = vpop.f32.mrb[0].mxu0
        %1715 = vmatprep.mubr.f32.mxu0 0.0
        %1716 = vmatmul.mubr.f32.gmra.mrb[0].mxu0 %v1504
        %v1717 = vpop.f32.mrb[0].mxu0
        %v1718 = vadd.f32 %v1423, %v1717
        %v1719 = vpop.f32.mrb[0].mxu0
        %1720 = vmatprep.mubr.f32.mxu0 0.0
        %1721 = vmatmul.mubr.f32.gmra.mrb[0].mxu0 %v1507
        %v1722 = vpop.f32.mrb[0].mxu0
        %v1723 = vadd.f32 %v1423, %v1722
        %v1724 = vpop.f32.mrb[0].mxu0
        %1725 = vmatprep.mubr.f32.mxu0 0.0
        %1726 = vmatmul.mubr.f32.gmra.mrb[0].mxu0 %v1510
        %v1727 = vpop.f32.mrb[0].mxu0
        %v1728 = vadd.f32 %v1423, %v1727
        %v1729 = vpop.f32.mrb[0].mxu0
        %1730 = vmatprep.mubr.f32.mxu0 0.0
        %1731 = vmatmul.mubr.f32.gmra.mrb[0].mxu0 %v1513
        %v1732 = vpop.f32.mrb[0].mxu0
        %v1733 = vadd.f32 %v1423, %v1732
        %v1734 = vpop.f32.mrb[0].mxu0
        %1735 = vmatprep.mubr.f32.mxu0 0.0
        %1736 = vmatmul.mubr.f32.gmra.mrb[0].mxu0 %v1516
        %v1737 = vpop.f32.mrb[0].mxu0
        %v1738 = vadd.f32 %v1423, %v1737
        %v1739 = vpop.f32.mrb[0].mxu0
        %1740 = vmatprep.mubr.f32.mxu0 0.0
        %1741 = vmatmul.mubr.f32.gmra.mrb[0].mxu0 %v1519
        %v1742 = vpop.f32.mrb[0].mxu0
        %v1743 = vadd.f32 %v1423, %v1742
        %v1744 = vpop.f32.mrb[0].mxu0
        %1745 = vdwg.mxu0
        %v1746 = vmax.f32 %v1588, 0.0
        %v1747 = vmax.f32 %v1593, 0.0
        %v1748 = vmax.f32 %v1598, 0.0
        %v1749 = vmax.f32 %v1603, 0.0
        %v1750 = vmax.f32 %v1608, 0.0
        %v1751 = vmax.f32 %v1613, 0.0
        %v1752 = vmax.f32 %v1618, 0.0
        %v1753 = vmax.f32 %v1623, 0.0
        %v1754 = vmax.f32 %v1628, 0.0
        %v1755 = vmax.f32 %v1633, 0.0
        %v1756 = vmax.f32 %v1638, 0.0
        %v1757 = vmax.f32 %v1643, 0.0
        %v1758 = vmax.f32 %v1648, 0.0
        %v1759 = vmax.f32 %v1653, 0.0
        %v1760 = vmax.f32 %v1658, 0.0
        %v1761 = vmax.f32 %v1663, 0.0
        %v1762 = vmax.f32 %v1668, 0.0
        %v1763 = vmax.f32 %v1673, 0.0
        %v1764 = vmax.f32 %v1678, 0.0
        %v1765 = vmax.f32 %v1683, 0.0
        %v1766 = vmax.f32 %v1688, 0.0
        %v1767 = vmax.f32 %v1693, 0.0
        %v1768 = vmax.f32 %v1698, 0.0
        %v1769 = vmax.f32 %v1703, 0.0
        %v1770 = vmax.f32 %v1708, 0.0
        %v1771 = vmax.f32 %v1713, 0.0
        %v1772 = vmax.f32 %v1718, 0.0
        %v1773 = vmax.f32 %v1723, 0.0
        %v1774 = vmax.f32 %v1728, 0.0
        %v1775 = vmax.f32 %v1733, 0.0
        %v1776 = vmax.f32 %v1738, 0.0
        %v1777 = vmax.f32 %v1743, 0.0
        %v1778 = vmin.f32 %v1746, 6.0
        %v1779 = vmin.f32 %v1747, 6.0
        %v1780 = vmin.f32 %v1748, 6.0
        %v1781 = vmin.f32 %v1749, 6.0
        %v1782 = vmin.f32 %v1750, 6.0
        %v1783 = vmin.f32 %v1751, 6.0
        %v1784 = vmin.f32 %v1752, 6.0
        %v1785 = vmin.f32 %v1753, 6.0
        %v1786 = vmin.f32 %v1754, 6.0
        %v1787 = vmin.f32 %v1755, 6.0
        %v1788 = vmin.f32 %v1756, 6.0
        %v1789 = vmin.f32 %v1757, 6.0
        %v1790 = vmin.f32 %v1758, 6.0
        %v1791 = vmin.f32 %v1759, 6.0
        %v1792 = vmin.f32 %v1760, 6.0
        %v1793 = vmin.f32 %v1761, 6.0
        %v1794 = vmin.f32 %v1762, 6.0
        %v1795 = vmin.f32 %v1763, 6.0
        %v1796 = vmin.f32 %v1764, 6.0
        %v1797 = vmin.f32 %v1765, 6.0
        %v1798 = vmin.f32 %v1766, 6.0
        %v1799 = vmin.f32 %v1767, 6.0
        %v1800 = vmin.f32 %v1768, 6.0
        %v1801 = vmin.f32 %v1769, 6.0
        %v1802 = vmin.f32 %v1770, 6.0
        %v1803 = vmin.f32 %v1771, 6.0
        %v1804 = vmin.f32 %v1772, 6.0
        %v1805 = vmin.f32 %v1773, 6.0
        %v1806 = vmin.f32 %v1774, 6.0
        %v1807 = vmin.f32 %v1775, 6.0
        %v1808 = vmin.f32 %v1776, 6.0
        %v1809 = vmin.f32 %v1777, 6.0
        %vm1810 = vcmask 261120
        %1811 = vst.msk [vmem:[#allocation3] sm:$0xff] %vm1810, 0.0
        %1812 = vst.msk [vmem:[#allocation3 + $0x8] sm:$0xff] %vm1810, 0.0
        %vm1813 = vcmask 254976
        %1814 = vst.msk [vmem:[#allocation3 + $0x10] sm:$0x3] %vm1813, 0.0
        %s1815 = scalar_lea.vmem [#allocation3], 408
        %1816 = vst.msk [vmem:[%s1815] sm:$0xff] %vm1810, 0.0
        %1817 = vst.msk [vmem:[%s1815 + $0x8] sm:$0xff] %vm1810, 0.0
        %1818 = vst.msk [vmem:[%s1815 + $0x10] sm:$0x3] %vm1813, 0.0
        %vm1819 = vcmask 253952
        %1820 = vst.msk [vmem:[#allocation3] sm:$0x1] %vm1819, 0.0
        %1821 = vst.msk [vmem:[#allocation3 + $0x18] sm:$0x1] %vm1819, 0.0
        %1822 = vst.msk [vmem:[#allocation3 + $0x30] sm:$0x1] %vm1819, 0.0
        %1823 = vst.msk [vmem:[#allocation3 + $0x48] sm:$0x1] %vm1819, 0.0
        %1824 = vst.msk [vmem:[#allocation3 + $0x60] sm:$0x1] %vm1819, 0.0
        %1825 = vst.msk [vmem:[#allocation3 + $0x78] sm:$0x1] %vm1819, 0.0
        %1826 = vst.msk [vmem:[#allocation3 + $0x90] sm:$0x1] %vm1819, 0.0
        %1827 = vst.msk [vmem:[#allocation3 + $0xa8] sm:$0x1] %vm1819, 0.0
        %1828 = vst.msk [vmem:[#allocation3 + $0xc0] sm:$0x1] %vm1819, 0.0
        %1829 = vst.msk [vmem:[#allocation3 + $0xd8] sm:$0x1] %vm1819, 0.0
        %1830 = vst.msk [vmem:[#allocation3 + $0xf0] sm:$0x1] %vm1819, 0.0
        %1831 = vst.msk [vmem:[#allocation3 + $0x108] sm:$0x1] %vm1819, 0.0
        %1832 = vst.msk [vmem:[#allocation3 + $0x120] sm:$0x1] %vm1819, 0.0
        %1833 = vst.msk [vmem:[#allocation3 + $0x138] sm:$0x1] %vm1819, 0.0
        %1834 = vst.msk [vmem:[#allocation3 + $0x150] sm:$0x1] %vm1819, 0.0
        %1835 = vst.msk [vmem:[#allocation3 + $0x168] sm:$0x1] %vm1819, 0.0
        %1836 = vst.msk [vmem:[#allocation3 + $0x180] sm:$0x1] %vm1819, 0.0
        %1837 = vst.msk [vmem:[#allocation3 + $0x198] sm:$0x1] %vm1819, 0.0
        %1838 = vst.msk [vmem:[#allocation3 + $0x11] sm:$0x1] %vm1819, 0.0
        %1839 = vst.msk [vmem:[#allocation3 + $0x29] sm:$0x1] %vm1819, 0.0
        %1840 = vst.msk [vmem:[#allocation3 + $0x41] sm:$0x1] %vm1819, 0.0
        %1841 = vst.msk [vmem:[#allocation3 + $0x59] sm:$0x1] %vm1819, 0.0
        %1842 = vst.msk [vmem:[#allocation3 + $0x71] sm:$0x1] %vm1819, 0.0
        %1843 = vst.msk [vmem:[#allocation3 + $0x89] sm:$0x1] %vm1819, 0.0
        %1844 = vst.msk [vmem:[#allocation3 + $0xa1] sm:$0x1] %vm1819, 0.0
        %1845 = vst.msk [vmem:[#allocation3 + $0xb9] sm:$0x1] %vm1819, 0.0
        %1846 = vst.msk [vmem:[#allocation3 + $0xd1] sm:$0x1] %vm1819, 0.0
        %1847 = vst.msk [vmem:[#allocation3 + $0xe9] sm:$0x1] %vm1819, 0.0
        %1848 = vst.msk [vmem:[#allocation3 + $0x101] sm:$0x1] %vm1819, 0.0
        %1849 = vst.msk [vmem:[#allocation3 + $0x119] sm:$0x1] %vm1819, 0.0
        %1850 = vst.msk [vmem:[#allocation3 + $0x131] sm:$0x1] %vm1819, 0.0
        %1851 = vst.msk [vmem:[#allocation3 + $0x149] sm:$0x1] %vm1819, 0.0
        %1852 = vst.msk [vmem:[#allocation3 + $0x161] sm:$0x1] %vm1819, 0.0
        %1853 = vst.msk [vmem:[#allocation3 + $0x179] sm:$0x1] %vm1819, 0.0
        %1854 = vst.msk [vmem:[#allocation3 + $0x191] sm:$0x1] %vm1819, 0.0
        %1855 = vst.msk [vmem:[#allocation3 + $0x1a9] sm:$0x1] %vm1819, 0.0
        %s1856 = scalar_lea.vmem [#allocation3], 24
        %1857 = vst.msk [vmem:[%s1856 + $0x1] sm:$0xff] %vm1810, %v1778
        %1858 = vst.msk [vmem:[%s1856 + $0x9] sm:$0xff] %vm1810, %v1779
        %1859 = vst.msk [vmem:[%s1856 + $0x19] sm:$0xff] %vm1810, %v1780
        %1860 = vst.msk [vmem:[%s1856 + $0x21] sm:$0xff] %vm1810, %v1781
        %1861 = vst.msk [vmem:[%s1856 + $0x31] sm:$0xff] %vm1810, %v1782
        %1862 = vst.msk [vmem:[%s1856 + $0x39] sm:$0xff] %vm1810, %v1783
        %1863 = vst.msk [vmem:[%s1856 + $0x49] sm:$0xff] %vm1810, %v1784
        %1864 = vst.msk [vmem:[%s1856 + $0x51] sm:$0xff] %vm1810, %v1785
        %1865 = vst.msk [vmem:[%s1856 + $0x61] sm:$0xff] %vm1810, %v1786
        %1866 = vst.msk [vmem:[%s1856 + $0x69] sm:$0xff] %vm1810, %v1787
        %1867 = vst.msk [vmem:[%s1856 + $0x79] sm:$0xff] %vm1810, %v1788
        %1868 = vst.msk [vmem:[%s1856 + $0x81] sm:$0xff] %vm1810, %v1789
        %1869 = vst.msk [vmem:[%s1856 + $0x91] sm:$0xff] %vm1810, %v1790
        %1870 = vst.msk [vmem:[%s1856 + $0x99] sm:$0xff] %vm1810, %v1791
        %1871 = vst.msk [vmem:[%s1856 + $0xa9] sm:$0xff] %vm1810, %v1792
        %1872 = vst.msk [vmem:[%s1856 + $0xb1] sm:$0xff] %vm1810, %v1793
        %1873 = vst.msk [vmem:[%s1856 + $0xc1] sm:$0xff] %vm1810, %v1794
        %1874 = vst.msk [vmem:[%s1856 + $0xc9] sm:$0xff] %vm1810, %v1795
        %1875 = vst.msk [vmem:[%s1856 + $0xd9] sm:$0xff] %vm1810, %v1796
        %1876 = vst.msk [vmem:[%s1856 + $0xe1] sm:$0xff] %vm1810, %v1797
        %1877 = vst.msk [vmem:[%s1856 + $0xf1] sm:$0xff] %vm1810, %v1798
        %1878 = vst.msk [vmem:[%s1856 + $0xf9] sm:$0xff] %vm1810, %v1799
        %1879 = vst.msk [vmem:[%s1856 + $0x109] sm:$0xff] %vm1810, %v1800
        %1880 = vst.msk [vmem:[%s1856 + $0x111] sm:$0xff] %vm1810, %v1801
        %1881 = vst.msk [vmem:[%s1856 + $0x121] sm:$0xff] %vm1810, %v1802
        %1882 = vst.msk [vmem:[%s1856 + $0x129] sm:$0xff] %vm1810, %v1803
        %1883 = vst.msk [vmem:[%s1856 + $0x139] sm:$0xff] %vm1810, %v1804
        %1884 = vst.msk [vmem:[%s1856 + $0x141] sm:$0xff] %vm1810, %v1805
        %1885 = vst.msk [vmem:[%s1856 + $0x151] sm:$0xff] %vm1810, %v1806
        %1886 = vst.msk [vmem:[%s1856 + $0x159] sm:$0xff] %vm1810, %v1807
        %1887 = vst.msk [vmem:[%s1856 + $0x169] sm:$0xff] %vm1810, %v1808
        %1888 = vst.msk [vmem:[%s1856 + $0x171] sm:$0xff] %vm1810, %v1809
        %v1889 = vld [vmem:[%s5] sm:$0x1]
        %v1890 = vld [vmem:[#allocation3] ss:$2 sm:$0xff]
        %s1891 = scalar_lea.vmem [#allocation3], 48
        %v1892 = vld [vmem:[%s1891] ss:$2 sm:$0xff]
        %s1893 = scalar_lea.vmem [#allocation3], 96
        %v1894 = vld [vmem:[%s1893] ss:$2 sm:$0xff]
        %s1895 = scalar_lea.vmem [#allocation3], 144
        %v1896 = vld [vmem:[%s1895] ss:$2 sm:$0xff]
        %s1897 = scalar_lea.vmem [#allocation3], 192
        %v1898 = vld [vmem:[%s1897] ss:$2 sm:$0xff]
        %s1899 = scalar_lea.vmem [#allocation3], 240
        %v1900 = vld [vmem:[%s1899] ss:$2 sm:$0xff]
        %s1901 = scalar_lea.vmem [#allocation3], 288
        %v1902 = vld [vmem:[%s1901] ss:$2 sm:$0xff]
        %s1903 = scalar_lea.vmem [#allocation3], 336
        %v1904 = vld [vmem:[%s1903] ss:$2 sm:$0xff]
        %v1906 = vlaneseq
        %v1907 = vshrl.u32 %v1906, 7
        %v1908 = vsub.s32 0, %v1907
        %v1909 = vrot.slane %v1889, %v1908
        %v1911 = vmul.f32 %v1890, %v1909
        %v1912 = vmul.f32 %v1892, %v1909
        %v1913 = vmul.f32 %v1894, %v1909
        %v1914 = vmul.f32 %v1896, %v1909
        %v1915 = vmul.f32 %v1898, %v1909
        %v1916 = vmul.f32 %v1900, %v1909
        %v1917 = vmul.f32 %v1902, %v1909
        %v1918 = vmul.f32 %v1904, %v1909
        %v1919 = vadd.f32 %v1911, 0.0
        %v1920 = vadd.f32 %v1912, 0.0
        %v1921 = vadd.f32 %v1913, 0.0
        %v1922 = vadd.f32 %v1914, 0.0
        %v1923 = vadd.f32 %v1915, 0.0
        %v1924 = vadd.f32 %v1916, 0.0
        %v1925 = vadd.f32 %v1917, 0.0
        %v1926 = vadd.f32 %v1918, 0.0
        %s1927 = scalar_lea.vmem %s5, 1
        %v1928 = vld [vmem:[%s1927] sm:$0x1]
        %s1929 = scalar_lea.vmem [#allocation3], 1
        %v1930 = vld [vmem:[%s1929] ss:$2 sm:$0xff]
        %s1931 = scalar_lea.vmem [#allocation3], 49
        %v1932 = vld [vmem:[%s1931] ss:$2 sm:$0xff]
        %s1933 = scalar_lea.vmem [#allocation3], 97
        %v1934 = vld [vmem:[%s1933] ss:$2 sm:$0xff]
        %s1935 = scalar_lea.vmem [#allocation3], 145
        %v1936 = vld [vmem:[%s1935] ss:$2 sm:$0xff]
        %s1937 = scalar_lea.vmem [#allocation3], 193
        %v1938 = vld [vmem:[%s1937] ss:$2 sm:$0xff]
        %s1939 = scalar_lea.vmem [#allocation3], 241
        %v1940 = vld [vmem:[%s1939] ss:$2 sm:$0xff]
        %s1941 = scalar_lea.vmem [#allocation3], 289
        %v1942 = vld [vmem:[%s1941] ss:$2 sm:$0xff]
        %s1943 = scalar_lea.vmem [#allocation3], 337
        %v1944 = vld [vmem:[%s1943] ss:$2 sm:$0xff]
        %v1946 = vlaneseq
        %v1947 = vshrl.u32 %v1946, 7
        %v1948 = vsub.s32 0, %v1947
        %v1949 = vrot.slane %v1928, %v1948
        %v1951 = vmul.f32 %v1930, %v1949
        %v1952 = vmul.f32 %v1932, %v1949
        %v1953 = vmul.f32 %v1934, %v1949
        %v1954 = vmul.f32 %v1936, %v1949
        %v1955 = vmul.f32 %v1938, %v1949
        %v1956 = vmul.f32 %v1940, %v1949
        %v1957 = vmul.f32 %v1942, %v1949
        %v1958 = vmul.f32 %v1944, %v1949
        %v1959 = vadd.f32 %v1919, %v1951
        %v1960 = vadd.f32 %v1920, %v1952
        %v1961 = vadd.f32 %v1921, %v1953
        %v1962 = vadd.f32 %v1922, %v1954
        %v1963 = vadd.f32 %v1923, %v1955
        %v1964 = vadd.f32 %v1924, %v1956
        %v1965 = vadd.f32 %v1925, %v1957
        %v1966 = vadd.f32 %v1926, %v1958
        %s1967 = scalar_lea.vmem %s5, 2
        %v1968 = vld [vmem:[%s1967] sm:$0x1]
        %s1969 = scalar_lea.vmem [#allocation3], 2
        %v1970 = vld [vmem:[%s1969] ss:$2 sm:$0xff]
        %s1971 = scalar_lea.vmem [#allocation3], 50
        %v1972 = vld [vmem:[%s1971] ss:$2 sm:$0xff]
        %s1973 = scalar_lea.vmem [#allocation3], 98
        %v1974 = vld [vmem:[%s1973] ss:$2 sm:$0xff]
        %s1975 = scalar_lea.vmem [#allocation3], 146
        %v1976 = vld [vmem:[%s1975] ss:$2 sm:$0xff]
        %s1977 = scalar_lea.vmem [#allocation3], 194
        %v1978 = vld [vmem:[%s1977] ss:$2 sm:$0xff]
        %s1979 = scalar_lea.vmem [#allocation3], 242
        %v1980 = vld [vmem:[%s1979] ss:$2 sm:$0xff]
        %s1981 = scalar_lea.vmem [#allocation3], 290
        %v1982 = vld [vmem:[%s1981] ss:$2 sm:$0xff]
        %s1983 = scalar_lea.vmem [#allocation3], 338
        %v1984 = vld [vmem:[%s1983] ss:$2 sm:$0xff]
        %v1986 = vlaneseq
        %v1987 = vshrl.u32 %v1986, 7
        %v1988 = vsub.s32 0, %v1987
        %v1989 = vrot.slane %v1968, %v1988
        %v1991 = vmul.f32 %v1970, %v1989
        %v1992 = vmul.f32 %v1972, %v1989
        %v1993 = vmul.f32 %v1974, %v1989
        %v1994 = vmul.f32 %v1976, %v1989
        %v1995 = vmul.f32 %v1978, %v1989
        %v1996 = vmul.f32 %v1980, %v1989
        %v1997 = vmul.f32 %v1982, %v1989
        %v1998 = vmul.f32 %v1984, %v1989
        %v1999 = vadd.f32 %v1959, %v1991
        %v2000 = vadd.f32 %v1960, %v1992
        %v2001 = vadd.f32 %v1961, %v1993
        %v2002 = vadd.f32 %v1962, %v1994
        %v2003 = vadd.f32 %v1963, %v1995
        %v2004 = vadd.f32 %v1964, %v1996
        %v2005 = vadd.f32 %v1965, %v1997
        %v2006 = vadd.f32 %v1966, %v1998
        %s2007 = scalar_lea.vmem %s5, 3
        %v2008 = vld [vmem:[%s2007] sm:$0x1]
        %v2009 = vld [vmem:[%s1856] ss:$2 sm:$0xff]
        %s2010 = scalar_lea.vmem %s1856, 48 [#allocation3]
        %v2011 = vld [vmem:[%s2010] ss:$2 sm:$0xff]
        %s2012 = scalar_lea.vmem %s1856, 96 [#allocation3]
        %v2013 = vld [vmem:[%s2012] ss:$2 sm:$0xff]
        %s2014 = scalar_lea.vmem %s1856, 144 [#allocation3]
        %v2015 = vld [vmem:[%s2014] ss:$2 sm:$0xff]
        %s2016 = scalar_lea.vmem %s1856, 192 [#allocation3]
        %v2017 = vld [vmem:[%s2016] ss:$2 sm:$0xff]
        %s2018 = scalar_lea.vmem %s1856, 240 [#allocation3]
        %v2019 = vld [vmem:[%s2018] ss:$2 sm:$0xff]
        %s2020 = scalar_lea.vmem %s1856, 288 [#allocation3]
        %v2021 = vld [vmem:[%s2020] ss:$2 sm:$0xff]
        %s2022 = scalar_lea.vmem %s1856, 336 [#allocation3]
        %v2023 = vld [vmem:[%s2022] ss:$2 sm:$0xff]
        %v2025 = vlaneseq
        %v2026 = vshrl.u32 %v2025, 7
        %v2027 = vsub.s32 0, %v2026
        %v2028 = vrot.slane %v2008, %v2027
        %v2030 = vmul.f32 %v2009, %v2028
        %v2031 = vmul.f32 %v2011, %v2028
        %v2032 = vmul.f32 %v2013, %v2028
        %v2033 = vmul.f32 %v2015, %v2028
        %v2034 = vmul.f32 %v2017, %v2028
        %v2035 = vmul.f32 %v2019, %v2028
        %v2036 = vmul.f32 %v2021, %v2028
        %v2037 = vmul.f32 %v2023, %v2028
        %v2038 = vadd.f32 %v1999, %v2030
        %v2039 = vadd.f32 %v2000, %v2031
        %v2040 = vadd.f32 %v2001, %v2032
        %v2041 = vadd.f32 %v2002, %v2033
        %v2042 = vadd.f32 %v2003, %v2034
        %v2043 = vadd.f32 %v2004, %v2035
        %v2044 = vadd.f32 %v2005, %v2036
        %v2045 = vadd.f32 %v2006, %v2037
        %s2046 = scalar_lea.vmem %s5, 4
        %v2047 = vld [vmem:[%s2046] sm:$0x1]
        %s2048 = scalar_lea.vmem %s1856, 1 [#allocation3]
        %v2049 = vld [vmem:[%s2048] ss:$2 sm:$0xff]
        %s2050 = scalar_lea.vmem %s1856, 49 [#allocation3]
        %v2051 = vld [vmem:[%s2050] ss:$2 sm:$0xff]
        %s2052 = scalar_lea.vmem %s1856, 97 [#allocation3]
        %v2053 = vld [vmem:[%s2052] ss:$2 sm:$0xff]
        %s2054 = scalar_lea.vmem %s1856, 145 [#allocation3]
        %v2055 = vld [vmem:[%s2054] ss:$2 sm:$0xff]
        %s2056 = scalar_lea.vmem %s1856, 193 [#allocation3]
        %v2057 = vld [vmem:[%s2056] ss:$2 sm:$0xff]
        %s2058 = scalar_lea.vmem %s1856, 241 [#allocation3]
        %v2059 = vld [vmem:[%s2058] ss:$2 sm:$0xff]
        %s2060 = scalar_lea.vmem %s1856, 289 [#allocation3]
        %v2061 = vld [vmem:[%s2060] ss:$2 sm:$0xff]
        %s2062 = scalar_lea.vmem %s1856, 337 [#allocation3]
        %v2063 = vld [vmem:[%s2062] ss:$2 sm:$0xff]
        %v2065 = vlaneseq
        %v2066 = vshrl.u32 %v2065, 7
        %v2067 = vsub.s32 0, %v2066
        %v2068 = vrot.slane %v2047, %v2067
        %v2070 = vmul.f32 %v2049, %v2068
        %v2071 = vmul.f32 %v2051, %v2068
        %v2072 = vmul.f32 %v2053, %v2068
        %v2073 = vmul.f32 %v2055, %v2068
        %v2074 = vmul.f32 %v2057, %v2068
        %v2075 = vmul.f32 %v2059, %v2068
        %v2076 = vmul.f32 %v2061, %v2068
        %v2077 = vmul.f32 %v2063, %v2068
        %v2078 = vadd.f32 %v2038, %v2070
        %v2079 = vadd.f32 %v2039, %v2071
        %v2080 = vadd.f32 %v2040, %v2072
        %v2081 = vadd.f32 %v2041, %v2073
        %v2082 = vadd.f32 %v2042, %v2074
        %v2083 = vadd.f32 %v2043, %v2075
        %v2084 = vadd.f32 %v2044, %v2076
        %v2085 = vadd.f32 %v2045, %v2077
        %s2086 = scalar_lea.vmem %s5, 5
        %v2087 = vld [vmem:[%s2086] sm:$0x1]
        %s2088 = scalar_lea.vmem %s1856, 2 [#allocation3]
        %v2089 = vld [vmem:[%s2088] ss:$2 sm:$0xff]
        %s2090 = scalar_lea.vmem %s1856, 50 [#allocation3]
        %v2091 = vld [vmem:[%s2090] ss:$2 sm:$0xff]
        %s2092 = scalar_lea.vmem %s1856, 98 [#allocation3]
        %v2093 = vld [vmem:[%s2092] ss:$2 sm:$0xff]
        %s2094 = scalar_lea.vmem %s1856, 146 [#allocation3]
        %v2095 = vld [vmem:[%s2094] ss:$2 sm:$0xff]
        %s2096 = scalar_lea.vmem %s1856, 194 [#allocation3]
        %v2097 = vld [vmem:[%s2096] ss:$2 sm:$0xff]
        %s2098 = scalar_lea.vmem %s1856, 242 [#allocation3]
        %v2099 = vld [vmem:[%s2098] ss:$2 sm:$0xff]
        %s2100 = scalar_lea.vmem %s1856, 290 [#allocation3]
        %v2101 = vld [vmem:[%s2100] ss:$2 sm:$0xff]
        %s2102 = scalar_lea.vmem %s1856, 338 [#allocation3]
        %v2103 = vld [vmem:[%s2102] ss:$2 sm:$0xff]
        %v2105 = vlaneseq
        %v2106 = vshrl.u32 %v2105, 7
        %v2107 = vsub.s32 0, %v2106
        %v2108 = vrot.slane %v2087, %v2107
        %v2110 = vmul.f32 %v2089, %v2108
        %v2111 = vmul.f32 %v2091, %v2108
        %v2112 = vmul.f32 %v2093, %v2108
        %v2113 = vmul.f32 %v2095, %v2108
        %v2114 = vmul.f32 %v2097, %v2108
        %v2115 = vmul.f32 %v2099, %v2108
        %v2116 = vmul.f32 %v2101, %v2108
        %v2117 = vmul.f32 %v2103, %v2108
        %v2118 = vadd.f32 %v2078, %v2110
        %v2119 = vadd.f32 %v2079, %v2111
        %v2120 = vadd.f32 %v2080, %v2112
        %v2121 = vadd.f32 %v2081, %v2113
        %v2122 = vadd.f32 %v2082, %v2114
        %v2123 = vadd.f32 %v2083, %v2115
        %v2124 = vadd.f32 %v2084, %v2116
        %v2125 = vadd.f32 %v2085, %v2117
        %s2126 = scalar_lea.vmem %s5, 6
        %v2127 = vld [vmem:[%s2126] sm:$0x1]
        %s2128 = scalar_lea.vmem [#allocation3], 48
        %v2129 = vld [vmem:[%s2128] ss:$2 sm:$0xff]
        %s2130 = scalar_lea.vmem %s2128, 48 [#allocation3]
        %v2131 = vld [vmem:[%s2130] ss:$2 sm:$0xff]
        %s2132 = scalar_lea.vmem %s2128, 96 [#allocation3]
        %v2133 = vld [vmem:[%s2132] ss:$2 sm:$0xff]
        %s2134 = scalar_lea.vmem %s2128, 144 [#allocation3]
        %v2135 = vld [vmem:[%s2134] ss:$2 sm:$0xff]
        %s2136 = scalar_lea.vmem %s2128, 192 [#allocation3]
        %v2137 = vld [vmem:[%s2136] ss:$2 sm:$0xff]
        %s2138 = scalar_lea.vmem %s2128, 240 [#allocation3]
        %v2139 = vld [vmem:[%s2138] ss:$2 sm:$0xff]
        %s2140 = scalar_lea.vmem %s2128, 288 [#allocation3]
        %v2141 = vld [vmem:[%s2140] ss:$2 sm:$0xff]
        %s2142 = scalar_lea.vmem %s2128, 336 [#allocation3]
        %v2143 = vld [vmem:[%s2142] ss:$2 sm:$0xff]
        %v2145 = vlaneseq
        %v2146 = vshrl.u32 %v2145, 7
        %v2147 = vsub.s32 0, %v2146
        %v2148 = vrot.slane %v2127, %v2147
        %v2150 = vmul.f32 %v2129, %v2148
        %v2151 = vmul.f32 %v2131, %v2148
        %v2152 = vmul.f32 %v2133, %v2148
        %v2153 = vmul.f32 %v2135, %v2148
        %v2154 = vmul.f32 %v2137, %v2148
        %v2155 = vmul.f32 %v2139, %v2148
        %v2156 = vmul.f32 %v2141, %v2148
        %v2157 = vmul.f32 %v2143, %v2148
        %v2158 = vadd.f32 %v2118, %v2150
        %v2159 = vadd.f32 %v2119, %v2151
        %v2160 = vadd.f32 %v2120, %v2152
        %v2161 = vadd.f32 %v2121, %v2153
        %v2162 = vadd.f32 %v2122, %v2154
        %v2163 = vadd.f32 %v2123, %v2155
        %v2164 = vadd.f32 %v2124, %v2156
        %v2165 = vadd.f32 %v2125, %v2157
        %s2166 = scalar_lea.vmem %s5, 7
        %v2167 = vld [vmem:[%s2166] sm:$0x1]
        %s2168 = scalar_lea.vmem %s2128, 1 [#allocation3]
        %v2169 = vld [vmem:[%s2168] ss:$2 sm:$0xff]
        %s2170 = scalar_lea.vmem %s2128, 49 [#allocation3]
        %v2171 = vld [vmem:[%s2170] ss:$2 sm:$0xff]
        %s2172 = scalar_lea.vmem %s2128, 97 [#allocation3]
        %v2173 = vld [vmem:[%s2172] ss:$2 sm:$0xff]
        %s2174 = scalar_lea.vmem %s2128, 145 [#allocation3]
        %v2175 = vld [vmem:[%s2174] ss:$2 sm:$0xff]
        %s2176 = scalar_lea.vmem %s2128, 193 [#allocation3]
        %v2177 = vld [vmem:[%s2176] ss:$2 sm:$0xff]
        %s2178 = scalar_lea.vmem %s2128, 241 [#allocation3]
        %v2179 = vld [vmem:[%s2178] ss:$2 sm:$0xff]
        %s2180 = scalar_lea.vmem %s2128, 289 [#allocation3]
        %v2181 = vld [vmem:[%s2180] ss:$2 sm:$0xff]
        %s2182 = scalar_lea.vmem %s2128, 337 [#allocation3]
        %v2183 = vld [vmem:[%s2182] ss:$2 sm:$0xff]
        %v2185 = vlaneseq
        %v2186 = vshrl.u32 %v2185, 7
        %v2187 = vsub.s32 0, %v2186
        %v2188 = vrot.slane %v2167, %v2187
        %v2190 = vmul.f32 %v2169, %v2188
        %v2191 = vmul.f32 %v2171, %v2188
        %v2192 = vmul.f32 %v2173, %v2188
        %v2193 = vmul.f32 %v2175, %v2188
        %v2194 = vmul.f32 %v2177, %v2188
        %v2195 = vmul.f32 %v2179, %v2188
        %v2196 = vmul.f32 %v2181, %v2188
        %v2197 = vmul.f32 %v2183, %v2188
        %v2198 = vadd.f32 %v2158, %v2190
        %v2199 = vadd.f32 %v2159, %v2191
        %v2200 = vadd.f32 %v2160, %v2192
        %v2201 = vadd.f32 %v2161, %v2193
        %v2202 = vadd.f32 %v2162, %v2194
        %v2203 = vadd.f32 %v2163, %v2195
        %v2204 = vadd.f32 %v2164, %v2196
        %v2205 = vadd.f32 %v2165, %v2197
        %s2206 = scalar_lea.vmem %s5, 8
        %v2207 = vld [vmem:[%s2206] sm:$0x1]
        %s2208 = scalar_lea.vmem %s2128, 2 [#allocation3]
        %v2209 = vld [vmem:[%s2208] ss:$2 sm:$0xff]
        %s2210 = scalar_lea.vmem %s2128, 50 [#allocation3]
        %v2211 = vld [vmem:[%s2210] ss:$2 sm:$0xff]
        %s2212 = scalar_lea.vmem %s2128, 98 [#allocation3]
        %v2213 = vld [vmem:[%s2212] ss:$2 sm:$0xff]
        %s2214 = scalar_lea.vmem %s2128, 146 [#allocation3]
        %v2215 = vld [vmem:[%s2214] ss:$2 sm:$0xff]
        %s2216 = scalar_lea.vmem %s2128, 194 [#allocation3]
        %v2217 = vld [vmem:[%s2216] ss:$2 sm:$0xff]
        %s2218 = scalar_lea.vmem %s2128, 242 [#allocation3]
        %v2219 = vld [vmem:[%s2218] ss:$2 sm:$0xff]
        %s2220 = scalar_lea.vmem %s2128, 290 [#allocation3]
        %v2221 = vld [vmem:[%s2220] ss:$2 sm:$0xff]
        %s2222 = scalar_lea.vmem %s2128, 338 [#allocation3]
        %v2223 = vld [vmem:[%s2222] ss:$2 sm:$0xff]
        %v2225 = vlaneseq
        %v2226 = vshrl.u32 %v2225, 7
        %v2227 = vsub.s32 0, %v2226
        %v2228 = vrot.slane %v2207, %v2227
        %v2230 = vmul.f32 %v2209, %v2228
        %v2231 = vmul.f32 %v2211, %v2228
        %v2232 = vmul.f32 %v2213, %v2228
        %v2233 = vmul.f32 %v2215, %v2228
        %v2234 = vmul.f32 %v2217, %v2228
        %v2235 = vmul.f32 %v2219, %v2228
        %v2236 = vmul.f32 %v2221, %v2228
        %v2237 = vmul.f32 %v2223, %v2228
        %v2238 = vadd.f32 %v2198, %v2230
        %v2239 = vadd.f32 %v2199, %v2231
        %v2240 = vadd.f32 %v2200, %v2232
        %v2241 = vadd.f32 %v2201, %v2233
        %v2242 = vadd.f32 %v2202, %v2234
        %v2243 = vadd.f32 %v2203, %v2235
        %v2244 = vadd.f32 %v2204, %v2236
        %v2245 = vadd.f32 %v2205, %v2237
        %v2246 = vld [vmem:[%s6] sm:$0x1]
        %v2248 = vlaneseq
        %v2249 = vshrl.u32 %v2248, 7
        %v2250 = vsub.s32 0, %v2249
        %v2251 = vrot.slane %v2246, %v2250
        %v2253 = vadd.f32 %v2238, %v2251
        %v2254 = vadd.f32 %v2239, %v2251
        %v2255 = vadd.f32 %v2240, %v2251
        %v2256 = vadd.f32 %v2241, %v2251
        %v2257 = vadd.f32 %v2242, %v2251
        %v2258 = vadd.f32 %v2243, %v2251
        %v2259 = vadd.f32 %v2244, %v2251
        %v2260 = vadd.f32 %v2245, %v2251
        %v2261 = vmax.f32 %v2253, 0.0
        %v2262 = vmax.f32 %v2254, 0.0
        %v2263 = vmax.f32 %v2255, 0.0
        %v2264 = vmax.f32 %v2256, 0.0
        %v2265 = vmax.f32 %v2257, 0.0
        %v2266 = vmax.f32 %v2258, 0.0
        %v2267 = vmax.f32 %v2259, 0.0
        %v2268 = vmax.f32 %v2260, 0.0
        %v2269 = vmin.f32 %v2261, 6.0
        %v2270 = vmin.f32 %v2262, 6.0
        %v2271 = vmin.f32 %v2263, 6.0
        %v2272 = vmin.f32 %v2264, 6.0
        %v2273 = vmin.f32 %v2265, 6.0
        %v2274 = vmin.f32 %v2266, 6.0
        %v2275 = vmin.f32 %v2267, 6.0
        %v2276 = vmin.f32 %v2268, 6.0
        %v2277 = vld [vmem:[%s7] sm:$0xff]
        %v2278 = vld [vmem:[%s7 + $0x8] sm:$0xff]
        %v2279 = vld [vmem:[%s7 + $0x10] sm:$0xff]
        %v2280 = vld [vmem:[%s7 + $0x18] sm:$0xff]
        %v2281 = vld [vmem:[%s8] sm:$0x1]
        %v2283 = vlaneseq
        %v2284 = vshrl.u32 %v2283, 7
        %v2285 = vsub.s32 0, %v2284
        %v2286 = vrot.slane %v2281, %v2285
        %v2289 = vsel %vm1810, %v2269, 0
        %v2292 = vsel %vm1810, %v2270, 0
        %v2295 = vsel %vm1810, %v2271, 0
        %v2298 = vsel %vm1810, %v2272, 0
        %v2301 = vsel %vm1810, %v2273, 0
        %v2304 = vsel %vm1810, %v2274, 0
        %v2307 = vsel %vm1810, %v2275, 0
        %v2310 = vsel %vm1810, %v2276, 0
        %2312 = vmatprep.subr.mxu0 0.0
        %2313 = vmatpush1.msra.mxu0 %v2277
        %2314 = vmatprep.subr.mxu0 0.0
        %2315 = vmatpush1.msra.mxu0 %v2278
        %2316 = vmatprep.subr.mxu0 0.0
        %2317 = vmatpush1.msra.mxu0 %v2279
        %2318 = vmatprep.subr.mxu0 0.0
        %2319 = vmatpush1.msra.mxu0 %v2280
        %2320 = vmatprep.subr.mxu0 0.0
        %2321 = vmatpush1.msra.mxu0 0.0
        %2322 = vmatprep.subr.mxu0 0.0
        %2323 = vmatpush1.msra.mxu0 0.0
        %2324 = vmatprep.subr.mxu0 0.0
        %2325 = vmatpush1.msra.mxu0 0.0
        %2326 = vmatprep.subr.mxu0 0.0
        %2327 = vmatpush1.msra.mxu0 0.0
        %2328 = vmatprep.subr.mxu0 0.0
        %2329 = vmatpush1.msra.mxu0 0.0
        %2330 = vmatprep.subr.mxu0 0.0
        %2331 = vmatpush1.msra.mxu0 0.0
        %2332 = vmatprep.subr.mxu0 0.0
        %2333 = vmatpush1.msra.mxu0 0.0
        %2334 = vmatprep.subr.mxu0 0.0
        %2335 = vmatpush1.msra.mxu0 0.0
        %2336 = vmatprep.subr.mxu0 0.0
        %2337 = vmatpush1.msra.mxu0 0.0
        %2338 = vmatprep.subr.mxu0 0.0
        %2339 = vmatpush1.msra.mxu0 0.0
        %2340 = vmatprep.subr.mxu0 0.0
        %2341 = vmatpush1.msra.mxu0 0.0
        %2342 = vmatprep.subr.mxu0 0.0
        %2343 = vmatpush1.msra.mxu0 0.0
        %2344 = vmatprep.subr.mxu0 0.0
        %2345 = vmatpush1.msra.mxu0 0.0
        %2346 = vmatprep.subr.mxu0 0.0
        %2347 = vmatpush1.msra.mxu0 0.0
        %2348 = vmatprep.subr.mxu0 0.0
        %2349 = vmatpush1.msra.mxu0 0.0
        %2350 = vmatprep.subr.mxu0 0.0
        %2351 = vmatpush1.msra.mxu0 0.0
        %2352 = vmatprep.subr.mxu0 0.0
        %2353 = vmatpush1.msra.mxu0 0.0
        %2354 = vmatprep.subr.mxu0 0.0
        %2355 = vmatpush1.msra.mxu0 0.0
        %2356 = vmatprep.subr.mxu0 0.0
        %2357 = vmatpush1.msra.mxu0 0.0
        %2358 = vmatprep.subr.mxu0 0.0
        %2359 = vmatpush1.msra.mxu0 0.0
        %2360 = vmatprep.subr.mxu0 0.0
        %2361 = vmatpush1.msra.mxu0 0.0
        %2362 = vmatprep.subr.mxu0 0.0
        %2363 = vmatpush1.msra.mxu0 0.0
        %2364 = vmatprep.subr.mxu0 0.0
        %2365 = vmatpush1.msra.mxu0 0.0
        %2366 = vmatprep.subr.mxu0 0.0
        %2367 = vmatpush1.msra.mxu0 0.0
        %2368 = vmatprep.subr.mxu0 0.0
        %2369 = vmatpush1.msra.mxu0 0.0
        %2370 = vmatprep.subr.mxu0 0.0
        %2371 = vmatpush1.msra.mxu0 0.0
        %2372 = vmatprep.subr.mxu0 0.0
        %2373 = vmatpush1.msra.mxu0 0.0
        %2374 = vmatprep.subr.mxu0 0.0
        %2375 = vmatpush1.msra.mxu0 0.0
        %2376 = vmatprep.mubr.f32.mxu0 0.0
        %2377 = vmatmul.mubr.f32.gmra.mrb[0].mxu0 %v2289
        %v2378 = vpop.f32.mrb[0].mxu0
        %v2379 = vadd.f32 %v2286, %v2378
        %v2380 = vpop.f32.mrb[0].mxu0
        %2381 = vmatprep.mubr.f32.mxu0 0.0
        %2382 = vmatmul.mubr.f32.gmra.mrb[0].mxu0 %v2292
        %v2383 = vpop.f32.mrb[0].mxu0
        %v2384 = vadd.f32 %v2286, %v2383
        %v2385 = vpop.f32.mrb[0].mxu0
        %2386 = vmatprep.mubr.f32.mxu0 0.0
        %2387 = vmatmul.mubr.f32.gmra.mrb[0].mxu0 %v2295
        %v2388 = vpop.f32.mrb[0].mxu0
        %v2389 = vadd.f32 %v2286, %v2388
        %v2390 = vpop.f32.mrb[0].mxu0
        %2391 = vmatprep.mubr.f32.mxu0 0.0
        %2392 = vmatmul.mubr.f32.gmra.mrb[0].mxu0 %v2298
        %v2393 = vpop.f32.mrb[0].mxu0
        %v2394 = vadd.f32 %v2286, %v2393
        %v2395 = vpop.f32.mrb[0].mxu0
        %2396 = vmatprep.mubr.f32.mxu0 0.0
        %2397 = vmatmul.mubr.f32.gmra.mrb[0].mxu0 %v2301
        %v2398 = vpop.f32.mrb[0].mxu0
        %v2399 = vadd.f32 %v2286, %v2398
        %v2400 = vpop.f32.mrb[0].mxu0
        %2401 = vmatprep.mubr.f32.mxu0 0.0
        %2402 = vmatmul.mubr.f32.gmra.mrb[0].mxu0 %v2304
        %v2403 = vpop.f32.mrb[0].mxu0
        %v2404 = vadd.f32 %v2286, %v2403
        %v2405 = vpop.f32.mrb[0].mxu0
        %2406 = vmatprep.mubr.f32.mxu0 0.0
        %2407 = vmatmul.mubr.f32.gmra.mrb[0].mxu0 %v2307
        %v2408 = vpop.f32.mrb[0].mxu0
        %v2409 = vadd.f32 %v2286, %v2408
        %v2410 = vpop.f32.mrb[0].mxu0
        %2411 = vmatprep.mubr.f32.mxu0 0.0
        %2412 = vmatmul.mubr.f32.gmra.mrb[0].mxu0 %v2310
        %v2413 = vpop.f32.mrb[0].mxu0
        %v2414 = vadd.f32 %v2286, %v2413
        %v2415 = vpop.f32.mrb[0].mxu0
        %2416 = vdwg.mxu0
        %vm2417 = vcmask 130048
        %2418 = vst.msk [vmem:[%s325] sm:$0xff] %vm2417, %v2379
        %2419 = vst.msk [vmem:[%s325 + $0x8] sm:$0xff] %vm2417, %v2384
        %2420 = vst.msk [vmem:[%s325 + $0x10] sm:$0xff] %vm2417, %v2389
        %2421 = vst.msk [vmem:[%s325 + $0x18] sm:$0xff] %vm2417, %v2394
        %2422 = vst.msk [vmem:[%s325 + $0x20] sm:$0xff] %vm2417, %v2399
        %2423 = vst.msk [vmem:[%s325 + $0x28] sm:$0xff] %vm2417, %v2404
        %2424 = vst.msk [vmem:[%s325 + $0x30] sm:$0xff] %vm2417, %v2409
        %2425 = vst.msk [vmem:[%s325 + $0x38] sm:$0xff] %vm2417, %v2414
        %s2426 = sand.u32 %s225, 1
        %s2427 = scalar_lea.sflag [#allocation5], %s2426
        %s2428 = sand.u32 %s225, 1
        %s2429 = smul.addr %s2428, 64
        %s2430 = scalar_lea.vmem [#allocation4], %s2429
        // Predicated region
        $region57: #{tpu_custom_call.1} parent=55 // pred_check
          %p2431 = pneg %p235
        $region58: #{tpu_custom_call.1} parent=55 // pred_check_branch
          %2433 = sbr.rel (%p2431) target = $region60
        $region59: #{tpu_custom_call.1} parent=55 // pred_region
          %s2435 = ssub.s32 1024, 1024
          %2436 = vsyncadd %s2427, %s2435
          %s2437 = smul.addr %s23, 8
          %s2438 = smul.addr %s2437, 128
          %s2439 = scalar_lea.hbm %s9, %s2438
          %s2440 = sshll.u32 %s2430, 4
          %s2441 = int_to_ptr.vmem [resolvable:$true] %s2440
          %2446 = dma.vmem_to_hbm [thread:$0]  %s2441, 1024, %s2439, %s2427, 128, 128, 8
        $region60: #{tpu_custom_call.1} parent=55 // pred_fallthru
          _
      $region56: #{tpu_custom_call.1} parent=5 // pred_fallthru
        _
      %p2447 = scmp.le.s32.totalorder 2, %s18
      // Predicated region
      $region61: #{tpu_custom_call.1} parent=5 // pred_check
        %p2448 = pneg %p2447
      $region62: #{tpu_custom_call.1} parent=5 // pred_check_branch
        %2450 = sbr.rel (%p2448) target = $region64
      $region63: #{tpu_custom_call.1} parent=5 // pred_region
        %s2451 = ssub.s32 %s18, 2
        // Predicated region
        $region65: #{tpu_custom_call.1} parent=63 // pred_check
          %p2452 = pneg %p241
        $region66: #{tpu_custom_call.1} parent=63 // pred_check_branch
          %2454 = sbr.rel (%p2452) target = $region68
        $region67: #{tpu_custom_call.1} parent=63 // pred_region
          %s2455 = sand.u32 %s226, 1
          %s2456 = scalar_lea.sflag [#allocation5], %s2455
          %s2457 = sand.u32 %s226, 1
          %s2458 = smul.addr %s2457, 64
          %s2459 = scalar_lea.vmem [#allocation4], %s2458
          %2460 = dma.done %s2456, 1024
        $region68: #{tpu_custom_call.1} parent=63 // pred_fallthru
          _
      $region64: #{tpu_custom_call.1} parent=5 // pred_fallthru
        _
    $region6: #{tpu_custom_call.1} parent=1 // loop_footer
      %s22 = sadd.s32 1, %s18
    $region7: #{tpu_custom_call.1} parent=1 // loop_footer_branch
      %17 = sbr.rel target = $region3
    $region8: #{tpu_custom_call.1} parent=1 // loop_exit
      _
    %2461 = vsyncpa [#allocation5], 1
    %s2462 = scalar_lea.sflag [#allocation5], 1
    %2463 = vsyncpa %s2462, 1

</llo_original>
